<compile_context>
chip_gen: v7x
topology: tpu7x:2x2x1
jax: 0.10.0
libtpu: 0.0.40
codegen_flags: <defaults>
</compile_context>

<pallas_src>
import functools

import numpy as np
import jax
import jax.numpy as jnp
from jax import lax
from jax.experimental import pallas as pl
from jax.experimental.pallas import tpu as pltpu

C1 = 16   # conv1 output channels
C2 = 32   # conv2 output channels


# ------------------------------ Pallas kernel ------------------------------ #
def _fused_cnn_kernel(patches_ref, mask_ref, sel_ref, w1_ref, b1_ref,
                      w2_ref, b2_ref, out_ref, mid_scr, c2_scr,
                      *, g, w2pad, bc, p2a, tail1, tail2):
    """One batch chunk: conv1 -> ReLU -> pool -> conv2 -> ReLU -> pool -> NCHW.

    patches_ref: (4*g, 9)        conv1 im2col patches, quadrant-major
    mask_ref:    (g, 1)          1.0 on interior rows of the padded pooled-1 grid
    sel_ref:     (n_pool2, p2a)  small shared 0/1 per-image gather matrix
    w1_ref:      (9, 16)         conv1 weights (row k = ky*3 + kx)
    b1_ref:      (1, 16)
    w2_ref:      (9, 16, 32)     conv2 weights per 3x3 offset
    b2_ref:      (1, 32)
    out_ref:     (bc, 32, n_pool2)  channel-major (NCHW flatten) output block
    mid_scr:     (g + tail1, 16) pooled-1 intermediate (flat padded grid, VMEM only)
    c2_scr:      (g + tail2, 32) conv2 + ReLU (per-image junk rows never selected)
    """
    f32 = jnp.float32

    # ---- Block 1: Conv2d(1->16) as ONE (4g, 9) @ (9, 16) matmul, bias, ReLU.
    # Kept as a value: no y1 scratch round-trip (saves ~2x 4g*16 of vst/vld).
    y1 = jnp.dot(patches_ref[...], w1_ref[...], preferred_element_type=f32)
    y1 = jnp.maximum(y1 + b1_ref[...], 0.0)                      # (4g, 16)

    # ---- MaxPool2d(2,2) #1: elementwise max across the 4 quadrant slabs.
    pooled1 = jnp.maximum(jnp.maximum(y1[0 * g:1 * g], y1[1 * g:2 * g]),
                          jnp.maximum(y1[2 * g:3 * g], y1[3 * g:4 * g]))

    # Zero the padding ring and park the pooled-1 grid in VMEM (one p2a-row
    # slab per image).  The tail guard rows are re-zeroed every step (two tiny
    # masked stores): scratch is per-core and persists across grid steps, so
    # gating the zeroing on program_id==0 would miss v7x's second TensorCore.
    mid_scr[pl.ds(0, g), :] = pooled1 * mask_ref[...]
    mid_scr[pl.ds(g, tail1), :] = jnp.zeros((tail1, C1), f32)

    # ---- Block 2: Conv2d(16->32) as a sum of 9 row-shifted VMEM matmuls.
    acc = jnp.zeros((g, C2), f32)
    for k in range(9):
        shift = (k // 3) * w2pad + (k % 3)
        acc = acc + jnp.dot(mid_scr[pl.ds(shift, g), :], w2_ref[k],
                            preferred_element_type=f32)
    c2_scr[pl.ds(0, g), :] = jnp.maximum(acc + b2_ref[...], 0.0)
    c2_scr[pl.ds(g, tail2), :] = jnp.zeros((tail2, C2), f32)

    # ---- MaxPool2d(2,2) #2: max of row-offset slices {0, 1, w2pad, w2pad+1}.
    pooled2 = jnp.maximum(
        jnp.maximum(c2_scr[pl.ds(0, g), :], c2_scr[pl.ds(1, g), :]),
        jnp.maximum(c2_scr[pl.ds(w2pad, g), :],
                    c2_scr[pl.ds(w2pad + 1, g), :]))             # (g, 32)

    # ---- Gather valid pooled pixels per image with one SMALL shared 0/1
    #      matmul (no O(chunk^2) operand), and fold the NCHW channel-major
    #      permutation in-kernel so the wrapper reshape is metadata-only.
    #      Tail rows were zeroed above, so every multiplied-by-0 value is
    #      finite (no 0*inf -> NaN hazard).
    sel = sel_ref[...]                                            # (n_pool2, p2a)
    picked = []
    for b in range(bc):
        slab = pooled2[b * p2a:(b + 1) * p2a, :]                  # 8-aligned static slice
        gb = jnp.dot(sel, slab, preferred_element_type=f32)       # (n_pool2, 32)
        picked.append(gb.T)                                       # (32, n_pool2)
    out_ref[...] = jnp.stack(picked, axis=0)                      # (bc, 32, n_pool2)


# ------------------------------- JAX wrapper -------------------------------- #
def _flatten_w1(w1):
    # (16,1,3,3) -> (9,16) with row k = ky*3 + kx.
    return jnp.transpose(w1, (2, 3, 1, 0)).reshape(9, C1)


def _stack_w2(w2):
    # (32,16,3,3) -> (9,16,32):  [k, ci, co] = w2[co, ci, ky, kx].
    return jnp.transpose(w2, (2, 3, 1, 0)).reshape(9, C1, C2)


def _pick_chunk(batch, p2a, cap=32, vmem_budget=12 * 1024 * 1024):
    """Largest divisor of `batch` whose per-step VMEM footprint (including the
    128-lane padding of the narrow blocks and double buffering) stays under a
    budget that fits every generation's default scoped VMEM, while keeping
    >= 2 grid steps whenever batch >= 2 so both v7x TensorCores get work."""
    def step_bytes(c):
        g = c * p2a
        lanes = 128                      # <=32-lane blocks still occupy 128 lanes in VMEM
        patches = 2 * 4 * g * lanes * 4  # double-buffered input block (dominant term)
        mask = 2 * g * lanes * 4
        mid = (g + 64) * lanes * 4
        c2s = (g + 64) * lanes * 4
        out = 2 * c * C2 * lanes * 4
        return patches + mask + mid + c2s + out

    best = 1
    for c in range(1, min(batch, cap) + 1):
        if batch % c:
            continue
        if batch >= 2 and batch // c < 2:
            continue                     # keep >= 2 grid steps for v7x megacore
        if step_bytes(c) <= vmem_budget:
            best = max(best, c)
    return best


@jax.jit
def mnist_cnn_forward(o_t, w1, b1, w2, b2):
    """o_t: (B, C, f, f) float32 NCHW.  Returns (B, 32*(f//4)**2)."""
    B, _, f, f2 = o_t.shape
    assert f == f2 and f % 4 == 0, "spatial size must be divisible by 4"

    hp = f // 2                        # pooled grid side after block 1
    w2pad = hp + 2                     # padded pooled grid side
    p2pad = w2pad * w2pad              # padded pooled pixels per image
    p2a = ((p2pad + 7) // 8) * 8       # per-image row stride (8-aligned)
    q_side = f // 4                    # pooled grid side after block 2
    n_pool2 = q_side * q_side
    tail1 = -(-(2 * w2pad + 2) // 8) * 8   # guard rows for conv2's shifted reads
    tail2 = -(-(w2pad + 2) // 8) * 8       # guard rows for pool2's shifted reads

    bc = _pick_chunk(B, p2a)           # images per grid step
    nchunks = B // bc
    g = bc * p2a                       # rows per chunk in the flat layouts

    # ---- light prep on the raw single-channel image only (conv1 im2col,
    #      quadrant-major so pool-1 is an elementwise max of 4 slabs) ----
    x = o_t[:, 0, :, :]                                    # (B, f, f)
    xp = jnp.pad(x, ((0, 0), (3, 3), (3, 3)))              # conv pad + pool ring
    quads = []
    for dy in range(2):                                    # pooling quadrant
        for dx in range(2):
            taps = [xp[:, dy + ky: dy + ky + 2 * w2pad - 1: 2,
                       dx + kx: dx + kx + 2 * w2pad - 1: 2]
                    for ky in range(3) for kx in range(3)]
            quads.append(jnp.stack(taps, axis=-1))         # (B, w2pad, w2pad, 9)
    patches = jnp.stack(quads, axis=0).reshape(4, B, p2pad, 9)
    patches = jnp.pad(patches, ((0, 0), (0, 0), (0, p2a - p2pad), (0, 0)))
    patches = patches.reshape(4, nchunks, bc, p2a, 9)
    patches = jnp.transpose(patches, (1, 0, 2, 3, 4)).reshape(nchunks * 4 * g, 9)

    # trace-time constants: interior mask + one SMALL shared per-image gather
    m_np = np.zeros((p2a,), np.float32)
    m2d = np.zeros((w2pad, w2pad), np.float32)
    m2d[1:hp + 1, 1:hp + 1] = 1.0
    m_np[:p2pad] = m2d.reshape(-1)
    mask = jnp.asarray(np.tile(m_np, bc).reshape(g, 1))

    sel_np = np.zeros((n_pool2, p2a), np.float32)
    for p in range(n_pool2):
        sel_np[p, (p // q_side) * 2 * w2pad + (p % q_side) * 2] = 1.0
    sel = jnp.asarray(sel_np)

    kernel = functools.partial(_fused_cnn_kernel, g=g, w2pad=w2pad, bc=bc,
                               p2a=p2a, tail1=tail1, tail2=tail2)
    out3d = pl.pallas_call(
        kernel,
        out_shape=jax.ShapeDtypeStruct((B, C2, n_pool2), jnp.float32),
        grid=(nchunks,),
        in_specs=[
            pl.BlockSpec((4 * g, 9), lambda i: (i, 0)),
            pl.BlockSpec((g, 1), lambda i: (0, 0)),
            pl.BlockSpec((n_pool2, p2a), lambda i: (0, 0)),
            pl.BlockSpec((9, C1), lambda i: (0, 0)),
            pl.BlockSpec((1, C1), lambda i: (0, 0)),
            pl.BlockSpec((9, C1, C2), lambda i: (0, 0, 0)),
            pl.BlockSpec((1, C2), lambda i: (0, 0)),
        ],
        out_specs=pl.BlockSpec((bc, C2, n_pool2), lambda i: (i, 0, 0)),
        scratch_shapes=[
            pltpu.VMEM((g + tail1, C1), jnp.float32),
            pltpu.VMEM((g + tail2, C2), jnp.float32),
        ],
        compiler_params=pltpu.CompilerParams(
            dimension_semantics=("parallel",)),
    )(patches, mask, sel, _flatten_w1(w1), b1.reshape(1, C1),
      _stack_w2(w2), b2.reshape(1, C2))

    # The kernel already emits channel-major (NCHW) order per image; collapsing
    # the contiguous (C2, n_pool2) dims is a metadata-only reshape.
    return out3d.reshape(B, C2 * n_pool2)


# --------------------------- Pure-JAX reference ----------------------------- #
def _reference_forward(o_t, w1, b1, w2, b2):
    x = o_t[:, 0:1, :, :]
    x = jnp.transpose(x, (0, 2, 3, 1))                      # NHWC
    dn = ("NHWC", "HWIO", "NHWC")

    def block(x, w, b):
        w_hwio = jnp.transpose(w, (2, 3, 1, 0))
        y = lax.conv_general_dilated(x, w_hwio, (1, 1), "SAME",
                                     dimension_numbers=dn) + b
        y = jax.nn.relu(y)
        return lax.reduce_window(y, -jnp.inf, lax.max,
                                 (1, 2, 2, 1), (1, 2, 2, 1), "VALID")

    y = block(x, w1, b1)
    y = block(y, w2, b2)
    y = jnp.transpose(y, (0, 3, 1, 2))                      # NCHW
    return y.reshape(y.shape[0], -1)


# ----------------------------------- main ------------------------------------ #
def _xavier_uniform(key, shape):
    cout, cin, kh, kw = shape
    fan_in, fan_out = cin * kh * kw, cout * kh * kw
    lim = (6.0 / (fan_in + fan_out)) ** 0.5
    return jax.random.uniform(key, shape, jnp.float32, -lim, lim)


def _bias_init(key, cout, cin, k=3):
    lim = 1.0 / (cin * k * k) ** 0.5
    return jax.random.uniform(key, (cout,), jnp.float32, -lim, lim)


if __name__ == "__main__":
    f = 16          # image side; must be divisible by 4
    B, C = 2, 4     # batch, input channels (only channel 0 is used)

    key = jax.random.PRNGKey(0)
    k_x, k_w1, k_b1, k_w2, k_b2 = jax.random.split(key, 5)

    o_t = jax.random.normal(k_x, (B, C, f, f), jnp.float32)
    w1 = _xavier_uniform(k_w1, (C1, 1, 3, 3))
    b1 = _bias_init(k_b1, C1, 1)
    w2 = _xavier_uniform(k_w2, (C2, C1, 3, 3))
    b2 = _bias_init(k_b2, C2, C1)

    out = mnist_cnn_forward(o_t, w1, b1, w2, b2)
    out = jax.block_until_ready(out)

    assert out.shape == (B, 32 * (f // 4) ** 2), out.shape

    ref = jax.block_until_ready(_reference_forward(o_t, w1, b1, w2, b2))
    assert jnp.allclose(out, ref, atol=1e-4, rtol=1e-4), \
        float(jnp.max(jnp.abs(out - ref)))

    print("KERNEL_OK")
</pallas_src>

<mosaic_0001>
module attributes {stable_mosaic.version = 11 : i64} {
  func.func @_fused_cnn_kernel(%arg0: i32, %arg1: memref<416x9xf32, #tpu.memory_space<vmem>>, %arg2: memref<104x1xf32, #tpu.memory_space<vmem>>, %arg3: memref<16x104xf32, #tpu.memory_space<vmem>>, %arg4: memref<9x16xf32, #tpu.memory_space<vmem>>, %arg5: memref<1x16xf32, #tpu.memory_space<vmem>>, %arg6: memref<9x16x32xf32, #tpu.memory_space<vmem>>, %arg7: memref<1x32xf32, #tpu.memory_space<vmem>>, %arg8: memref<1x32x16xf32, #tpu.memory_space<vmem>>, %arg9: memref<128x16xf32, #tpu.memory_space<vmem>>, %arg10: memref<120x32xf32, #tpu.memory_space<vmem>>) attributes {dimension_semantics = [#tpu.dimension_semantics<parallel>], iteration_bounds = array<i64: 2>, scalar_prefetch = 0 : i64, scratch_operands = 2 : i64, tpu.core_type = #tpu.core_type<tc>, window_params = [{transform_indices = @transform_0, window_bounds = array<i64: 416, 9>}, {pipeline_mode = #tpu.pipeline_mode<synchronous>, transform_indices = @transform_1, window_bounds = array<i64: 104, 1>}, {pipeline_mode = #tpu.pipeline_mode<synchronous>, transform_indices = @transform_2, window_bounds = array<i64: 16, 104>}, {pipeline_mode = #tpu.pipeline_mode<synchronous>, transform_indices = @transform_3, window_bounds = array<i64: 9, 16>}, {pipeline_mode = #tpu.pipeline_mode<synchronous>, transform_indices = @transform_4, window_bounds = array<i64: 1, 16>}, {pipeline_mode = #tpu.pipeline_mode<synchronous>, transform_indices = @transform_5, window_bounds = array<i64: 9, 16, 32>}, {pipeline_mode = #tpu.pipeline_mode<synchronous>, transform_indices = @transform_6, window_bounds = array<i64: 1, 32>}, {transform_indices = @transform_7, window_bounds = array<i64: 1, 32, 16>}]} {
    %c0 = arith.constant 0 : index
    %c0_0 = arith.constant 0 : index
    %0 = vector.load %arg1[%c0, %c0_0] : memref<416x9xf32, #tpu.memory_space<vmem>>, vector<416x9xf32>
    %c0_1 = arith.constant 0 : index
    %c0_2 = arith.constant 0 : index
    %1 = vector.load %arg4[%c0_1, %c0_2] : memref<9x16xf32, #tpu.memory_space<vmem>>, vector<9x16xf32>
    %cst = arith.constant dense<0.000000e+00> : vector<416x16xf32>
    %2 = tpu.matmul %0, %1, %cst {dimension_numbers = #tpu.dot_dimension_numbers<[1], [0], [0], [1], [0, 0, 1, 1], [], []>} : vector<416x9xf32>, vector<9x16xf32>, vector<416x16xf32> -> vector<416x16xf32>
    %c0_3 = arith.constant 0 : index
    %c0_4 = arith.constant 0 : index
    %3 = vector.load %arg5[%c0_3, %c0_4] : memref<1x16xf32, #tpu.memory_space<vmem>>, vector<1x16xf32>
    %4 = vector.broadcast %3 : vector<1x16xf32> to vector<416x16xf32>
    %5 = arith.addf %2, %4 : vector<416x16xf32>
    %cst_5 = arith.constant 0.000000e+00 : f32
    %6 = vector.broadcast %cst_5 : f32 to vector<416x16xf32>
    %7 = arith.maximumf %5, %6 : vector<416x16xf32>
    %8 = vector.extract_strided_slice %7 {offsets = [0, 0], sizes = [104, 16], strides = [1, 1]} : vector<416x16xf32> to vector<104x16xf32>
    %9 = vector.extract_strided_slice %7 {offsets = [104, 0], sizes = [104, 16], strides = [1, 1]} : vector<416x16xf32> to vector<104x16xf32>
    %10 = arith.maximumf %8, %9 : vector<104x16xf32>
    %11 = vector.extract_strided_slice %7 {offsets = [208, 0], sizes = [104, 16], strides = [1, 1]} : vector<416x16xf32> to vector<104x16xf32>
    %12 = vector.extract_strided_slice %7 {offsets = [312, 0], sizes = [104, 16], strides = [1, 1]} : vector<416x16xf32> to vector<104x16xf32>
    %13 = arith.maximumf %11, %12 : vector<104x16xf32>
    %14 = arith.maximumf %10, %13 : vector<104x16xf32>
    %c0_6 = arith.constant 0 : index
    %c0_7 = arith.constant 0 : index
    %15 = vector.load %arg2[%c0_6, %c0_7] : memref<104x1xf32, #tpu.memory_space<vmem>>, vector<104x1xf32>
    %16 = vector.broadcast %15 : vector<104x1xf32> to vector<104x16xf32>
    %17 = arith.mulf %14, %16 : vector<104x16xf32>
    %c0_8 = arith.constant 0 : index
    %c0_9 = arith.constant 0 : index
    %18 = vector.load %arg9[%c0_8, %c0_9] : memref<128x16xf32, #tpu.memory_space<vmem>>, vector<104x16xf32>
    tpu.vector_store %arg9[%c0_8, %c0_9], %17 {strides = array<i32>} : memref<128x16xf32, #tpu.memory_space<vmem>>, vector<104x16xf32>,
    %cst_10 = arith.constant 0.000000e+00 : f32
    %19 = vector.broadcast %cst_10 : f32 to vector<24x16xf32>
    %c104 = arith.constant 104 : index
    %c0_11 = arith.constant 0 : index
    %20 = vector.load %arg9[%c104, %c0_11] : memref<128x16xf32, #tpu.memory_space<vmem>>, vector<24x16xf32>
    tpu.vector_store %arg9[%c104, %c0_11], %19 {strides = array<i32>} : memref<128x16xf32, #tpu.memory_space<vmem>>, vector<24x16xf32>,
    %cst_12 = arith.constant 0.000000e+00 : f32
    %21 = vector.broadcast %cst_12 : f32 to vector<104x32xf32>
    %c0_13 = arith.constant 0 : index
    %c0_14 = arith.constant 0 : index
    %22 = vector.load %arg9[%c0_13, %c0_14] : memref<128x16xf32, #tpu.memory_space<vmem>>, vector<104x16xf32>
    %c0_15 = arith.constant 0 : index
    %c0_16 = arith.constant 0 : index
    %c0_17 = arith.constant 0 : index
    %23 = vector.load %arg6[%c0_15, %c0_16, %c0_17] : memref<9x16x32xf32, #tpu.memory_space<vmem>>, vector<1x16x32xf32>
    %24 = vector.shape_cast %23 : vector<1x16x32xf32> to vector<16x32xf32>
    %cst_18 = arith.constant dense<0.000000e+00> : vector<104x32xf32>
    %25 = tpu.matmul %22, %24, %cst_18 {dimension_numbers = #tpu.dot_dimension_numbers<[1], [0], [0], [1], [0, 0, 1, 1], [], []>} : vector<104x16xf32>, vector<16x32xf32>, vector<104x32xf32> -> vector<104x32xf32>
    %26 = arith.addf %21, %25 : vector<104x32xf32>
    %c1 = arith.constant 1 : index
    %c0_19 = arith.constant 0 : index
    %27 = vector.load %arg9[%c1, %c0_19] : memref<128x16xf32, #tpu.memory_space<vmem>>, vector<104x16xf32>
    %c1_20 = arith.constant 1 : index
    %c0_21 = arith.constant 0 : index
    %c0_22 = arith.constant 0 : index
    %28 = vector.load %arg6[%c1_20, %c0_21, %c0_22] : memref<9x16x32xf32, #tpu.memory_space<vmem>>, vector<1x16x32xf32>
    %29 = vector.shape_cast %28 : vector<1x16x32xf32> to vector<16x32xf32>
    %cst_23 = arith.constant dense<0.000000e+00> : vector<104x32xf32>
    %30 = tpu.matmul %27, %29, %cst_23 {dimension_numbers = #tpu.dot_dimension_numbers<[1], [0], [0], [1], [0, 0, 1, 1], [], []>} : vector<104x16xf32>, vector<16x32xf32>, vector<104x32xf32> -> vector<104x32xf32>
    %31 = arith.addf %26, %30 : vector<104x32xf32>
    %c2 = arith.constant 2 : index
    %c0_24 = arith.constant 0 : index
    %32 = vector.load %arg9[%c2, %c0_24] : memref<128x16xf32, #tpu.memory_space<vmem>>, vector<104x16xf32>
    %c2_25 = arith.constant 2 : index
    %c0_26 = arith.constant 0 : index
    %c0_27 = arith.constant 0 : index
    %33 = vector.load %arg6[%c2_25, %c0_26, %c0_27] : memref<9x16x32xf32, #tpu.memory_space<vmem>>, vector<1x16x32xf32>
    %34 = vector.shape_cast %33 : vector<1x16x32xf32> to vector<16x32xf32>
    %cst_28 = arith.constant dense<0.000000e+00> : vector<104x32xf32>
    %35 = tpu.matmul %32, %34, %cst_28 {dimension_numbers = #tpu.dot_dimension_numbers<[1], [0], [0], [1], [0, 0, 1, 1], [], []>} : vector<104x16xf32>, vector<16x32xf32>, vector<104x32xf32> -> vector<104x32xf32>
    %36 = arith.addf %31, %35 : vector<104x32xf32>
    %c10 = arith.constant 10 : index
    %c0_29 = arith.constant 0 : index
    %37 = vector.load %arg9[%c10, %c0_29] : memref<128x16xf32, #tpu.memory_space<vmem>>, vector<104x16xf32>
    %c3 = arith.constant 3 : index
    %c0_30 = arith.constant 0 : index
    %c0_31 = arith.constant 0 : index
    %38 = vector.load %arg6[%c3, %c0_30, %c0_31] : memref<9x16x32xf32, #tpu.memory_space<vmem>>, vector<1x16x32xf32>
    %39 = vector.shape_cast %38 : vector<1x16x32xf32> to vector<16x32xf32>
    %cst_32 = arith.constant dense<0.000000e+00> : vector<104x32xf32>
    %40 = tpu.matmul %37, %39, %cst_32 {dimension_numbers = #tpu.dot_dimension_numbers<[1], [0], [0], [1], [0, 0, 1, 1], [], []>} : vector<104x16xf32>, vector<16x32xf32>, vector<104x32xf32> -> vector<104x32xf32>
    %41 = arith.addf %36, %40 : vector<104x32xf32>
    %c11 = arith.constant 11 : index
    %c0_33 = arith.constant 0 : index
    %42 = vector.load %arg9[%c11, %c0_33] : memref<128x16xf32, #tpu.memory_space<vmem>>, vector<104x16xf32>
    %c4 = arith.constant 4 : index
    %c0_34 = arith.constant 0 : index
    %c0_35 = arith.constant 0 : index
    %43 = vector.load %arg6[%c4, %c0_34, %c0_35] : memref<9x16x32xf32, #tpu.memory_space<vmem>>, vector<1x16x32xf32>
    %44 = vector.shape_cast %43 : vector<1x16x32xf32> to vector<16x32xf32>
    %cst_36 = arith.constant dense<0.000000e+00> : vector<104x32xf32>
    %45 = tpu.matmul %42, %44, %cst_36 {dimension_numbers = #tpu.dot_dimension_numbers<[1], [0], [0], [1], [0, 0, 1, 1], [], []>} : vector<104x16xf32>, vector<16x32xf32>, vector<104x32xf32> -> vector<104x32xf32>
    %46 = arith.addf %41, %45 : vector<104x32xf32>
    %c12 = arith.constant 12 : index
    %c0_37 = arith.constant 0 : index
    %47 = vector.load %arg9[%c12, %c0_37] : memref<128x16xf32, #tpu.memory_space<vmem>>, vector<104x16xf32>
    %c5 = arith.constant 5 : index
    %c0_38 = arith.constant 0 : index
    %c0_39 = arith.constant 0 : index
    %48 = vector.load %arg6[%c5, %c0_38, %c0_39] : memref<9x16x32xf32, #tpu.memory_space<vmem>>, vector<1x16x32xf32>
    %49 = vector.shape_cast %48 : vector<1x16x32xf32> to vector<16x32xf32>
    %cst_40 = arith.constant dense<0.000000e+00> : vector<104x32xf32>
    %50 = tpu.matmul %47, %49, %cst_40 {dimension_numbers = #tpu.dot_dimension_numbers<[1], [0], [0], [1], [0, 0, 1, 1], [], []>} : vector<104x16xf32>, vector<16x32xf32>, vector<104x32xf32> -> vector<104x32xf32>
    %51 = arith.addf %46, %50 : vector<104x32xf32>
    %c20 = arith.constant 20 : index
    %c0_41 = arith.constant 0 : index
    %52 = vector.load %arg9[%c20, %c0_41] : memref<128x16xf32, #tpu.memory_space<vmem>>, vector<104x16xf32>
    %c6 = arith.constant 6 : index
    %c0_42 = arith.constant 0 : index
    %c0_43 = arith.constant 0 : index
    %53 = vector.load %arg6[%c6, %c0_42, %c0_43] : memref<9x16x32xf32, #tpu.memory_space<vmem>>, vector<1x16x32xf32>
    %54 = vector.shape_cast %53 : vector<1x16x32xf32> to vector<16x32xf32>
    %cst_44 = arith.constant dense<0.000000e+00> : vector<104x32xf32>
    %55 = tpu.matmul %52, %54, %cst_44 {dimension_numbers = #tpu.dot_dimension_numbers<[1], [0], [0], [1], [0, 0, 1, 1], [], []>} : vector<104x16xf32>, vector<16x32xf32>, vector<104x32xf32> -> vector<104x32xf32>
    %56 = arith.addf %51, %55 : vector<104x32xf32>
    %c21 = arith.constant 21 : index
    %c0_45 = arith.constant 0 : index
    %57 = vector.load %arg9[%c21, %c0_45] : memref<128x16xf32, #tpu.memory_space<vmem>>, vector<104x16xf32>
    %c7 = arith.constant 7 : index
    %c0_46 = arith.constant 0 : index
    %c0_47 = arith.constant 0 : index
    %58 = vector.load %arg6[%c7, %c0_46, %c0_47] : memref<9x16x32xf32, #tpu.memory_space<vmem>>, vector<1x16x32xf32>
    %59 = vector.shape_cast %58 : vector<1x16x32xf32> to vector<16x32xf32>
    %cst_48 = arith.constant dense<0.000000e+00> : vector<104x32xf32>
    %60 = tpu.matmul %57, %59, %cst_48 {dimension_numbers = #tpu.dot_dimension_numbers<[1], [0], [0], [1], [0, 0, 1, 1], [], []>} : vector<104x16xf32>, vector<16x32xf32>, vector<104x32xf32> -> vector<104x32xf32>
    %61 = arith.addf %56, %60 : vector<104x32xf32>
    %c22 = arith.constant 22 : index
    %c0_49 = arith.constant 0 : index
    %62 = vector.load %arg9[%c22, %c0_49] : memref<128x16xf32, #tpu.memory_space<vmem>>, vector<104x16xf32>
    %c8 = arith.constant 8 : index
    %c0_50 = arith.constant 0 : index
    %c0_51 = arith.constant 0 : index
    %63 = vector.load %arg6[%c8, %c0_50, %c0_51] : memref<9x16x32xf32, #tpu.memory_space<vmem>>, vector<1x16x32xf32>
    %64 = vector.shape_cast %63 : vector<1x16x32xf32> to vector<16x32xf32>
    %cst_52 = arith.constant dense<0.000000e+00> : vector<104x32xf32>
    %65 = tpu.matmul %62, %64, %cst_52 {dimension_numbers = #tpu.dot_dimension_numbers<[1], [0], [0], [1], [0, 0, 1, 1], [], []>} : vector<104x16xf32>, vector<16x32xf32>, vector<104x32xf32> -> vector<104x32xf32>
    %66 = arith.addf %61, %65 : vector<104x32xf32>
    %c0_53 = arith.constant 0 : index
    %c0_54 = arith.constant 0 : index
    %67 = vector.load %arg7[%c0_53, %c0_54] : memref<1x32xf32, #tpu.memory_space<vmem>>, vector<1x32xf32>
    %68 = vector.broadcast %67 : vector<1x32xf32> to vector<104x32xf32>
    %69 = arith.addf %66, %68 : vector<104x32xf32>
    %cst_55 = arith.constant 0.000000e+00 : f32
    %70 = vector.broadcast %cst_55 : f32 to vector<104x32xf32>
    %71 = arith.maximumf %69, %70 : vector<104x32xf32>
    %c0_56 = arith.constant 0 : index
    %c0_57 = arith.constant 0 : index
    %72 = vector.load %arg10[%c0_56, %c0_57] : memref<120x32xf32, #tpu.memory_space<vmem>>, vector<104x32xf32>
    tpu.vector_store %arg10[%c0_56, %c0_57], %71 {strides = array<i32>} : memref<120x32xf32, #tpu.memory_space<vmem>>, vector<104x32xf32>,
    %cst_58 = arith.constant 0.000000e+00 : f32
    %73 = vector.broadcast %cst_58 : f32 to vector<16x32xf32>
    %c104_59 = arith.constant 104 : index
    %c0_60 = arith.constant 0 : index
    %74 = vector.load %arg10[%c104_59, %c0_60] : memref<120x32xf32, #tpu.memory_space<vmem>>, vector<16x32xf32>
    tpu.vector_store %arg10[%c104_59, %c0_60], %73 {strides = array<i32>} : memref<120x32xf32, #tpu.memory_space<vmem>>, vector<16x32xf32>,
    %c0_61 = arith.constant 0 : index
    %c0_62 = arith.constant 0 : index
    %75 = vector.load %arg10[%c0_61, %c0_62] : memref<120x32xf32, #tpu.memory_space<vmem>>, vector<104x32xf32>
    %c1_63 = arith.constant 1 : index
    %c0_64 = arith.constant 0 : index
    %76 = vector.load %arg10[%c1_63, %c0_64] : memref<120x32xf32, #tpu.memory_space<vmem>>, vector<104x32xf32>
    %77 = arith.maximumf %75, %76 : vector<104x32xf32>
    %c10_65 = arith.constant 10 : index
    %c0_66 = arith.constant 0 : index
    %78 = vector.load %arg10[%c10_65, %c0_66] : memref<120x32xf32, #tpu.memory_space<vmem>>, vector<104x32xf32>
    %c11_67 = arith.constant 11 : index
    %c0_68 = arith.constant 0 : index
    %79 = vector.load %arg10[%c11_67, %c0_68] : memref<120x32xf32, #tpu.memory_space<vmem>>, vector<104x32xf32>
    %80 = arith.maximumf %78, %79 : vector<104x32xf32>
    %81 = arith.maximumf %77, %80 : vector<104x32xf32>
    %c0_69 = arith.constant 0 : index
    %c0_70 = arith.constant 0 : index
    %82 = vector.load %arg3[%c0_69, %c0_70] : memref<16x104xf32, #tpu.memory_space<vmem>>, vector<16x104xf32>
    %cst_71 = arith.constant dense<0.000000e+00> : vector<16x32xf32>
    %83 = tpu.matmul %82, %81, %cst_71 {dimension_numbers = #tpu.dot_dimension_numbers<[1], [0], [0], [1], [0, 0, 1, 1], [], []>} : vector<16x104xf32>, vector<104x32xf32>, vector<16x32xf32> -> vector<16x32xf32>
    %84 = tpu.transpose %83, [1, 0] : vector<16x32xf32> -> vector<32x16xf32>
    %85 = vector.shape_cast %84 : vector<32x16xf32> to vector<1x32x16xf32>
    %c0_72 = arith.constant 0 : index
    %c0_73 = arith.constant 0 : index
    %c0_74 = arith.constant 0 : index
    %86 = vector.load %arg8[%c0_72, %c0_73, %c0_74] : memref<1x32x16xf32, #tpu.memory_space<vmem>>, vector<1x32x16xf32>
    tpu.vector_store %arg8[%c0_72, %c0_73, %c0_74], %85 {strides = array<i32>} : memref<1x32x16xf32, #tpu.memory_space<vmem>>, vector<1x32x16xf32>,
    return
  }
  func.func @transform_0(%arg0: i32) -> (i32, i32) {
    %c0_i32 = arith.constant 0 : i32
    %c0_i32_0 = arith.constant 0 : i32
    return %arg0, %c0_i32 : i32, i32
  }
  func.func @transform_1(%arg0: i32) -> (i32, i32) {
    %c0_i32 = arith.constant 0 : i32
    %c0_i32_0 = arith.constant 0 : i32
    %c0_i32_1 = arith.constant 0 : i32
    return %c0_i32, %c0_i32_0 : i32, i32
  }
  func.func @transform_2(%arg0: i32) -> (i32, i32) {
    %c0_i32 = arith.constant 0 : i32
    %c0_i32_0 = arith.constant 0 : i32
    %c0_i32_1 = arith.constant 0 : i32
    return %c0_i32, %c0_i32_0 : i32, i32
  }
  func.func @transform_3(%arg0: i32) -> (i32, i32) {
    %c0_i32 = arith.constant 0 : i32
    %c0_i32_0 = arith.constant 0 : i32
    %c0_i32_1 = arith.constant 0 : i32
    return %c0_i32, %c0_i32_0 : i32, i32
  }
  func.func @transform_4(%arg0: i32) -> (i32, i32) {
    %c0_i32 = arith.constant 0 : i32
    %c0_i32_0 = arith.constant 0 : i32
    %c0_i32_1 = arith.constant 0 : i32
    return %c0_i32, %c0_i32_0 : i32, i32
  }
  func.func @transform_5(%arg0: i32) -> (i32, i32, i32) {
    %c0_i32 = arith.constant 0 : i32
    %c0_i32_0 = arith.constant 0 : i32
    %c0_i32_1 = arith.constant 0 : i32
    %c0_i32_2 = arith.constant 0 : i32
    return %c0_i32, %c0_i32_0, %c0_i32_1 : i32, i32, i32
  }
  func.func @transform_6(%arg0: i32) -> (i32, i32) {
    %c0_i32 = arith.constant 0 : i32
    %c0_i32_0 = arith.constant 0 : i32
    %c0_i32_1 = arith.constant 0 : i32
    return %c0_i32, %c0_i32_0 : i32, i32
  }
  func.func @transform_7(%arg0: i32) -> (i32, i32, i32) {
    %c0_i32 = arith.constant 0 : i32
    %c0_i32_0 = arith.constant 0 : i32
    %c0_i32_1 = arith.constant 0 : i32
    return %arg0, %c0_i32, %c0_i32_0 : i32, i32, i32
  }
}

</mosaic_0001>

<llo_original>
// kernel: mnist_cnn_forward.1
$region0: #{mnist_cnn_forward.1}
  #allocation0 [shape = 'u32[]', space=smem, size = 0x4, offset = 0x4, fixed_abs, tag = 'smem constant byte address 0x4 - core index']
  #allocation1 [shape = 'u32[144,128]{1,0:T(1,128)}', space=vmem, size = 0x12000, scoped, tag = 'internal scratch']
  #allocation2 [shape = 'f32[128,16]{1,0:T(8,128)}', space=vmem, size = 0x10000, scoped, tag = 'scratch operand']
  #allocation3 [shape = 'f32[120,32]{1,0:T(8,128)}', space=vmem, size = 0xf000, scoped, tag = 'scratch operand']
  %s0 = inlined_call_operand.vmem [shape: f32[832,9], index: 0, kind: input, shape index: {}]
  %s1 = inlined_call_operand.vmem [shape: f32[104,1], index: 1, kind: input, shape index: {}]
  %s2 = inlined_call_operand.vmem [shape: f32[16,104], index: 2, kind: input, shape index: {}]
  %s3 = inlined_call_operand.vmem [shape: f32[9,16], index: 3, kind: input, shape index: {}]
  %s4 = inlined_call_operand.vmem [shape: f32[1,16], index: 4, kind: input, shape index: {}]
  %s5 = inlined_call_operand.vmem [shape: f32[9,16,32], index: 5, kind: input, shape index: {}]
  %s6 = inlined_call_operand.vmem [shape: f32[1,32], index: 6, kind: input, shape index: {}]
  %s7 = inlined_call_operand.vmem [shape: f32[2,32,16], index: 7, kind: output, shape index: {}]
  %s8 = sld [smem:[#allocation0]]
  $region61: #{mnist_cnn_forward.1} parent=0
    _
  %s10 = ssub.s32 1, %s8
  %s11 = scalar_select 0, %s10, %s8
  loop: start=0, step=1, limit=4
  $region2: #{mnist_cnn_forward.1} parent=0 // loop_pre_header
    _
  $region3: #{mnist_cnn_forward.1} parent=0 // loop_header
    %s13 = sphi 0, %s17
    %p14 = scmp.ge.s32.totalorder %s13, 4
    %s23 = sphi 0, %s25
    %s26 = sphi 0, %s23
    %s27 = sphi 0, %s26
    %s43 = sphi 0, %s27
    %s47 = sphi 0, %s47
    %s49 = sphi 0, %s47
    %s50 = sphi 0, %s49
    %s64 = sphi 0, %s50
    %s68 = sphi 0, %s68
    %s70 = sphi 0, %s68
    %s71 = sphi 0, %s70
    %s85 = sphi 0, %s71
    %s89 = sphi 0, %s89
    %s91 = sphi 0, %s89
    %s92 = sphi 0, %s91
    %s106 = sphi 0, %s92
    %s110 = sphi 0, %s110
    %s112 = sphi 0, %s110
    %s113 = sphi 0, %s112
    %s127 = sphi 0, %s113
    %s131 = sphi 0, %s131
    %s133 = sphi 0, %s131
    %s134 = sphi 0, %s133
    %s148 = sphi 0, %s134
    %s152 = sphi 0, %s152
    %s154 = sphi 0, %s152
    %s155 = sphi 0, %s154
    %s169 = sphi 0, %s155
    %s175 = sphi 0, %s177
    %s178 = sphi 0, %s175
    %s179 = sphi 0, %s178
    %s195 = sphi 0, %s179
  $region4: #{mnist_cnn_forward.1} parent=0 // loop_header_branch
    %16 = sbr.rel (%p14) target = $region8
  $region5: #{mnist_cnn_forward.1} parent=0 // loop_body
    %s18 = ssub.s32 %s13, 1
    %s19 = ssub.s32 %s13, 2
    %s20 = sadd.s32 %s13, 1
    %s21 = ssub.s32 %s13, %s20
    %p22 = scmp.eq.s32.totalorder %s21, 0
    %s24 = sadd.s32 %s23, 1
    %s25 = scalar_select %p22, %s23, %s24
    %p28 = pneg %p22
    %p29 = scmp.eq.s32.totalorder %s13, 1
    %p30 = por %p28, %p29
    %p31 = scmp.ne.s32.totalorder %s23, %s26
    %p32 = scmp.eq.s32.totalorder %s13, 0
    %p33 = por %p31, %p32
    %p34 = scmp.ne.s32.totalorder %s23, %s26
    %p35 = scmp.eq.s32.totalorder %s18, 1
    %p36 = por %p34, %p35
    %p37 = scmp.ne.s32.totalorder %s26, %s27
    %p38 = scmp.eq.s32.totalorder %s18, 0
    %p39 = por %p37, %p38
    %p40 = scmp.ne.s32.totalorder %s26, %s27
    %p41 = scmp.eq.s32.totalorder %s19, 1
    %p42 = por %p40, %p41
    %p44 = scmp.ne.s32.totalorder %s27, %s43
    %p45 = scmp.eq.s32.totalorder %s19, 0
    %p46 = por %p44, %p45
    %s48 = sadd.s32 %s47, 1
    %p51 = scmp.eq.s32.totalorder %s13, 1
    %p52 = scmp.ne.s32.totalorder %s47, %s49
    %p53 = scmp.eq.s32.totalorder %s13, 0
    %p54 = por %p52, %p53
    %p55 = scmp.ne.s32.totalorder %s47, %s49
    %p56 = scmp.eq.s32.totalorder %s18, 1
    %p57 = por %p55, %p56
    %p58 = scmp.ne.s32.totalorder %s49, %s50
    %p59 = scmp.eq.s32.totalorder %s18, 0
    %p60 = por %p58, %p59
    %p61 = scmp.ne.s32.totalorder %s49, %s50
    %p62 = scmp.eq.s32.totalorder %s19, 1
    %p63 = por %p61, %p62
    %p65 = scmp.ne.s32.totalorder %s50, %s64
    %p66 = scmp.eq.s32.totalorder %s19, 0
    %p67 = por %p65, %p66
    %s69 = sadd.s32 %s68, 1
    %p72 = scmp.eq.s32.totalorder %s13, 1
    %p73 = scmp.ne.s32.totalorder %s68, %s70
    %p74 = scmp.eq.s32.totalorder %s13, 0
    %p75 = por %p73, %p74
    %p76 = scmp.ne.s32.totalorder %s68, %s70
    %p77 = scmp.eq.s32.totalorder %s18, 1
    %p78 = por %p76, %p77
    %p79 = scmp.ne.s32.totalorder %s70, %s71
    %p80 = scmp.eq.s32.totalorder %s18, 0
    %p81 = por %p79, %p80
    %p82 = scmp.ne.s32.totalorder %s70, %s71
    %p83 = scmp.eq.s32.totalorder %s19, 1
    %p84 = por %p82, %p83
    %p86 = scmp.ne.s32.totalorder %s71, %s85
    %p87 = scmp.eq.s32.totalorder %s19, 0
    %p88 = por %p86, %p87
    %s90 = sadd.s32 %s89, 1
    %p93 = scmp.eq.s32.totalorder %s13, 1
    %p94 = scmp.ne.s32.totalorder %s89, %s91
    %p95 = scmp.eq.s32.totalorder %s13, 0
    %p96 = por %p94, %p95
    %p97 = scmp.ne.s32.totalorder %s89, %s91
    %p98 = scmp.eq.s32.totalorder %s18, 1
    %p99 = por %p97, %p98
    %p100 = scmp.ne.s32.totalorder %s91, %s92
    %p101 = scmp.eq.s32.totalorder %s18, 0
    %p102 = por %p100, %p101
    %p103 = scmp.ne.s32.totalorder %s91, %s92
    %p104 = scmp.eq.s32.totalorder %s19, 1
    %p105 = por %p103, %p104
    %p107 = scmp.ne.s32.totalorder %s92, %s106
    %p108 = scmp.eq.s32.totalorder %s19, 0
    %p109 = por %p107, %p108
    %s111 = sadd.s32 %s110, 1
    %p114 = scmp.eq.s32.totalorder %s13, 1
    %p115 = scmp.ne.s32.totalorder %s110, %s112
    %p116 = scmp.eq.s32.totalorder %s13, 0
    %p117 = por %p115, %p116
    %p118 = scmp.ne.s32.totalorder %s110, %s112
    %p119 = scmp.eq.s32.totalorder %s18, 1
    %p120 = por %p118, %p119
    %p121 = scmp.ne.s32.totalorder %s112, %s113
    %p122 = scmp.eq.s32.totalorder %s18, 0
    %p123 = por %p121, %p122
    %p124 = scmp.ne.s32.totalorder %s112, %s113
    %p125 = scmp.eq.s32.totalorder %s19, 1
    %p126 = por %p124, %p125
    %p128 = scmp.ne.s32.totalorder %s113, %s127
    %p129 = scmp.eq.s32.totalorder %s19, 0
    %p130 = por %p128, %p129
    %s132 = sadd.s32 %s131, 1
    %p135 = scmp.eq.s32.totalorder %s13, 1
    %p136 = scmp.ne.s32.totalorder %s131, %s133
    %p137 = scmp.eq.s32.totalorder %s13, 0
    %p138 = por %p136, %p137
    %p139 = scmp.ne.s32.totalorder %s131, %s133
    %p140 = scmp.eq.s32.totalorder %s18, 1
    %p141 = por %p139, %p140
    %p142 = scmp.ne.s32.totalorder %s133, %s134
    %p143 = scmp.eq.s32.totalorder %s18, 0
    %p144 = por %p142, %p143
    %p145 = scmp.ne.s32.totalorder %s133, %s134
    %p146 = scmp.eq.s32.totalorder %s19, 1
    %p147 = por %p145, %p146
    %p149 = scmp.ne.s32.totalorder %s134, %s148
    %p150 = scmp.eq.s32.totalorder %s19, 0
    %p151 = por %p149, %p150
    %s153 = sadd.s32 %s152, 1
    %p156 = scmp.eq.s32.totalorder %s13, 1
    %p157 = scmp.ne.s32.totalorder %s152, %s154
    %p158 = scmp.eq.s32.totalorder %s13, 0
    %p159 = por %p157, %p158
    %p160 = scmp.ne.s32.totalorder %s152, %s154
    %p161 = scmp.eq.s32.totalorder %s18, 1
    %p162 = por %p160, %p161
    %p163 = scmp.ne.s32.totalorder %s154, %s155
    %p164 = scmp.eq.s32.totalorder %s18, 0
    %p165 = por %p163, %p164
    %p166 = scmp.ne.s32.totalorder %s154, %s155
    %p167 = scmp.eq.s32.totalorder %s19, 1
    %p168 = por %p166, %p167
    %p170 = scmp.ne.s32.totalorder %s155, %s169
    %p171 = scmp.eq.s32.totalorder %s19, 0
    %p172 = por %p170, %p171
    %s173 = ssub.s32 %s13, %s20
    %p174 = scmp.eq.s32.totalorder %s173, 0
    %s176 = sadd.s32 %s175, 1
    %s177 = scalar_select %p174, %s175, %s176
    %p180 = pneg %p174
    %p181 = scmp.eq.s32.totalorder %s13, 1
    %p182 = por %p180, %p181
    %p183 = scmp.ne.s32.totalorder %s175, %s178
    %p184 = scmp.eq.s32.totalorder %s13, 0
    %p185 = por %p183, %p184
    %p186 = scmp.ne.s32.totalorder %s175, %s178
    %p187 = scmp.eq.s32.totalorder %s18, 1
    %p188 = por %p186, %p187
    %p189 = scmp.ne.s32.totalorder %s178, %s179
    %p190 = scmp.eq.s32.totalorder %s18, 0
    %p191 = por %p189, %p190
    %p192 = scmp.ne.s32.totalorder %s178, %s179
    %p193 = scmp.eq.s32.totalorder %s19, 1
    %p194 = por %p192, %p193
    %p196 = scmp.ne.s32.totalorder %s179, %s195
    %p197 = scmp.eq.s32.totalorder %s19, 0
    %p198 = por %p196, %p197
    %p199 = scmp.le.s32.totalorder 1, %s13
    %p200 = scmp.lt.s32.totalorder %s13, 3
    %p201 = pnand %p199, %p200
    %p202 = pneg %p201
    // Predicated region
    $region9: #{mnist_cnn_forward.1} parent=5 // pred_check
      _
    $region10: #{mnist_cnn_forward.1} parent=5 // pred_check_branch
      %204 = sbr.rel (%p201) target = $region12
    $region11: #{mnist_cnn_forward.1} parent=5 // pred_region
      %s205 = ssub.s32 %s13, 1
      // Predicated region
      $region13: #{mnist_cnn_forward.1} parent=11 // pred_check
        %p206 = pneg %p60
      $region14: #{mnist_cnn_forward.1} parent=11 // pred_check_branch
        %208 = sbr.rel (%p206) target = $region16
      $region15: #{mnist_cnn_forward.1} parent=11 // pred_region
        _
      $region16: #{mnist_cnn_forward.1} parent=11 // pred_fallthru
        _
      // Predicated region
      $region17: #{mnist_cnn_forward.1} parent=11 // pred_check
        %p209 = pneg %p81
      $region18: #{mnist_cnn_forward.1} parent=11 // pred_check_branch
        %211 = sbr.rel (%p209) target = $region20
      $region19: #{mnist_cnn_forward.1} parent=11 // pred_region
        _
      $region20: #{mnist_cnn_forward.1} parent=11 // pred_fallthru
        _
      // Predicated region
      $region21: #{mnist_cnn_forward.1} parent=11 // pred_check
        %p212 = pneg %p102
      $region22: #{mnist_cnn_forward.1} parent=11 // pred_check_branch
        %214 = sbr.rel (%p212) target = $region24
      $region23: #{mnist_cnn_forward.1} parent=11 // pred_region
        _
      $region24: #{mnist_cnn_forward.1} parent=11 // pred_fallthru
        _
      // Predicated region
      $region25: #{mnist_cnn_forward.1} parent=11 // pred_check
        %p215 = pneg %p123
      $region26: #{mnist_cnn_forward.1} parent=11 // pred_check_branch
        %217 = sbr.rel (%p215) target = $region28
      $region27: #{mnist_cnn_forward.1} parent=11 // pred_region
        _
      $region28: #{mnist_cnn_forward.1} parent=11 // pred_fallthru
        _
      // Predicated region
      $region29: #{mnist_cnn_forward.1} parent=11 // pred_check
        %p218 = pneg %p144
      $region30: #{mnist_cnn_forward.1} parent=11 // pred_check_branch
        %220 = sbr.rel (%p218) target = $region32
      $region31: #{mnist_cnn_forward.1} parent=11 // pred_region
        _
      $region32: #{mnist_cnn_forward.1} parent=11 // pred_fallthru
        _
      // Predicated region
      $region33: #{mnist_cnn_forward.1} parent=11 // pred_check
        %p221 = pneg %p165
      $region34: #{mnist_cnn_forward.1} parent=11 // pred_check_branch
        %223 = sbr.rel (%p221) target = $region36
      $region35: #{mnist_cnn_forward.1} parent=11 // pred_region
        _
      $region36: #{mnist_cnn_forward.1} parent=11 // pred_fallthru
        _
    $region12: #{mnist_cnn_forward.1} parent=5 // pred_fallthru
      _
    %p224 = scmp.lt.s32.totalorder %s13, 2
    // Predicated region
    $region37: #{mnist_cnn_forward.1} parent=5 // pred_check
      %p225 = pneg %p224
    $region38: #{mnist_cnn_forward.1} parent=5 // pred_check_branch
      %227 = sbr.rel (%p225) target = $region40
    $region39: #{mnist_cnn_forward.1} parent=5 // pred_region
      // Predicated region
      $region41: #{mnist_cnn_forward.1} parent=39 // pred_check
        %p228 = pneg %p33
      $region42: #{mnist_cnn_forward.1} parent=39 // pred_check_branch
        %230 = sbr.rel (%p228) target = $region44
      $region43: #{mnist_cnn_forward.1} parent=39 // pred_region
        %s231 = smul.u32 52, %s13
        %p232 = scmp.lt.s32.totalorder %s231, 103
        %s233 = scalar_select %p232, %s231, 103
        %s234 = smul.addr %s233, 8
        %s235 = scalar_lea.vmem %s0, %s234
        %s236 = smul.u32 52, %s13
      $region44: #{mnist_cnn_forward.1} parent=39 // pred_fallthru
        _
    $region40: #{mnist_cnn_forward.1} parent=5 // pred_fallthru
      _
    %p237 = scmp.le.s32.totalorder 1, %s13
    %p238 = scmp.lt.s32.totalorder %s13, 3
    %p239 = pnand %p237, %p238
    %p240 = pneg %p239
    // Predicated region
    $region45: #{mnist_cnn_forward.1} parent=5 // pred_check
      _
    $region46: #{mnist_cnn_forward.1} parent=5 // pred_check_branch
      %242 = sbr.rel (%p239) target = $region48
    $region47: #{mnist_cnn_forward.1} parent=5 // pred_region
      %s243 = ssub.s32 %s13, 1
      %s244 = smul.u32 52, %s18
      %p245 = scmp.lt.s32.totalorder %s244, 103
      %s246 = scalar_select %p245, %s244, 103
      %s247 = smul.addr %s246, 8
      %s248 = scalar_lea.vmem %s0, %s247
      %p249 = pneg %p39
      %p250 = pneg %p36
      %p251 = pneg %p60
      %p252 = pneg %p57
      %p253 = pneg %p81
      %p254 = pneg %p78
      %p255 = pneg %p102
      %p256 = pneg %p99
      %p257 = pneg %p123
      %p258 = pneg %p120
      %p259 = pneg %p144
      %p260 = pneg %p141
      %p261 = pneg %p165
      %p262 = pneg %p162
      %p263 = pneg %p191
      %p264 = pneg %p188
      %p265 = scmp.lt.s32.totalorder %s18, 1
      %s266 = scalar_select %p265, %s18, 1
      %s267 = smul.addr %s266, 4
      %s268 = smul.addr %s267, 8
      %s269 = scalar_lea.vmem %s7, %s268
      %s270 = smul.u32 52, %s18
      %p271 = scmp.lt.s32.totalorder %s270, 103
      %s272 = scalar_select %p271, %s270, 103
      %s273 = smul.addr %s272, 8
      %s274 = scalar_lea.vmem %s0, %s273
      %s275 = smul.u32 52, %s18
      %p276 = scmp.lt.s32.totalorder %s18, 1
      %s277 = scalar_select %p276, %s18, 1
      %s278 = smul.addr %s277, 4
      %s279 = smul.addr %s278, 8
      %s280 = scalar_lea.vmem %s7, %s279
      %v281 = vld [vmem:[%s274] sm:$0xff]
      %v282 = vld [vmem:[%s274 + $0x8] sm:$0xff]
      %v283 = vld [vmem:[%s274 + $0x10] sm:$0xff]
      %v284 = vld [vmem:[%s274 + $0x18] sm:$0xff]
      %v285 = vld [vmem:[%s274 + $0x20] sm:$0xff]
      %v286 = vld [vmem:[%s274 + $0x28] sm:$0xff]
      %v287 = vld [vmem:[%s274 + $0x30] sm:$0xff]
      %v288 = vld [vmem:[%s274 + $0x38] sm:$0xff]
      %v289 = vld [vmem:[%s274 + $0x40] sm:$0xff]
      %v290 = vld [vmem:[%s274 + $0x48] sm:$0xff]
      %v291 = vld [vmem:[%s274 + $0x50] sm:$0xff]
      %v292 = vld [vmem:[%s274 + $0x58] sm:$0xff]
      %v293 = vld [vmem:[%s274 + $0x60] sm:$0xff]
      %v294 = vld [vmem:[%s274 + $0x68] sm:$0xff]
      %v295 = vld [vmem:[%s274 + $0x70] sm:$0xff]
      %v296 = vld [vmem:[%s274 + $0x78] sm:$0xff]
      %v297 = vld [vmem:[%s274 + $0x80] sm:$0xff]
      %v298 = vld [vmem:[%s274 + $0x88] sm:$0xff]
      %v299 = vld [vmem:[%s274 + $0x90] sm:$0xff]
      %v300 = vld [vmem:[%s274 + $0x98] sm:$0xff]
      %v301 = vld [vmem:[%s274 + $0xa0] sm:$0xff]
      %v302 = vld [vmem:[%s274 + $0xa8] sm:$0xff]
      %v303 = vld [vmem:[%s274 + $0xb0] sm:$0xff]
      %v304 = vld [vmem:[%s274 + $0xb8] sm:$0xff]
      %v305 = vld [vmem:[%s274 + $0xc0] sm:$0xff]
      %v306 = vld [vmem:[%s274 + $0xc8] sm:$0xff]
      %v307 = vld [vmem:[%s274 + $0xd0] sm:$0xff]
      %v308 = vld [vmem:[%s274 + $0xd8] sm:$0xff]
      %v309 = vld [vmem:[%s274 + $0xe0] sm:$0xff]
      %v310 = vld [vmem:[%s274 + $0xe8] sm:$0xff]
      %v311 = vld [vmem:[%s274 + $0xf0] sm:$0xff]
      %v312 = vld [vmem:[%s274 + $0xf8] sm:$0xff]
      %v313 = vld [vmem:[%s274 + $0x100] sm:$0xff]
      %v314 = vld [vmem:[%s274 + $0x108] sm:$0xff]
      %v315 = vld [vmem:[%s274 + $0x110] sm:$0xff]
      %v316 = vld [vmem:[%s274 + $0x118] sm:$0xff]
      %v317 = vld [vmem:[%s274 + $0x120] sm:$0xff]
      %v318 = vld [vmem:[%s274 + $0x128] sm:$0xff]
      %v319 = vld [vmem:[%s274 + $0x130] sm:$0xff]
      %v320 = vld [vmem:[%s274 + $0x138] sm:$0xff]
      %v321 = vld [vmem:[%s274 + $0x140] sm:$0xff]
      %v322 = vld [vmem:[%s274 + $0x148] sm:$0xff]
      %v323 = vld [vmem:[%s274 + $0x150] sm:$0xff]
      %v324 = vld [vmem:[%s274 + $0x158] sm:$0xff]
      %v325 = vld [vmem:[%s274 + $0x160] sm:$0xff]
      %v326 = vld [vmem:[%s274 + $0x168] sm:$0xff]
      %v327 = vld [vmem:[%s274 + $0x170] sm:$0xff]
      %v328 = vld [vmem:[%s274 + $0x178] sm:$0xff]
      %v329 = vld [vmem:[%s274 + $0x180] sm:$0xff]
      %v330 = vld [vmem:[%s274 + $0x188] sm:$0xff]
      %v331 = vld [vmem:[%s274 + $0x190] sm:$0xff]
      %v332 = vld [vmem:[%s274 + $0x198] sm:$0xff]
      %v333 = vld [vmem:[%s3] sm:$0xff]
      %v334 = vld [vmem:[%s3 + $0x8] sm:$0x1]
      %v335 = vld [vmem:[%s4] sm:$0x1]
      %v337 = vlaneseq
      %v338 = vshrl.u32 %v337, 7
      %v339 = vsub.s32 0, %v338
      %v340 = vrot.slane %v335, %v339
      %vm342 = vcmask 72704
      %v344 = vsel %vm342, %v281, 0
      %v347 = vsel %vm342, %v282, 0
      %v350 = vsel %vm342, %v283, 0
      %v353 = vsel %vm342, %v284, 0
      %v356 = vsel %vm342, %v285, 0
      %v359 = vsel %vm342, %v286, 0
      %v362 = vsel %vm342, %v287, 0
      %v365 = vsel %vm342, %v288, 0
      %v368 = vsel %vm342, %v289, 0
      %v371 = vsel %vm342, %v290, 0
      %v374 = vsel %vm342, %v291, 0
      %v377 = vsel %vm342, %v292, 0
      %v380 = vsel %vm342, %v293, 0
      %v383 = vsel %vm342, %v294, 0
      %v386 = vsel %vm342, %v295, 0
      %v389 = vsel %vm342, %v296, 0
      %v392 = vsel %vm342, %v297, 0
      %v395 = vsel %vm342, %v298, 0
      %v398 = vsel %vm342, %v299, 0
      %v401 = vsel %vm342, %v300, 0
      %v404 = vsel %vm342, %v301, 0
      %v407 = vsel %vm342, %v302, 0
      %v410 = vsel %vm342, %v303, 0
      %v413 = vsel %vm342, %v304, 0
      %v416 = vsel %vm342, %v305, 0
      %v419 = vsel %vm342, %v306, 0
      %v422 = vsel %vm342, %v307, 0
      %v425 = vsel %vm342, %v308, 0
      %v428 = vsel %vm342, %v309, 0
      %v431 = vsel %vm342, %v310, 0
      %v434 = vsel %vm342, %v311, 0
      %v437 = vsel %vm342, %v312, 0
      %v440 = vsel %vm342, %v313, 0
      %v443 = vsel %vm342, %v314, 0
      %v446 = vsel %vm342, %v315, 0
      %v449 = vsel %vm342, %v316, 0
      %v452 = vsel %vm342, %v317, 0
      %v455 = vsel %vm342, %v318, 0
      %v458 = vsel %vm342, %v319, 0
      %v461 = vsel %vm342, %v320, 0
      %v464 = vsel %vm342, %v321, 0
      %v467 = vsel %vm342, %v322, 0
      %v470 = vsel %vm342, %v323, 0
      %v473 = vsel %vm342, %v324, 0
      %v476 = vsel %vm342, %v325, 0
      %v479 = vsel %vm342, %v326, 0
      %v482 = vsel %vm342, %v327, 0
      %v485 = vsel %vm342, %v328, 0
      %v488 = vsel %vm342, %v329, 0
      %v491 = vsel %vm342, %v330, 0
      %v494 = vsel %vm342, %v331, 0
      %v497 = vsel %vm342, %v332, 0
      %vm499 = vcmask 1040384
      %v501 = vsel %vm499, %v334, 0
      %503 = vmatprep.subr.mxu0 0.0
      %504 = vmatpush1.msra.mxu0 %v333
      %505 = vmatprep.subr.mxu0 0.0
      %506 = vmatpush1.msra.mxu0 %v501
      %507 = vmatprep.subr.mxu0 0.0
      %508 = vmatpush1.msra.mxu0 0.0
      %509 = vmatprep.subr.mxu0 0.0
      %510 = vmatpush1.msra.mxu0 0.0
      %511 = vmatprep.subr.mxu0 0.0
      %512 = vmatpush1.msra.mxu0 0.0
      %513 = vmatprep.subr.mxu0 0.0
      %514 = vmatpush1.msra.mxu0 0.0
      %515 = vmatprep.subr.mxu0 0.0
      %516 = vmatpush1.msra.mxu0 0.0
      %517 = vmatprep.subr.mxu0 0.0
      %518 = vmatpush1.msra.mxu0 0.0
      %519 = vmatprep.subr.mxu0 0.0
      %520 = vmatpush1.msra.mxu0 0.0
      %521 = vmatprep.subr.mxu0 0.0
      %522 = vmatpush1.msra.mxu0 0.0
      %523 = vmatprep.subr.mxu0 0.0
      %524 = vmatpush1.msra.mxu0 0.0
      %525 = vmatprep.subr.mxu0 0.0
      %526 = vmatpush1.msra.mxu0 0.0
      %527 = vmatprep.subr.mxu0 0.0
      %528 = vmatpush1.msra.mxu0 0.0
      %529 = vmatprep.subr.mxu0 0.0
      %530 = vmatpush1.msra.mxu0 0.0
      %531 = vmatprep.subr.mxu0 0.0
      %532 = vmatpush1.msra.mxu0 0.0
      %533 = vmatprep.subr.mxu0 0.0
      %534 = vmatpush1.msra.mxu0 0.0
      %535 = vmatprep.subr.mxu0 0.0
      %536 = vmatpush1.msra.mxu0 0.0
      %537 = vmatprep.subr.mxu0 0.0
      %538 = vmatpush1.msra.mxu0 0.0
      %539 = vmatprep.subr.mxu0 0.0
      %540 = vmatpush1.msra.mxu0 0.0
      %541 = vmatprep.subr.mxu0 0.0
      %542 = vmatpush1.msra.mxu0 0.0
      %543 = vmatprep.subr.mxu0 0.0
      %544 = vmatpush1.msra.mxu0 0.0
      %545 = vmatprep.subr.mxu0 0.0
      %546 = vmatpush1.msra.mxu0 0.0
      %547 = vmatprep.subr.mxu0 0.0
      %548 = vmatpush1.msra.mxu0 0.0
      %549 = vmatprep.subr.mxu0 0.0
      %550 = vmatpush1.msra.mxu0 0.0
      %551 = vmatprep.subr.mxu0 0.0
      %552 = vmatpush1.msra.mxu0 0.0
      %553 = vmatprep.subr.mxu0 0.0
      %554 = vmatpush1.msra.mxu0 0.0
      %555 = vmatprep.subr.mxu0 0.0
      %556 = vmatpush1.msra.mxu0 0.0
      %557 = vmatprep.subr.mxu0 0.0
      %558 = vmatpush1.msra.mxu0 0.0
      %559 = vmatprep.subr.mxu0 0.0
      %560 = vmatpush1.msra.mxu0 0.0
      %561 = vmatprep.subr.mxu0 0.0
      %562 = vmatpush1.msra.mxu0 0.0
      %563 = vmatprep.subr.mxu0 0.0
      %564 = vmatpush1.msra.mxu0 0.0
      %565 = vmatprep.subr.mxu0 0.0
      %566 = vmatpush1.msra.mxu0 0.0
      %567 = vmatprep.mubr.f32.mxu0 0.0
      %568 = vmatmul.mubr.f32.gmra.mrb[0].mxu0 %v344
      %v569 = vpop.f32.mrb[0].mxu0
      %v570 = vadd.f32 %v340, %v569
      %v571 = vpop.f32.mrb[0].mxu0
      %572 = vmatprep.mubr.f32.mxu0 0.0
      %573 = vmatmul.mubr.f32.gmra.mrb[0].mxu0 %v347
      %v574 = vpop.f32.mrb[0].mxu0
      %v575 = vadd.f32 %v340, %v574
      %v576 = vpop.f32.mrb[0].mxu0
      %577 = vmatprep.mubr.f32.mxu0 0.0
      %578 = vmatmul.mubr.f32.gmra.mrb[0].mxu0 %v350
      %v579 = vpop.f32.mrb[0].mxu0
      %v580 = vadd.f32 %v340, %v579
      %v581 = vpop.f32.mrb[0].mxu0
      %582 = vmatprep.mubr.f32.mxu0 0.0
      %583 = vmatmul.mubr.f32.gmra.mrb[0].mxu0 %v353
      %v584 = vpop.f32.mrb[0].mxu0
      %v585 = vadd.f32 %v340, %v584
      %v586 = vpop.f32.mrb[0].mxu0
      %587 = vmatprep.mubr.f32.mxu0 0.0
      %588 = vmatmul.mubr.f32.gmra.mrb[0].mxu0 %v356
      %v589 = vpop.f32.mrb[0].mxu0
      %v590 = vadd.f32 %v340, %v589
      %v591 = vpop.f32.mrb[0].mxu0
      %592 = vmatprep.mubr.f32.mxu0 0.0
      %593 = vmatmul.mubr.f32.gmra.mrb[0].mxu0 %v359
      %v594 = vpop.f32.mrb[0].mxu0
      %v595 = vadd.f32 %v340, %v594
      %v596 = vpop.f32.mrb[0].mxu0
      %597 = vmatprep.mubr.f32.mxu0 0.0
      %598 = vmatmul.mubr.f32.gmra.mrb[0].mxu0 %v362
      %v599 = vpop.f32.mrb[0].mxu0
      %v600 = vadd.f32 %v340, %v599
      %v601 = vpop.f32.mrb[0].mxu0
      %602 = vmatprep.mubr.f32.mxu0 0.0
      %603 = vmatmul.mubr.f32.gmra.mrb[0].mxu0 %v365
      %v604 = vpop.f32.mrb[0].mxu0
      %v605 = vadd.f32 %v340, %v604
      %v606 = vpop.f32.mrb[0].mxu0
      %607 = vmatprep.mubr.f32.mxu0 0.0
      %608 = vmatmul.mubr.f32.gmra.mrb[0].mxu0 %v368
      %v609 = vpop.f32.mrb[0].mxu0
      %v610 = vadd.f32 %v340, %v609
      %v611 = vpop.f32.mrb[0].mxu0
      %612 = vmatprep.mubr.f32.mxu0 0.0
      %613 = vmatmul.mubr.f32.gmra.mrb[0].mxu0 %v371
      %v614 = vpop.f32.mrb[0].mxu0
      %v615 = vadd.f32 %v340, %v614
      %v616 = vpop.f32.mrb[0].mxu0
      %617 = vmatprep.mubr.f32.mxu0 0.0
      %618 = vmatmul.mubr.f32.gmra.mrb[0].mxu0 %v374
      %v619 = vpop.f32.mrb[0].mxu0
      %v620 = vadd.f32 %v340, %v619
      %v621 = vpop.f32.mrb[0].mxu0
      %622 = vmatprep.mubr.f32.mxu0 0.0
      %623 = vmatmul.mubr.f32.gmra.mrb[0].mxu0 %v377
      %v624 = vpop.f32.mrb[0].mxu0
      %v625 = vadd.f32 %v340, %v624
      %v626 = vpop.f32.mrb[0].mxu0
      %627 = vmatprep.mubr.f32.mxu0 0.0
      %628 = vmatmul.mubr.f32.gmra.mrb[0].mxu0 %v380
      %v629 = vpop.f32.mrb[0].mxu0
      %v630 = vadd.f32 %v340, %v629
      %v631 = vpop.f32.mrb[0].mxu0
      %632 = vmatprep.mubr.f32.mxu0 0.0
      %633 = vmatmul.mubr.f32.gmra.mrb[0].mxu0 %v383
      %v634 = vpop.f32.mrb[0].mxu0
      %v635 = vadd.f32 %v340, %v634
      %v636 = vpop.f32.mrb[0].mxu0
      %637 = vmatprep.mubr.f32.mxu0 0.0
      %638 = vmatmul.mubr.f32.gmra.mrb[0].mxu0 %v386
      %v639 = vpop.f32.mrb[0].mxu0
      %v640 = vadd.f32 %v340, %v639
      %v641 = vpop.f32.mrb[0].mxu0
      %642 = vmatprep.mubr.f32.mxu0 0.0
      %643 = vmatmul.mubr.f32.gmra.mrb[0].mxu0 %v389
      %v644 = vpop.f32.mrb[0].mxu0
      %v645 = vadd.f32 %v340, %v644
      %v646 = vpop.f32.mrb[0].mxu0
      %647 = vmatprep.mubr.f32.mxu0 0.0
      %648 = vmatmul.mubr.f32.gmra.mrb[0].mxu0 %v392
      %v649 = vpop.f32.mrb[0].mxu0
      %v650 = vadd.f32 %v340, %v649
      %v651 = vpop.f32.mrb[0].mxu0
      %652 = vmatprep.mubr.f32.mxu0 0.0
      %653 = vmatmul.mubr.f32.gmra.mrb[0].mxu0 %v395
      %v654 = vpop.f32.mrb[0].mxu0
      %v655 = vadd.f32 %v340, %v654
      %v656 = vpop.f32.mrb[0].mxu0
      %657 = vmatprep.mubr.f32.mxu0 0.0
      %658 = vmatmul.mubr.f32.gmra.mrb[0].mxu0 %v398
      %v659 = vpop.f32.mrb[0].mxu0
      %v660 = vadd.f32 %v340, %v659
      %v661 = vpop.f32.mrb[0].mxu0
      %662 = vmatprep.mubr.f32.mxu0 0.0
      %663 = vmatmul.mubr.f32.gmra.mrb[0].mxu0 %v401
      %v664 = vpop.f32.mrb[0].mxu0
      %v665 = vadd.f32 %v340, %v664
      %v666 = vpop.f32.mrb[0].mxu0
      %667 = vmatprep.mubr.f32.mxu0 0.0
      %668 = vmatmul.mubr.f32.gmra.mrb[0].mxu0 %v404
      %v669 = vpop.f32.mrb[0].mxu0
      %v670 = vadd.f32 %v340, %v669
      %v671 = vpop.f32.mrb[0].mxu0
      %672 = vmatprep.mubr.f32.mxu0 0.0
      %673 = vmatmul.mubr.f32.gmra.mrb[0].mxu0 %v407
      %v674 = vpop.f32.mrb[0].mxu0
      %v675 = vadd.f32 %v340, %v674
      %v676 = vpop.f32.mrb[0].mxu0
      %677 = vmatprep.mubr.f32.mxu0 0.0
      %678 = vmatmul.mubr.f32.gmra.mrb[0].mxu0 %v410
      %v679 = vpop.f32.mrb[0].mxu0
      %v680 = vadd.f32 %v340, %v679
      %v681 = vpop.f32.mrb[0].mxu0
      %682 = vmatprep.mubr.f32.mxu0 0.0
      %683 = vmatmul.mubr.f32.gmra.mrb[0].mxu0 %v413
      %v684 = vpop.f32.mrb[0].mxu0
      %v685 = vadd.f32 %v340, %v684
      %v686 = vpop.f32.mrb[0].mxu0
      %687 = vmatprep.mubr.f32.mxu0 0.0
      %688 = vmatmul.mubr.f32.gmra.mrb[0].mxu0 %v416
      %v689 = vpop.f32.mrb[0].mxu0
      %v690 = vadd.f32 %v340, %v689
      %v691 = vpop.f32.mrb[0].mxu0
      %692 = vmatprep.mubr.f32.mxu0 0.0
      %693 = vmatmul.mubr.f32.gmra.mrb[0].mxu0 %v419
      %v694 = vpop.f32.mrb[0].mxu0
      %v695 = vadd.f32 %v340, %v694
      %v696 = vpop.f32.mrb[0].mxu0
      %697 = vmatprep.mubr.f32.mxu0 0.0
      %698 = vmatmul.mubr.f32.gmra.mrb[0].mxu0 %v422
      %v699 = vpop.f32.mrb[0].mxu0
      %v700 = vadd.f32 %v340, %v699
      %v701 = vpop.f32.mrb[0].mxu0
      %702 = vmatprep.mubr.f32.mxu0 0.0
      %703 = vmatmul.mubr.f32.gmra.mrb[0].mxu0 %v425
      %v704 = vpop.f32.mrb[0].mxu0
      %v705 = vadd.f32 %v340, %v704
      %v706 = vpop.f32.mrb[0].mxu0
      %707 = vmatprep.mubr.f32.mxu0 0.0
      %708 = vmatmul.mubr.f32.gmra.mrb[0].mxu0 %v428
      %v709 = vpop.f32.mrb[0].mxu0
      %v710 = vadd.f32 %v340, %v709
      %v711 = vpop.f32.mrb[0].mxu0
      %712 = vmatprep.mubr.f32.mxu0 0.0
      %713 = vmatmul.mubr.f32.gmra.mrb[0].mxu0 %v431
      %v714 = vpop.f32.mrb[0].mxu0
      %v715 = vadd.f32 %v340, %v714
      %v716 = vpop.f32.mrb[0].mxu0
      %717 = vmatprep.mubr.f32.mxu0 0.0
      %718 = vmatmul.mubr.f32.gmra.mrb[0].mxu0 %v434
      %v719 = vpop.f32.mrb[0].mxu0
      %v720 = vadd.f32 %v340, %v719
      %v721 = vpop.f32.mrb[0].mxu0
      %722 = vmatprep.mubr.f32.mxu0 0.0
      %723 = vmatmul.mubr.f32.gmra.mrb[0].mxu0 %v437
      %v724 = vpop.f32.mrb[0].mxu0
      %v725 = vadd.f32 %v340, %v724
      %v726 = vpop.f32.mrb[0].mxu0
      %727 = vmatprep.mubr.f32.mxu0 0.0
      %728 = vmatmul.mubr.f32.gmra.mrb[0].mxu0 %v440
      %v729 = vpop.f32.mrb[0].mxu0
      %v730 = vadd.f32 %v340, %v729
      %v731 = vpop.f32.mrb[0].mxu0
      %732 = vmatprep.mubr.f32.mxu0 0.0
      %733 = vmatmul.mubr.f32.gmra.mrb[0].mxu0 %v443
      %v734 = vpop.f32.mrb[0].mxu0
      %v735 = vadd.f32 %v340, %v734
      %v736 = vpop.f32.mrb[0].mxu0
      %737 = vmatprep.mubr.f32.mxu0 0.0
      %738 = vmatmul.mubr.f32.gmra.mrb[0].mxu0 %v446
      %v739 = vpop.f32.mrb[0].mxu0
      %v740 = vadd.f32 %v340, %v739
      %v741 = vpop.f32.mrb[0].mxu0
      %742 = vmatprep.mubr.f32.mxu0 0.0
      %743 = vmatmul.mubr.f32.gmra.mrb[0].mxu0 %v449
      %v744 = vpop.f32.mrb[0].mxu0
      %v745 = vadd.f32 %v340, %v744
      %v746 = vpop.f32.mrb[0].mxu0
      %747 = vmatprep.mubr.f32.mxu0 0.0
      %748 = vmatmul.mubr.f32.gmra.mrb[0].mxu0 %v452
      %v749 = vpop.f32.mrb[0].mxu0
      %v750 = vadd.f32 %v340, %v749
      %v751 = vpop.f32.mrb[0].mxu0
      %752 = vmatprep.mubr.f32.mxu0 0.0
      %753 = vmatmul.mubr.f32.gmra.mrb[0].mxu0 %v455
      %v754 = vpop.f32.mrb[0].mxu0
      %v755 = vadd.f32 %v340, %v754
      %v756 = vpop.f32.mrb[0].mxu0
      %757 = vmatprep.mubr.f32.mxu0 0.0
      %758 = vmatmul.mubr.f32.gmra.mrb[0].mxu0 %v458
      %v759 = vpop.f32.mrb[0].mxu0
      %v760 = vadd.f32 %v340, %v759
      %v761 = vpop.f32.mrb[0].mxu0
      %762 = vmatprep.mubr.f32.mxu0 0.0
      %763 = vmatmul.mubr.f32.gmra.mrb[0].mxu0 %v461
      %v764 = vpop.f32.mrb[0].mxu0
      %v765 = vadd.f32 %v340, %v764
      %v766 = vpop.f32.mrb[0].mxu0
      %767 = vmatprep.mubr.f32.mxu0 0.0
      %768 = vmatmul.mubr.f32.gmra.mrb[0].mxu0 %v464
      %v769 = vpop.f32.mrb[0].mxu0
      %v770 = vadd.f32 %v340, %v769
      %v771 = vpop.f32.mrb[0].mxu0
      %772 = vmatprep.mubr.f32.mxu0 0.0
      %773 = vmatmul.mubr.f32.gmra.mrb[0].mxu0 %v467
      %v774 = vpop.f32.mrb[0].mxu0
      %v775 = vadd.f32 %v340, %v774
      %v776 = vpop.f32.mrb[0].mxu0
      %777 = vmatprep.mubr.f32.mxu0 0.0
      %778 = vmatmul.mubr.f32.gmra.mrb[0].mxu0 %v470
      %v779 = vpop.f32.mrb[0].mxu0
      %v780 = vadd.f32 %v340, %v779
      %v781 = vpop.f32.mrb[0].mxu0
      %782 = vmatprep.mubr.f32.mxu0 0.0
      %783 = vmatmul.mubr.f32.gmra.mrb[0].mxu0 %v473
      %v784 = vpop.f32.mrb[0].mxu0
      %v785 = vadd.f32 %v340, %v784
      %v786 = vpop.f32.mrb[0].mxu0
      %787 = vmatprep.mubr.f32.mxu0 0.0
      %788 = vmatmul.mubr.f32.gmra.mrb[0].mxu0 %v476
      %v789 = vpop.f32.mrb[0].mxu0
      %v790 = vadd.f32 %v340, %v789
      %v791 = vpop.f32.mrb[0].mxu0
      %792 = vmatprep.mubr.f32.mxu0 0.0
      %793 = vmatmul.mubr.f32.gmra.mrb[0].mxu0 %v479
      %v794 = vpop.f32.mrb[0].mxu0
      %v795 = vadd.f32 %v340, %v794
      %v796 = vpop.f32.mrb[0].mxu0
      %797 = vmatprep.mubr.f32.mxu0 0.0
      %798 = vmatmul.mubr.f32.gmra.mrb[0].mxu0 %v482
      %v799 = vpop.f32.mrb[0].mxu0
      %v800 = vadd.f32 %v340, %v799
      %v801 = vpop.f32.mrb[0].mxu0
      %802 = vmatprep.mubr.f32.mxu0 0.0
      %803 = vmatmul.mubr.f32.gmra.mrb[0].mxu0 %v485
      %v804 = vpop.f32.mrb[0].mxu0
      %v805 = vadd.f32 %v340, %v804
      %v806 = vpop.f32.mrb[0].mxu0
      %807 = vmatprep.mubr.f32.mxu0 0.0
      %808 = vmatmul.mubr.f32.gmra.mrb[0].mxu0 %v488
      %v809 = vpop.f32.mrb[0].mxu0
      %v810 = vadd.f32 %v340, %v809
      %v811 = vpop.f32.mrb[0].mxu0
      %812 = vmatprep.mubr.f32.mxu0 0.0
      %813 = vmatmul.mubr.f32.gmra.mrb[0].mxu0 %v491
      %v814 = vpop.f32.mrb[0].mxu0
      %v815 = vadd.f32 %v340, %v814
      %v816 = vpop.f32.mrb[0].mxu0
      %817 = vmatprep.mubr.f32.mxu0 0.0
      %818 = vmatmul.mubr.f32.gmra.mrb[0].mxu0 %v494
      %v819 = vpop.f32.mrb[0].mxu0
      %v820 = vadd.f32 %v340, %v819
      %v821 = vpop.f32.mrb[0].mxu0
      %822 = vmatprep.mubr.f32.mxu0 0.0
      %823 = vmatmul.mubr.f32.gmra.mrb[0].mxu0 %v497
      %v824 = vpop.f32.mrb[0].mxu0
      %v825 = vadd.f32 %v340, %v824
      %v826 = vpop.f32.mrb[0].mxu0
      %827 = vdwg.mxu0
      %v828 = vmax.f32 %v570, 0.0
      %v829 = vmax.f32 %v575, 0.0
      %v830 = vmax.f32 %v580, 0.0
      %v831 = vmax.f32 %v585, 0.0
      %v832 = vmax.f32 %v590, 0.0
      %v833 = vmax.f32 %v595, 0.0
      %v834 = vmax.f32 %v600, 0.0
      %v835 = vmax.f32 %v605, 0.0
      %v836 = vmax.f32 %v610, 0.0
      %v837 = vmax.f32 %v615, 0.0
      %v838 = vmax.f32 %v620, 0.0
      %v839 = vmax.f32 %v625, 0.0
      %v840 = vmax.f32 %v630, 0.0
      %v841 = vmax.f32 %v635, 0.0
      %v842 = vmax.f32 %v640, 0.0
      %v843 = vmax.f32 %v645, 0.0
      %v844 = vmax.f32 %v650, 0.0
      %v845 = vmax.f32 %v655, 0.0
      %v846 = vmax.f32 %v660, 0.0
      %v847 = vmax.f32 %v665, 0.0
      %v848 = vmax.f32 %v670, 0.0
      %v849 = vmax.f32 %v675, 0.0
      %v850 = vmax.f32 %v680, 0.0
      %v851 = vmax.f32 %v685, 0.0
      %v852 = vmax.f32 %v690, 0.0
      %v853 = vmax.f32 %v695, 0.0
      %v854 = vmax.f32 %v700, 0.0
      %v855 = vmax.f32 %v705, 0.0
      %v856 = vmax.f32 %v710, 0.0
      %v857 = vmax.f32 %v715, 0.0
      %v858 = vmax.f32 %v720, 0.0
      %v859 = vmax.f32 %v725, 0.0
      %v860 = vmax.f32 %v730, 0.0
      %v861 = vmax.f32 %v735, 0.0
      %v862 = vmax.f32 %v740, 0.0
      %v863 = vmax.f32 %v745, 0.0
      %v864 = vmax.f32 %v750, 0.0
      %v865 = vmax.f32 %v755, 0.0
      %v866 = vmax.f32 %v760, 0.0
      %v867 = vmax.f32 %v765, 0.0
      %v868 = vmax.f32 %v770, 0.0
      %v869 = vmax.f32 %v775, 0.0
      %v870 = vmax.f32 %v780, 0.0
      %v871 = vmax.f32 %v785, 0.0
      %v872 = vmax.f32 %v790, 0.0
      %v873 = vmax.f32 %v795, 0.0
      %v874 = vmax.f32 %v800, 0.0
      %v875 = vmax.f32 %v805, 0.0
      %v876 = vmax.f32 %v810, 0.0
      %v877 = vmax.f32 %v815, 0.0
      %v878 = vmax.f32 %v820, 0.0
      %v879 = vmax.f32 %v825, 0.0
      %v880 = vmax.f32 %v828, %v841
      %v881 = vmax.f32 %v829, %v842
      %v882 = vmax.f32 %v830, %v843
      %v883 = vmax.f32 %v831, %v844
      %v884 = vmax.f32 %v832, %v845
      %v885 = vmax.f32 %v833, %v846
      %v886 = vmax.f32 %v834, %v847
      %v887 = vmax.f32 %v835, %v848
      %v888 = vmax.f32 %v836, %v849
      %v889 = vmax.f32 %v837, %v850
      %v890 = vmax.f32 %v838, %v851
      %v891 = vmax.f32 %v839, %v852
      %v892 = vmax.f32 %v840, %v853
      %v893 = vmax.f32 %v854, %v867
      %v894 = vmax.f32 %v855, %v868
      %v895 = vmax.f32 %v856, %v869
      %v896 = vmax.f32 %v857, %v870
      %v897 = vmax.f32 %v858, %v871
      %v898 = vmax.f32 %v859, %v872
      %v899 = vmax.f32 %v860, %v873
      %v900 = vmax.f32 %v861, %v874
      %v901 = vmax.f32 %v862, %v875
      %v902 = vmax.f32 %v863, %v876
      %v903 = vmax.f32 %v864, %v877
      %v904 = vmax.f32 %v865, %v878
      %v905 = vmax.f32 %v866, %v879
      %v906 = vmax.f32 %v880, %v893
      %v907 = vmax.f32 %v881, %v894
      %v908 = vmax.f32 %v882, %v895
      %v909 = vmax.f32 %v883, %v896
      %v910 = vmax.f32 %v884, %v897
      %v911 = vmax.f32 %v885, %v898
      %v912 = vmax.f32 %v886, %v899
      %v913 = vmax.f32 %v887, %v900
      %v914 = vmax.f32 %v888, %v901
      %v915 = vmax.f32 %v889, %v902
      %v916 = vmax.f32 %v890, %v903
      %v917 = vmax.f32 %v891, %v904
      %v918 = vmax.f32 %v892, %v905
      %v919 = vld [vmem:[%s1] sm:$0xff]
      %v920 = vld [vmem:[%s1 + $0x8] sm:$0xff]
      %v921 = vld [vmem:[%s1 + $0x10] sm:$0xff]
      %v922 = vld [vmem:[%s1 + $0x18] sm:$0xff]
      %v923 = vld [vmem:[%s1 + $0x20] sm:$0xff]
      %v924 = vld [vmem:[%s1 + $0x28] sm:$0xff]
      %v925 = vld [vmem:[%s1 + $0x30] sm:$0xff]
      %v926 = vld [vmem:[%s1 + $0x38] sm:$0xff]
      %v927 = vld [vmem:[%s1 + $0x40] sm:$0xff]
      %v928 = vld [vmem:[%s1 + $0x48] sm:$0xff]
      %v929 = vld [vmem:[%s1 + $0x50] sm:$0xff]
      %v930 = vld [vmem:[%s1 + $0x58] sm:$0xff]
      %v931 = vld [vmem:[%s1 + $0x60] sm:$0xff]
      %933 = vset.pattern.permute.xlu0 0
      %934 = vperm.xlu0 %933, %v919
      %v935 = vpop.permute.xlu0 %934
      %938 = vset.pattern.permute.xlu0 0
      %939 = vperm.xlu0 %938, %v920
      %v940 = vpop.permute.xlu0 %939
      %943 = vset.pattern.permute.xlu0 0
      %944 = vperm.xlu0 %943, %v921
      %v945 = vpop.permute.xlu0 %944
      %948 = vset.pattern.permute.xlu0 0
      %949 = vperm.xlu0 %948, %v922
      %v950 = vpop.permute.xlu0 %949
      %953 = vset.pattern.permute.xlu0 0
      %954 = vperm.xlu0 %953, %v923
      %v955 = vpop.permute.xlu0 %954
      %958 = vset.pattern.permute.xlu0 0
      %959 = vperm.xlu0 %958, %v924
      %v960 = vpop.permute.xlu0 %959
      %963 = vset.pattern.permute.xlu0 0
      %964 = vperm.xlu0 %963, %v925
      %v965 = vpop.permute.xlu0 %964
      %968 = vset.pattern.permute.xlu0 0
      %969 = vperm.xlu0 %968, %v926
      %v970 = vpop.permute.xlu0 %969
      %973 = vset.pattern.permute.xlu0 0
      %974 = vperm.xlu0 %973, %v927
      %v975 = vpop.permute.xlu0 %974
      %978 = vset.pattern.permute.xlu0 0
      %979 = vperm.xlu0 %978, %v928
      %v980 = vpop.permute.xlu0 %979
      %983 = vset.pattern.permute.xlu0 0
      %984 = vperm.xlu0 %983, %v929
      %v985 = vpop.permute.xlu0 %984
      %988 = vset.pattern.permute.xlu0 0
      %989 = vperm.xlu0 %988, %v930
      %v990 = vpop.permute.xlu0 %989
      %993 = vset.pattern.permute.xlu0 0
      %994 = vperm.xlu0 %993, %v931
      %v995 = vpop.permute.xlu0 %994
      %v997 = vmul.f32 %v906, %v935
      %v998 = vmul.f32 %v907, %v940
      %v999 = vmul.f32 %v908, %v945
      %v1000 = vmul.f32 %v909, %v950
      %v1001 = vmul.f32 %v910, %v955
      %v1002 = vmul.f32 %v911, %v960
      %v1003 = vmul.f32 %v912, %v965
      %v1004 = vmul.f32 %v913, %v970
      %v1005 = vmul.f32 %v914, %v975
      %v1006 = vmul.f32 %v915, %v980
      %v1007 = vmul.f32 %v916, %v985
      %v1008 = vmul.f32 %v917, %v990
      %v1009 = vmul.f32 %v918, %v995
      %vm1010 = vcmask 130048
      %1011 = vst.msk [vmem:[#allocation2] sm:$0xff] %vm1010, %v997
      %1012 = vst.msk [vmem:[#allocation2 + $0x8] sm:$0xff] %vm1010, %v998
      %1013 = vst.msk [vmem:[#allocation2 + $0x10] sm:$0xff] %vm1010, %v999
      %1014 = vst.msk [vmem:[#allocation2 + $0x18] sm:$0xff] %vm1010, %v1000
      %1015 = vst.msk [vmem:[#allocation2 + $0x20] sm:$0xff] %vm1010, %v1001
      %1016 = vst.msk [vmem:[#allocation2 + $0x28] sm:$0xff] %vm1010, %v1002
      %1017 = vst.msk [vmem:[#allocation2 + $0x30] sm:$0xff] %vm1010, %v1003
      %1018 = vst.msk [vmem:[#allocation2 + $0x38] sm:$0xff] %vm1010, %v1004
      %1019 = vst.msk [vmem:[#allocation2 + $0x40] sm:$0xff] %vm1010, %v1005
      %1020 = vst.msk [vmem:[#allocation2 + $0x48] sm:$0xff] %vm1010, %v1006
      %1021 = vst.msk [vmem:[#allocation2 + $0x50] sm:$0xff] %vm1010, %v1007
      %1022 = vst.msk [vmem:[#allocation2 + $0x58] sm:$0xff] %vm1010, %v1008
      %1023 = vst.msk [vmem:[#allocation2 + $0x60] sm:$0xff] %vm1010, %v1009
      %1024 = vst.msk [vmem:[#allocation2 + $0x68] sm:$0xff] %vm1010, 0.0
      %1025 = vst.msk [vmem:[#allocation2 + $0x70] sm:$0xff] %vm1010, 0.0
      %1026 = vst.msk [vmem:[#allocation2 + $0x78] sm:$0xff] %vm1010, 0.0
      %v1027 = vld [vmem:[#allocation2] sm:$0xff]
      %v1028 = vld [vmem:[#allocation2 + $0x8] sm:$0xff]
      %v1029 = vld [vmem:[#allocation2 + $0x10] sm:$0xff]
      %v1030 = vld [vmem:[#allocation2 + $0x18] sm:$0xff]
      %v1031 = vld [vmem:[#allocation2 + $0x20] sm:$0xff]
      %v1032 = vld [vmem:[#allocation2 + $0x28] sm:$0xff]
      %v1033 = vld [vmem:[#allocation2 + $0x30] sm:$0xff]
      %v1034 = vld [vmem:[#allocation2 + $0x38] sm:$0xff]
      %v1035 = vld [vmem:[#allocation2 + $0x40] sm:$0xff]
      %v1036 = vld [vmem:[#allocation2 + $0x48] sm:$0xff]
      %v1037 = vld [vmem:[#allocation2 + $0x50] sm:$0xff]
      %v1038 = vld [vmem:[#allocation2 + $0x58] sm:$0xff]
      %v1039 = vld [vmem:[#allocation2 + $0x60] sm:$0xff]
      %v1040 = vld [vmem:[%s5] sm:$0xff]
      %v1041 = vld [vmem:[%s5 + $0x8] sm:$0xff]
      %v1042 = vld [vmem:[#allocation2 + $0x1] sm:$0xff]
      %v1043 = vld [vmem:[#allocation2 + $0x9] sm:$0xff]
      %v1044 = vld [vmem:[#allocation2 + $0x11] sm:$0xff]
      %v1045 = vld [vmem:[#allocation2 + $0x19] sm:$0xff]
      %v1046 = vld [vmem:[#allocation2 + $0x21] sm:$0xff]
      %v1047 = vld [vmem:[#allocation2 + $0x29] sm:$0xff]
      %v1048 = vld [vmem:[#allocation2 + $0x31] sm:$0xff]
      %v1049 = vld [vmem:[#allocation2 + $0x39] sm:$0xff]
      %v1050 = vld [vmem:[#allocation2 + $0x41] sm:$0xff]
      %v1051 = vld [vmem:[#allocation2 + $0x49] sm:$0xff]
      %v1052 = vld [vmem:[#allocation2 + $0x51] sm:$0xff]
      %v1053 = vld [vmem:[#allocation2 + $0x59] sm:$0xff]
      %v1054 = vld [vmem:[#allocation2 + $0x61] sm:$0xff]
      %s1055 = scalar_lea.vmem %s5, 16
      %v1056 = vld [vmem:[%s1055] sm:$0xff]
      %v1057 = vld [vmem:[%s1055 + $0x8] sm:$0xff]
      %v1059 = vsel %vm1010, %v1042, 0
      %v1062 = vsel %vm1010, %v1043, 0
      %v1065 = vsel %vm1010, %v1044, 0
      %v1068 = vsel %vm1010, %v1045, 0
      %v1071 = vsel %vm1010, %v1046, 0
      %v1074 = vsel %vm1010, %v1047, 0
      %v1077 = vsel %vm1010, %v1048, 0
      %v1080 = vsel %vm1010, %v1049, 0
      %v1083 = vsel %vm1010, %v1050, 0
      %v1086 = vsel %vm1010, %v1051, 0
      %v1089 = vsel %vm1010, %v1052, 0
      %v1092 = vsel %vm1010, %v1053, 0
      %v1095 = vsel %vm1010, %v1054, 0
      %1097 = vmatprep.subr.mxu0 0.0
      %1098 = vmatpush1.msra.mxu0 %v1056
      %1099 = vmatprep.subr.mxu0 0.0
      %1100 = vmatpush1.msra.mxu0 %v1057
      %1101 = vmatprep.subr.mxu0 0.0
      %1102 = vmatpush1.msra.mxu0 0.0
      %1103 = vmatprep.subr.mxu0 0.0
      %1104 = vmatpush1.msra.mxu0 0.0
      %1105 = vmatprep.subr.mxu0 0.0
      %1106 = vmatpush1.msra.mxu0 0.0
      %1107 = vmatprep.subr.mxu0 0.0
      %1108 = vmatpush1.msra.mxu0 0.0
      %1109 = vmatprep.subr.mxu0 0.0
      %1110 = vmatpush1.msra.mxu0 0.0
      %1111 = vmatprep.subr.mxu0 0.0
      %1112 = vmatpush1.msra.mxu0 0.0
      %1113 = vmatprep.subr.mxu0 0.0
      %1114 = vmatpush1.msra.mxu0 0.0
      %1115 = vmatprep.subr.mxu0 0.0
      %1116 = vmatpush1.msra.mxu0 0.0
      %1117 = vmatprep.subr.mxu0 0.0
      %1118 = vmatpush1.msra.mxu0 0.0
      %1119 = vmatprep.subr.mxu0 0.0
      %1120 = vmatpush1.msra.mxu0 0.0
      %1121 = vmatprep.subr.mxu0 0.0
      %1122 = vmatpush1.msra.mxu0 0.0
      %1123 = vmatprep.subr.mxu0 0.0
      %1124 = vmatpush1.msra.mxu0 0.0
      %1125 = vmatprep.subr.mxu0 0.0
      %1126 = vmatpush1.msra.mxu0 0.0
      %1127 = vmatprep.subr.mxu0 0.0
      %1128 = vmatpush1.msra.mxu0 0.0
      %1129 = vmatprep.subr.mxu0 0.0
      %1130 = vmatpush1.msra.mxu0 0.0
      %1131 = vmatprep.subr.mxu0 0.0
      %1132 = vmatpush1.msra.mxu0 0.0
      %1133 = vmatprep.subr.mxu0 0.0
      %1134 = vmatpush1.msra.mxu0 0.0
      %1135 = vmatprep.subr.mxu0 0.0
      %1136 = vmatpush1.msra.mxu0 0.0
      %1137 = vmatprep.subr.mxu0 0.0
      %1138 = vmatpush1.msra.mxu0 0.0
      %1139 = vmatprep.subr.mxu0 0.0
      %1140 = vmatpush1.msra.mxu0 0.0
      %1141 = vmatprep.subr.mxu0 0.0
      %1142 = vmatpush1.msra.mxu0 0.0
      %1143 = vmatprep.subr.mxu0 0.0
      %1144 = vmatpush1.msra.mxu0 0.0
      %1145 = vmatprep.subr.mxu0 0.0
      %1146 = vmatpush1.msra.mxu0 0.0
      %1147 = vmatprep.subr.mxu0 0.0
      %1148 = vmatpush1.msra.mxu0 0.0
      %1149 = vmatprep.subr.mxu0 0.0
      %1150 = vmatpush1.msra.mxu0 0.0
      %1151 = vmatprep.subr.mxu0 0.0
      %1152 = vmatpush1.msra.mxu0 0.0
      %1153 = vmatprep.subr.mxu0 0.0
      %1154 = vmatpush1.msra.mxu0 0.0
      %1155 = vmatprep.subr.mxu0 0.0
      %1156 = vmatpush1.msra.mxu0 0.0
      %1157 = vmatprep.subr.mxu0 0.0
      %1158 = vmatpush1.msra.mxu0 0.0
      %1159 = vmatprep.subr.mxu0 0.0
      %1160 = vmatpush1.msra.mxu0 0.0
      %1161 = vmatprep.mubr.f32.mxu0 0.0
      %1162 = vmatmul.mubr.f32.gmra.mrb[0].mxu0 %v1059
      %v1163 = vpop.f32.mrb[0].mxu0
      %v1164 = vadd.f32 0.0, %v1163
      %v1165 = vpop.f32.mrb[0].mxu0
      %1166 = vmatprep.mubr.f32.mxu0 0.0
      %1167 = vmatmul.mubr.f32.gmra.mrb[0].mxu0 %v1062
      %v1168 = vpop.f32.mrb[0].mxu0
      %v1169 = vadd.f32 0.0, %v1168
      %v1170 = vpop.f32.mrb[0].mxu0
      %1171 = vmatprep.mubr.f32.mxu0 0.0
      %1172 = vmatmul.mubr.f32.gmra.mrb[0].mxu0 %v1065
      %v1173 = vpop.f32.mrb[0].mxu0
      %v1174 = vadd.f32 0.0, %v1173
      %v1175 = vpop.f32.mrb[0].mxu0
      %1176 = vmatprep.mubr.f32.mxu0 0.0
      %1177 = vmatmul.mubr.f32.gmra.mrb[0].mxu0 %v1068
      %v1178 = vpop.f32.mrb[0].mxu0
      %v1179 = vadd.f32 0.0, %v1178
      %v1180 = vpop.f32.mrb[0].mxu0
      %1181 = vmatprep.mubr.f32.mxu0 0.0
      %1182 = vmatmul.mubr.f32.gmra.mrb[0].mxu0 %v1071
      %v1183 = vpop.f32.mrb[0].mxu0
      %v1184 = vadd.f32 0.0, %v1183
      %v1185 = vpop.f32.mrb[0].mxu0
      %1186 = vmatprep.mubr.f32.mxu0 0.0
      %1187 = vmatmul.mubr.f32.gmra.mrb[0].mxu0 %v1074
      %v1188 = vpop.f32.mrb[0].mxu0
      %v1189 = vadd.f32 0.0, %v1188
      %v1190 = vpop.f32.mrb[0].mxu0
      %1191 = vmatprep.mubr.f32.mxu0 0.0
      %1192 = vmatmul.mubr.f32.gmra.mrb[0].mxu0 %v1077
      %v1193 = vpop.f32.mrb[0].mxu0
      %v1194 = vadd.f32 0.0, %v1193
      %v1195 = vpop.f32.mrb[0].mxu0
      %1196 = vmatprep.mubr.f32.mxu0 0.0
      %1197 = vmatmul.mubr.f32.gmra.mrb[0].mxu0 %v1080
      %v1198 = vpop.f32.mrb[0].mxu0
      %v1199 = vadd.f32 0.0, %v1198
      %v1200 = vpop.f32.mrb[0].mxu0
      %1201 = vmatprep.mubr.f32.mxu0 0.0
      %1202 = vmatmul.mubr.f32.gmra.mrb[0].mxu0 %v1083
      %v1203 = vpop.f32.mrb[0].mxu0
      %v1204 = vadd.f32 0.0, %v1203
      %v1205 = vpop.f32.mrb[0].mxu0
      %1206 = vmatprep.mubr.f32.mxu0 0.0
      %1207 = vmatmul.mubr.f32.gmra.mrb[0].mxu0 %v1086
      %v1208 = vpop.f32.mrb[0].mxu0
      %v1209 = vadd.f32 0.0, %v1208
      %v1210 = vpop.f32.mrb[0].mxu0
      %1211 = vmatprep.mubr.f32.mxu0 0.0
      %1212 = vmatmul.mubr.f32.gmra.mrb[0].mxu0 %v1089
      %v1213 = vpop.f32.mrb[0].mxu0
      %v1214 = vadd.f32 0.0, %v1213
      %v1215 = vpop.f32.mrb[0].mxu0
      %1216 = vmatprep.mubr.f32.mxu0 0.0
      %1217 = vmatmul.mubr.f32.gmra.mrb[0].mxu0 %v1092
      %v1218 = vpop.f32.mrb[0].mxu0
      %v1219 = vadd.f32 0.0, %v1218
      %v1220 = vpop.f32.mrb[0].mxu0
      %1221 = vmatprep.mubr.f32.mxu0 0.0
      %1222 = vmatmul.mubr.f32.gmra.mrb[0].mxu0 %v1095
      %v1223 = vpop.f32.mrb[0].mxu0
      %v1224 = vadd.f32 0.0, %v1223
      %v1225 = vpop.f32.mrb[0].mxu0
      %1226 = vdwg.mxu0
      %v1228 = vsel %vm1010, %v1027, 0
      %v1231 = vsel %vm1010, %v1028, 0
      %v1234 = vsel %vm1010, %v1029, 0
      %v1237 = vsel %vm1010, %v1030, 0
      %v1240 = vsel %vm1010, %v1031, 0
      %v1243 = vsel %vm1010, %v1032, 0
      %v1246 = vsel %vm1010, %v1033, 0
      %v1249 = vsel %vm1010, %v1034, 0
      %v1252 = vsel %vm1010, %v1035, 0
      %v1255 = vsel %vm1010, %v1036, 0
      %v1258 = vsel %vm1010, %v1037, 0
      %v1261 = vsel %vm1010, %v1038, 0
      %v1264 = vsel %vm1010, %v1039, 0
      %1266 = vmatprep.subr.mxu0 0.0
      %1267 = vmatpush1.msra.mxu0 %v1040
      %1268 = vmatprep.subr.mxu0 0.0
      %1269 = vmatpush1.msra.mxu0 %v1041
      %1270 = vmatprep.subr.mxu0 0.0
      %1271 = vmatpush1.msra.mxu0 0.0
      %1272 = vmatprep.subr.mxu0 0.0
      %1273 = vmatpush1.msra.mxu0 0.0
      %1274 = vmatprep.subr.mxu0 0.0
      %1275 = vmatpush1.msra.mxu0 0.0
      %1276 = vmatprep.subr.mxu0 0.0
      %1277 = vmatpush1.msra.mxu0 0.0
      %1278 = vmatprep.subr.mxu0 0.0
      %1279 = vmatpush1.msra.mxu0 0.0
      %1280 = vmatprep.subr.mxu0 0.0
      %1281 = vmatpush1.msra.mxu0 0.0
      %1282 = vmatprep.subr.mxu0 0.0
      %1283 = vmatpush1.msra.mxu0 0.0
      %1284 = vmatprep.subr.mxu0 0.0
      %1285 = vmatpush1.msra.mxu0 0.0
      %1286 = vmatprep.subr.mxu0 0.0
      %1287 = vmatpush1.msra.mxu0 0.0
      %1288 = vmatprep.subr.mxu0 0.0
      %1289 = vmatpush1.msra.mxu0 0.0
      %1290 = vmatprep.subr.mxu0 0.0
      %1291 = vmatpush1.msra.mxu0 0.0
      %1292 = vmatprep.subr.mxu0 0.0
      %1293 = vmatpush1.msra.mxu0 0.0
      %1294 = vmatprep.subr.mxu0 0.0
      %1295 = vmatpush1.msra.mxu0 0.0
      %1296 = vmatprep.subr.mxu0 0.0
      %1297 = vmatpush1.msra.mxu0 0.0
      %1298 = vmatprep.subr.mxu0 0.0
      %1299 = vmatpush1.msra.mxu0 0.0
      %1300 = vmatprep.subr.mxu0 0.0
      %1301 = vmatpush1.msra.mxu0 0.0
      %1302 = vmatprep.subr.mxu0 0.0
      %1303 = vmatpush1.msra.mxu0 0.0
      %1304 = vmatprep.subr.mxu0 0.0
      %1305 = vmatpush1.msra.mxu0 0.0
      %1306 = vmatprep.subr.mxu0 0.0
      %1307 = vmatpush1.msra.mxu0 0.0
      %1308 = vmatprep.subr.mxu0 0.0
      %1309 = vmatpush1.msra.mxu0 0.0
      %1310 = vmatprep.subr.mxu0 0.0
      %1311 = vmatpush1.msra.mxu0 0.0
      %1312 = vmatprep.subr.mxu0 0.0
      %1313 = vmatpush1.msra.mxu0 0.0
      %1314 = vmatprep.subr.mxu0 0.0
      %1315 = vmatpush1.msra.mxu0 0.0
      %1316 = vmatprep.subr.mxu0 0.0
      %1317 = vmatpush1.msra.mxu0 0.0
      %1318 = vmatprep.subr.mxu0 0.0
      %1319 = vmatpush1.msra.mxu0 0.0
      %1320 = vmatprep.subr.mxu0 0.0
      %1321 = vmatpush1.msra.mxu0 0.0
      %1322 = vmatprep.subr.mxu0 0.0
      %1323 = vmatpush1.msra.mxu0 0.0
      %1324 = vmatprep.subr.mxu0 0.0
      %1325 = vmatpush1.msra.mxu0 0.0
      %1326 = vmatprep.subr.mxu0 0.0
      %1327 = vmatpush1.msra.mxu0 0.0
      %1328 = vmatprep.subr.mxu0 0.0
      %1329 = vmatpush1.msra.mxu0 0.0
      %1330 = vmatprep.mubr.f32.mxu0 0.0
      %1331 = vmatmul.mubr.f32.gmra.mrb[0].mxu0 %v1228
      %v1332 = vpop.f32.mrb[0].mxu0
      %v1333 = vadd.f32 %v1164, %v1332
      %v1334 = vpop.f32.mrb[0].mxu0
      %1335 = vmatprep.mubr.f32.mxu0 0.0
      %1336 = vmatmul.mubr.f32.gmra.mrb[0].mxu0 %v1231
      %v1337 = vpop.f32.mrb[0].mxu0
      %v1338 = vadd.f32 %v1169, %v1337
      %v1339 = vpop.f32.mrb[0].mxu0
      %1340 = vmatprep.mubr.f32.mxu0 0.0
      %1341 = vmatmul.mubr.f32.gmra.mrb[0].mxu0 %v1234
      %v1342 = vpop.f32.mrb[0].mxu0
      %v1343 = vadd.f32 %v1174, %v1342
      %v1344 = vpop.f32.mrb[0].mxu0
      %1345 = vmatprep.mubr.f32.mxu0 0.0
      %1346 = vmatmul.mubr.f32.gmra.mrb[0].mxu0 %v1237
      %v1347 = vpop.f32.mrb[0].mxu0
      %v1348 = vadd.f32 %v1179, %v1347
      %v1349 = vpop.f32.mrb[0].mxu0
      %1350 = vmatprep.mubr.f32.mxu0 0.0
      %1351 = vmatmul.mubr.f32.gmra.mrb[0].mxu0 %v1240
      %v1352 = vpop.f32.mrb[0].mxu0
      %v1353 = vadd.f32 %v1184, %v1352
      %v1354 = vpop.f32.mrb[0].mxu0
      %1355 = vmatprep.mubr.f32.mxu0 0.0
      %1356 = vmatmul.mubr.f32.gmra.mrb[0].mxu0 %v1243
      %v1357 = vpop.f32.mrb[0].mxu0
      %v1358 = vadd.f32 %v1189, %v1357
      %v1359 = vpop.f32.mrb[0].mxu0
      %1360 = vmatprep.mubr.f32.mxu0 0.0
      %1361 = vmatmul.mubr.f32.gmra.mrb[0].mxu0 %v1246
      %v1362 = vpop.f32.mrb[0].mxu0
      %v1363 = vadd.f32 %v1194, %v1362
      %v1364 = vpop.f32.mrb[0].mxu0
      %1365 = vmatprep.mubr.f32.mxu0 0.0
      %1366 = vmatmul.mubr.f32.gmra.mrb[0].mxu0 %v1249
      %v1367 = vpop.f32.mrb[0].mxu0
      %v1368 = vadd.f32 %v1199, %v1367
      %v1369 = vpop.f32.mrb[0].mxu0
      %1370 = vmatprep.mubr.f32.mxu0 0.0
      %1371 = vmatmul.mubr.f32.gmra.mrb[0].mxu0 %v1252
      %v1372 = vpop.f32.mrb[0].mxu0
      %v1373 = vadd.f32 %v1204, %v1372
      %v1374 = vpop.f32.mrb[0].mxu0
      %1375 = vmatprep.mubr.f32.mxu0 0.0
      %1376 = vmatmul.mubr.f32.gmra.mrb[0].mxu0 %v1255
      %v1377 = vpop.f32.mrb[0].mxu0
      %v1378 = vadd.f32 %v1209, %v1377
      %v1379 = vpop.f32.mrb[0].mxu0
      %1380 = vmatprep.mubr.f32.mxu0 0.0
      %1381 = vmatmul.mubr.f32.gmra.mrb[0].mxu0 %v1258
      %v1382 = vpop.f32.mrb[0].mxu0
      %v1383 = vadd.f32 %v1214, %v1382
      %v1384 = vpop.f32.mrb[0].mxu0
      %1385 = vmatprep.mubr.f32.mxu0 0.0
      %1386 = vmatmul.mubr.f32.gmra.mrb[0].mxu0 %v1261
      %v1387 = vpop.f32.mrb[0].mxu0
      %v1388 = vadd.f32 %v1219, %v1387
      %v1389 = vpop.f32.mrb[0].mxu0
      %1390 = vmatprep.mubr.f32.mxu0 0.0
      %1391 = vmatmul.mubr.f32.gmra.mrb[0].mxu0 %v1264
      %v1392 = vpop.f32.mrb[0].mxu0
      %v1393 = vadd.f32 %v1224, %v1392
      %v1394 = vpop.f32.mrb[0].mxu0
      %1395 = vdwg.mxu0
      %v1396 = vld [vmem:[#allocation2 + $0x2] sm:$0xff]
      %v1397 = vld [vmem:[#allocation2 + $0xa] sm:$0xff]
      %v1398 = vld [vmem:[#allocation2 + $0x12] sm:$0xff]
      %v1399 = vld [vmem:[#allocation2 + $0x1a] sm:$0xff]
      %v1400 = vld [vmem:[#allocation2 + $0x22] sm:$0xff]
      %v1401 = vld [vmem:[#allocation2 + $0x2a] sm:$0xff]
      %v1402 = vld [vmem:[#allocation2 + $0x32] sm:$0xff]
      %v1403 = vld [vmem:[#allocation2 + $0x3a] sm:$0xff]
      %v1404 = vld [vmem:[#allocation2 + $0x42] sm:$0xff]
      %v1405 = vld [vmem:[#allocation2 + $0x4a] sm:$0xff]
      %v1406 = vld [vmem:[#allocation2 + $0x52] sm:$0xff]
      %v1407 = vld [vmem:[#allocation2 + $0x5a] sm:$0xff]
      %v1408 = vld [vmem:[#allocation2 + $0x62] sm:$0xff]
      %s1409 = scalar_lea.vmem %s5, 32
      %v1410 = vld [vmem:[%s1409] sm:$0xff]
      %v1411 = vld [vmem:[%s1409 + $0x8] sm:$0xff]
      %v1413 = vsel %vm1010, %v1396, 0
      %v1416 = vsel %vm1010, %v1397, 0
      %v1419 = vsel %vm1010, %v1398, 0
      %v1422 = vsel %vm1010, %v1399, 0
      %v1425 = vsel %vm1010, %v1400, 0
      %v1428 = vsel %vm1010, %v1401, 0
      %v1431 = vsel %vm1010, %v1402, 0
      %v1434 = vsel %vm1010, %v1403, 0
      %v1437 = vsel %vm1010, %v1404, 0
      %v1440 = vsel %vm1010, %v1405, 0
      %v1443 = vsel %vm1010, %v1406, 0
      %v1446 = vsel %vm1010, %v1407, 0
      %v1449 = vsel %vm1010, %v1408, 0
      %1451 = vmatprep.subr.mxu0 0.0
      %1452 = vmatpush1.msra.mxu0 %v1410
      %1453 = vmatprep.subr.mxu0 0.0
      %1454 = vmatpush1.msra.mxu0 %v1411
      %1455 = vmatprep.subr.mxu0 0.0
      %1456 = vmatpush1.msra.mxu0 0.0
      %1457 = vmatprep.subr.mxu0 0.0
      %1458 = vmatpush1.msra.mxu0 0.0
      %1459 = vmatprep.subr.mxu0 0.0
      %1460 = vmatpush1.msra.mxu0 0.0
      %1461 = vmatprep.subr.mxu0 0.0
      %1462 = vmatpush1.msra.mxu0 0.0
      %1463 = vmatprep.subr.mxu0 0.0
      %1464 = vmatpush1.msra.mxu0 0.0
      %1465 = vmatprep.subr.mxu0 0.0
      %1466 = vmatpush1.msra.mxu0 0.0
      %1467 = vmatprep.subr.mxu0 0.0
      %1468 = vmatpush1.msra.mxu0 0.0
      %1469 = vmatprep.subr.mxu0 0.0
      %1470 = vmatpush1.msra.mxu0 0.0
      %1471 = vmatprep.subr.mxu0 0.0
      %1472 = vmatpush1.msra.mxu0 0.0
      %1473 = vmatprep.subr.mxu0 0.0
      %1474 = vmatpush1.msra.mxu0 0.0
      %1475 = vmatprep.subr.mxu0 0.0
      %1476 = vmatpush1.msra.mxu0 0.0
      %1477 = vmatprep.subr.mxu0 0.0
      %1478 = vmatpush1.msra.mxu0 0.0
      %1479 = vmatprep.subr.mxu0 0.0
      %1480 = vmatpush1.msra.mxu0 0.0
      %1481 = vmatprep.subr.mxu0 0.0
      %1482 = vmatpush1.msra.mxu0 0.0
      %1483 = vmatprep.subr.mxu0 0.0
      %1484 = vmatpush1.msra.mxu0 0.0
      %1485 = vmatprep.subr.mxu0 0.0
      %1486 = vmatpush1.msra.mxu0 0.0
      %1487 = vmatprep.subr.mxu0 0.0
      %1488 = vmatpush1.msra.mxu0 0.0
      %1489 = vmatprep.subr.mxu0 0.0
      %1490 = vmatpush1.msra.mxu0 0.0
      %1491 = vmatprep.subr.mxu0 0.0
      %1492 = vmatpush1.msra.mxu0 0.0
      %1493 = vmatprep.subr.mxu0 0.0
      %1494 = vmatpush1.msra.mxu0 0.0
      %1495 = vmatprep.subr.mxu0 0.0
      %1496 = vmatpush1.msra.mxu0 0.0
      %1497 = vmatprep.subr.mxu0 0.0
      %1498 = vmatpush1.msra.mxu0 0.0
      %1499 = vmatprep.subr.mxu0 0.0
      %1500 = vmatpush1.msra.mxu0 0.0
      %1501 = vmatprep.subr.mxu0 0.0
      %1502 = vmatpush1.msra.mxu0 0.0
      %1503 = vmatprep.subr.mxu0 0.0
      %1504 = vmatpush1.msra.mxu0 0.0
      %1505 = vmatprep.subr.mxu0 0.0
      %1506 = vmatpush1.msra.mxu0 0.0
      %1507 = vmatprep.subr.mxu0 0.0
      %1508 = vmatpush1.msra.mxu0 0.0
      %1509 = vmatprep.subr.mxu0 0.0
      %1510 = vmatpush1.msra.mxu0 0.0
      %1511 = vmatprep.subr.mxu0 0.0
      %1512 = vmatpush1.msra.mxu0 0.0
      %1513 = vmatprep.subr.mxu0 0.0
      %1514 = vmatpush1.msra.mxu0 0.0
      %1515 = vmatprep.mubr.f32.mxu0 0.0
      %1516 = vmatmul.mubr.f32.gmra.mrb[0].mxu0 %v1413
      %v1517 = vpop.f32.mrb[0].mxu0
      %v1518 = vadd.f32 0.0, %v1517
      %v1519 = vpop.f32.mrb[0].mxu0
      %1520 = vmatprep.mubr.f32.mxu0 0.0
      %1521 = vmatmul.mubr.f32.gmra.mrb[0].mxu0 %v1416
      %v1522 = vpop.f32.mrb[0].mxu0
      %v1523 = vadd.f32 0.0, %v1522
      %v1524 = vpop.f32.mrb[0].mxu0
      %1525 = vmatprep.mubr.f32.mxu0 0.0
      %1526 = vmatmul.mubr.f32.gmra.mrb[0].mxu0 %v1419
      %v1527 = vpop.f32.mrb[0].mxu0
      %v1528 = vadd.f32 0.0, %v1527
      %v1529 = vpop.f32.mrb[0].mxu0
      %1530 = vmatprep.mubr.f32.mxu0 0.0
      %1531 = vmatmul.mubr.f32.gmra.mrb[0].mxu0 %v1422
      %v1532 = vpop.f32.mrb[0].mxu0
      %v1533 = vadd.f32 0.0, %v1532
      %v1534 = vpop.f32.mrb[0].mxu0
      %1535 = vmatprep.mubr.f32.mxu0 0.0
      %1536 = vmatmul.mubr.f32.gmra.mrb[0].mxu0 %v1425
      %v1537 = vpop.f32.mrb[0].mxu0
      %v1538 = vadd.f32 0.0, %v1537
      %v1539 = vpop.f32.mrb[0].mxu0
      %1540 = vmatprep.mubr.f32.mxu0 0.0
      %1541 = vmatmul.mubr.f32.gmra.mrb[0].mxu0 %v1428
      %v1542 = vpop.f32.mrb[0].mxu0
      %v1543 = vadd.f32 0.0, %v1542
      %v1544 = vpop.f32.mrb[0].mxu0
      %1545 = vmatprep.mubr.f32.mxu0 0.0
      %1546 = vmatmul.mubr.f32.gmra.mrb[0].mxu0 %v1431
      %v1547 = vpop.f32.mrb[0].mxu0
      %v1548 = vadd.f32 0.0, %v1547
      %v1549 = vpop.f32.mrb[0].mxu0
      %1550 = vmatprep.mubr.f32.mxu0 0.0
      %1551 = vmatmul.mubr.f32.gmra.mrb[0].mxu0 %v1434
      %v1552 = vpop.f32.mrb[0].mxu0
      %v1553 = vadd.f32 0.0, %v1552
      %v1554 = vpop.f32.mrb[0].mxu0
      %1555 = vmatprep.mubr.f32.mxu0 0.0
      %1556 = vmatmul.mubr.f32.gmra.mrb[0].mxu0 %v1437
      %v1557 = vpop.f32.mrb[0].mxu0
      %v1558 = vadd.f32 0.0, %v1557
      %v1559 = vpop.f32.mrb[0].mxu0
      %1560 = vmatprep.mubr.f32.mxu0 0.0
      %1561 = vmatmul.mubr.f32.gmra.mrb[0].mxu0 %v1440
      %v1562 = vpop.f32.mrb[0].mxu0
      %v1563 = vadd.f32 0.0, %v1562
      %v1564 = vpop.f32.mrb[0].mxu0
      %1565 = vmatprep.mubr.f32.mxu0 0.0
      %1566 = vmatmul.mubr.f32.gmra.mrb[0].mxu0 %v1443
      %v1567 = vpop.f32.mrb[0].mxu0
      %v1568 = vadd.f32 0.0, %v1567
      %v1569 = vpop.f32.mrb[0].mxu0
      %1570 = vmatprep.mubr.f32.mxu0 0.0
      %1571 = vmatmul.mubr.f32.gmra.mrb[0].mxu0 %v1446
      %v1572 = vpop.f32.mrb[0].mxu0
      %v1573 = vadd.f32 0.0, %v1572
      %v1574 = vpop.f32.mrb[0].mxu0
      %1575 = vmatprep.mubr.f32.mxu0 0.0
      %1576 = vmatmul.mubr.f32.gmra.mrb[0].mxu0 %v1449
      %v1577 = vpop.f32.mrb[0].mxu0
      %v1578 = vadd.f32 0.0, %v1577
      %v1579 = vpop.f32.mrb[0].mxu0
      %1580 = vdwg.mxu0
      %v1581 = vadd.f32 %v1333, %v1518
      %v1582 = vadd.f32 %v1338, %v1523
      %v1583 = vadd.f32 %v1343, %v1528
      %v1584 = vadd.f32 %v1348, %v1533
      %v1585 = vadd.f32 %v1353, %v1538
      %v1586 = vadd.f32 %v1358, %v1543
      %v1587 = vadd.f32 %v1363, %v1548
      %v1588 = vadd.f32 %v1368, %v1553
      %v1589 = vadd.f32 %v1373, %v1558
      %v1590 = vadd.f32 %v1378, %v1563
      %v1591 = vadd.f32 %v1383, %v1568
      %v1592 = vadd.f32 %v1388, %v1573
      %v1593 = vadd.f32 %v1393, %v1578
      %v1594 = vld [vmem:[#allocation2 + $0xa] sm:$0xff]
      %v1595 = vld [vmem:[#allocation2 + $0x12] sm:$0xff]
      %v1596 = vld [vmem:[#allocation2 + $0x1a] sm:$0xff]
      %v1597 = vld [vmem:[#allocation2 + $0x22] sm:$0xff]
      %v1598 = vld [vmem:[#allocation2 + $0x2a] sm:$0xff]
      %v1599 = vld [vmem:[#allocation2 + $0x32] sm:$0xff]
      %v1600 = vld [vmem:[#allocation2 + $0x3a] sm:$0xff]
      %v1601 = vld [vmem:[#allocation2 + $0x42] sm:$0xff]
      %v1602 = vld [vmem:[#allocation2 + $0x4a] sm:$0xff]
      %v1603 = vld [vmem:[#allocation2 + $0x52] sm:$0xff]
      %v1604 = vld [vmem:[#allocation2 + $0x5a] sm:$0xff]
      %v1605 = vld [vmem:[#allocation2 + $0x62] sm:$0xff]
      %v1606 = vld [vmem:[#allocation2 + $0x6a] sm:$0xff]
      %s1607 = scalar_lea.vmem %s5, 48
      %v1608 = vld [vmem:[%s1607] sm:$0xff]
      %v1609 = vld [vmem:[%s1607 + $0x8] sm:$0xff]
      %v1611 = vsel %vm1010, %v1594, 0
      %v1614 = vsel %vm1010, %v1595, 0
      %v1617 = vsel %vm1010, %v1596, 0
      %v1620 = vsel %vm1010, %v1597, 0
      %v1623 = vsel %vm1010, %v1598, 0
      %v1626 = vsel %vm1010, %v1599, 0
      %v1629 = vsel %vm1010, %v1600, 0
      %v1632 = vsel %vm1010, %v1601, 0
      %v1635 = vsel %vm1010, %v1602, 0
      %v1638 = vsel %vm1010, %v1603, 0
      %v1641 = vsel %vm1010, %v1604, 0
      %v1644 = vsel %vm1010, %v1605, 0
      %v1647 = vsel %vm1010, %v1606, 0
      %1649 = vmatprep.subr.mxu0 0.0
      %1650 = vmatpush1.msra.mxu0 %v1608
      %1651 = vmatprep.subr.mxu0 0.0
      %1652 = vmatpush1.msra.mxu0 %v1609
      %1653 = vmatprep.subr.mxu0 0.0
      %1654 = vmatpush1.msra.mxu0 0.0
      %1655 = vmatprep.subr.mxu0 0.0
      %1656 = vmatpush1.msra.mxu0 0.0
      %1657 = vmatprep.subr.mxu0 0.0
      %1658 = vmatpush1.msra.mxu0 0.0
      %1659 = vmatprep.subr.mxu0 0.0
      %1660 = vmatpush1.msra.mxu0 0.0
      %1661 = vmatprep.subr.mxu0 0.0
      %1662 = vmatpush1.msra.mxu0 0.0
      %1663 = vmatprep.subr.mxu0 0.0
      %1664 = vmatpush1.msra.mxu0 0.0
      %1665 = vmatprep.subr.mxu0 0.0
      %1666 = vmatpush1.msra.mxu0 0.0
      %1667 = vmatprep.subr.mxu0 0.0
      %1668 = vmatpush1.msra.mxu0 0.0
      %1669 = vmatprep.subr.mxu0 0.0
      %1670 = vmatpush1.msra.mxu0 0.0
      %1671 = vmatprep.subr.mxu0 0.0
      %1672 = vmatpush1.msra.mxu0 0.0
      %1673 = vmatprep.subr.mxu0 0.0
      %1674 = vmatpush1.msra.mxu0 0.0
      %1675 = vmatprep.subr.mxu0 0.0
      %1676 = vmatpush1.msra.mxu0 0.0
      %1677 = vmatprep.subr.mxu0 0.0
      %1678 = vmatpush1.msra.mxu0 0.0
      %1679 = vmatprep.subr.mxu0 0.0
      %1680 = vmatpush1.msra.mxu0 0.0
      %1681 = vmatprep.subr.mxu0 0.0
      %1682 = vmatpush1.msra.mxu0 0.0
      %1683 = vmatprep.subr.mxu0 0.0
      %1684 = vmatpush1.msra.mxu0 0.0
      %1685 = vmatprep.subr.mxu0 0.0
      %1686 = vmatpush1.msra.mxu0 0.0
      %1687 = vmatprep.subr.mxu0 0.0
      %1688 = vmatpush1.msra.mxu0 0.0
      %1689 = vmatprep.subr.mxu0 0.0
      %1690 = vmatpush1.msra.mxu0 0.0
      %1691 = vmatprep.subr.mxu0 0.0
      %1692 = vmatpush1.msra.mxu0 0.0
      %1693 = vmatprep.subr.mxu0 0.0
      %1694 = vmatpush1.msra.mxu0 0.0
      %1695 = vmatprep.subr.mxu0 0.0
      %1696 = vmatpush1.msra.mxu0 0.0
      %1697 = vmatprep.subr.mxu0 0.0
      %1698 = vmatpush1.msra.mxu0 0.0
      %1699 = vmatprep.subr.mxu0 0.0
      %1700 = vmatpush1.msra.mxu0 0.0
      %1701 = vmatprep.subr.mxu0 0.0
      %1702 = vmatpush1.msra.mxu0 0.0
      %1703 = vmatprep.subr.mxu0 0.0
      %1704 = vmatpush1.msra.mxu0 0.0
      %1705 = vmatprep.subr.mxu0 0.0
      %1706 = vmatpush1.msra.mxu0 0.0
      %1707 = vmatprep.subr.mxu0 0.0
      %1708 = vmatpush1.msra.mxu0 0.0
      %1709 = vmatprep.subr.mxu0 0.0
      %1710 = vmatpush1.msra.mxu0 0.0
      %1711 = vmatprep.subr.mxu0 0.0
      %1712 = vmatpush1.msra.mxu0 0.0
      %1713 = vmatprep.mubr.f32.mxu0 0.0
      %1714 = vmatmul.mubr.f32.gmra.mrb[0].mxu0 %v1611
      %v1715 = vpop.f32.mrb[0].mxu0
      %v1716 = vadd.f32 0.0, %v1715
      %v1717 = vpop.f32.mrb[0].mxu0
      %1718 = vmatprep.mubr.f32.mxu0 0.0
      %1719 = vmatmul.mubr.f32.gmra.mrb[0].mxu0 %v1614
      %v1720 = vpop.f32.mrb[0].mxu0
      %v1721 = vadd.f32 0.0, %v1720
      %v1722 = vpop.f32.mrb[0].mxu0
      %1723 = vmatprep.mubr.f32.mxu0 0.0
      %1724 = vmatmul.mubr.f32.gmra.mrb[0].mxu0 %v1617
      %v1725 = vpop.f32.mrb[0].mxu0
      %v1726 = vadd.f32 0.0, %v1725
      %v1727 = vpop.f32.mrb[0].mxu0
      %1728 = vmatprep.mubr.f32.mxu0 0.0
      %1729 = vmatmul.mubr.f32.gmra.mrb[0].mxu0 %v1620
      %v1730 = vpop.f32.mrb[0].mxu0
      %v1731 = vadd.f32 0.0, %v1730
      %v1732 = vpop.f32.mrb[0].mxu0
      %1733 = vmatprep.mubr.f32.mxu0 0.0
      %1734 = vmatmul.mubr.f32.gmra.mrb[0].mxu0 %v1623
      %v1735 = vpop.f32.mrb[0].mxu0
      %v1736 = vadd.f32 0.0, %v1735
      %v1737 = vpop.f32.mrb[0].mxu0
      %1738 = vmatprep.mubr.f32.mxu0 0.0
      %1739 = vmatmul.mubr.f32.gmra.mrb[0].mxu0 %v1626
      %v1740 = vpop.f32.mrb[0].mxu0
      %v1741 = vadd.f32 0.0, %v1740
      %v1742 = vpop.f32.mrb[0].mxu0
      %1743 = vmatprep.mubr.f32.mxu0 0.0
      %1744 = vmatmul.mubr.f32.gmra.mrb[0].mxu0 %v1629
      %v1745 = vpop.f32.mrb[0].mxu0
      %v1746 = vadd.f32 0.0, %v1745
      %v1747 = vpop.f32.mrb[0].mxu0
      %1748 = vmatprep.mubr.f32.mxu0 0.0
      %1749 = vmatmul.mubr.f32.gmra.mrb[0].mxu0 %v1632
      %v1750 = vpop.f32.mrb[0].mxu0
      %v1751 = vadd.f32 0.0, %v1750
      %v1752 = vpop.f32.mrb[0].mxu0
      %1753 = vmatprep.mubr.f32.mxu0 0.0
      %1754 = vmatmul.mubr.f32.gmra.mrb[0].mxu0 %v1635
      %v1755 = vpop.f32.mrb[0].mxu0
      %v1756 = vadd.f32 0.0, %v1755
      %v1757 = vpop.f32.mrb[0].mxu0
      %1758 = vmatprep.mubr.f32.mxu0 0.0
      %1759 = vmatmul.mubr.f32.gmra.mrb[0].mxu0 %v1638
      %v1760 = vpop.f32.mrb[0].mxu0
      %v1761 = vadd.f32 0.0, %v1760
      %v1762 = vpop.f32.mrb[0].mxu0
      %1763 = vmatprep.mubr.f32.mxu0 0.0
      %1764 = vmatmul.mubr.f32.gmra.mrb[0].mxu0 %v1641
      %v1765 = vpop.f32.mrb[0].mxu0
      %v1766 = vadd.f32 0.0, %v1765
      %v1767 = vpop.f32.mrb[0].mxu0
      %1768 = vmatprep.mubr.f32.mxu0 0.0
      %1769 = vmatmul.mubr.f32.gmra.mrb[0].mxu0 %v1644
      %v1770 = vpop.f32.mrb[0].mxu0
      %v1771 = vadd.f32 0.0, %v1770
      %v1772 = vpop.f32.mrb[0].mxu0
      %1773 = vmatprep.mubr.f32.mxu0 0.0
      %1774 = vmatmul.mubr.f32.gmra.mrb[0].mxu0 %v1647
      %v1775 = vpop.f32.mrb[0].mxu0
      %v1776 = vadd.f32 0.0, %v1775
      %v1777 = vpop.f32.mrb[0].mxu0
      %1778 = vdwg.mxu0
      %v1779 = vadd.f32 %v1581, %v1716
      %v1780 = vadd.f32 %v1582, %v1721
      %v1781 = vadd.f32 %v1583, %v1726
      %v1782 = vadd.f32 %v1584, %v1731
      %v1783 = vadd.f32 %v1585, %v1736
      %v1784 = vadd.f32 %v1586, %v1741
      %v1785 = vadd.f32 %v1587, %v1746
      %v1786 = vadd.f32 %v1588, %v1751
      %v1787 = vadd.f32 %v1589, %v1756
      %v1788 = vadd.f32 %v1590, %v1761
      %v1789 = vadd.f32 %v1591, %v1766
      %v1790 = vadd.f32 %v1592, %v1771
      %v1791 = vadd.f32 %v1593, %v1776
      %v1792 = vld [vmem:[#allocation2 + $0xb] sm:$0xff]
      %v1793 = vld [vmem:[#allocation2 + $0x13] sm:$0xff]
      %v1794 = vld [vmem:[#allocation2 + $0x1b] sm:$0xff]
      %v1795 = vld [vmem:[#allocation2 + $0x23] sm:$0xff]
      %v1796 = vld [vmem:[#allocation2 + $0x2b] sm:$0xff]
      %v1797 = vld [vmem:[#allocation2 + $0x33] sm:$0xff]
      %v1798 = vld [vmem:[#allocation2 + $0x3b] sm:$0xff]
      %v1799 = vld [vmem:[#allocation2 + $0x43] sm:$0xff]
      %v1800 = vld [vmem:[#allocation2 + $0x4b] sm:$0xff]
      %v1801 = vld [vmem:[#allocation2 + $0x53] sm:$0xff]
      %v1802 = vld [vmem:[#allocation2 + $0x5b] sm:$0xff]
      %v1803 = vld [vmem:[#allocation2 + $0x63] sm:$0xff]
      %v1804 = vld [vmem:[#allocation2 + $0x6b] sm:$0xff]
      %s1805 = scalar_lea.vmem %s5, 64
      %v1806 = vld [vmem:[%s1805] sm:$0xff]
      %v1807 = vld [vmem:[%s1805 + $0x8] sm:$0xff]
      %v1809 = vsel %vm1010, %v1792, 0
      %v1812 = vsel %vm1010, %v1793, 0
      %v1815 = vsel %vm1010, %v1794, 0
      %v1818 = vsel %vm1010, %v1795, 0
      %v1821 = vsel %vm1010, %v1796, 0
      %v1824 = vsel %vm1010, %v1797, 0
      %v1827 = vsel %vm1010, %v1798, 0
      %v1830 = vsel %vm1010, %v1799, 0
      %v1833 = vsel %vm1010, %v1800, 0
      %v1836 = vsel %vm1010, %v1801, 0
      %v1839 = vsel %vm1010, %v1802, 0
      %v1842 = vsel %vm1010, %v1803, 0
      %v1845 = vsel %vm1010, %v1804, 0
      %1847 = vmatprep.subr.mxu0 0.0
      %1848 = vmatpush1.msra.mxu0 %v1806
      %1849 = vmatprep.subr.mxu0 0.0
      %1850 = vmatpush1.msra.mxu0 %v1807
      %1851 = vmatprep.subr.mxu0 0.0
      %1852 = vmatpush1.msra.mxu0 0.0
      %1853 = vmatprep.subr.mxu0 0.0
      %1854 = vmatpush1.msra.mxu0 0.0
      %1855 = vmatprep.subr.mxu0 0.0
      %1856 = vmatpush1.msra.mxu0 0.0
      %1857 = vmatprep.subr.mxu0 0.0
      %1858 = vmatpush1.msra.mxu0 0.0
      %1859 = vmatprep.subr.mxu0 0.0
      %1860 = vmatpush1.msra.mxu0 0.0
      %1861 = vmatprep.subr.mxu0 0.0
      %1862 = vmatpush1.msra.mxu0 0.0
      %1863 = vmatprep.subr.mxu0 0.0
      %1864 = vmatpush1.msra.mxu0 0.0
      %1865 = vmatprep.subr.mxu0 0.0
      %1866 = vmatpush1.msra.mxu0 0.0
      %1867 = vmatprep.subr.mxu0 0.0
      %1868 = vmatpush1.msra.mxu0 0.0
      %1869 = vmatprep.subr.mxu0 0.0
      %1870 = vmatpush1.msra.mxu0 0.0
      %1871 = vmatprep.subr.mxu0 0.0
      %1872 = vmatpush1.msra.mxu0 0.0
      %1873 = vmatprep.subr.mxu0 0.0
      %1874 = vmatpush1.msra.mxu0 0.0
      %1875 = vmatprep.subr.mxu0 0.0
      %1876 = vmatpush1.msra.mxu0 0.0
      %1877 = vmatprep.subr.mxu0 0.0
      %1878 = vmatpush1.msra.mxu0 0.0
      %1879 = vmatprep.subr.mxu0 0.0
      %1880 = vmatpush1.msra.mxu0 0.0
      %1881 = vmatprep.subr.mxu0 0.0
      %1882 = vmatpush1.msra.mxu0 0.0
      %1883 = vmatprep.subr.mxu0 0.0
      %1884 = vmatpush1.msra.mxu0 0.0
      %1885 = vmatprep.subr.mxu0 0.0
      %1886 = vmatpush1.msra.mxu0 0.0
      %1887 = vmatprep.subr.mxu0 0.0
      %1888 = vmatpush1.msra.mxu0 0.0
      %1889 = vmatprep.subr.mxu0 0.0
      %1890 = vmatpush1.msra.mxu0 0.0
      %1891 = vmatprep.subr.mxu0 0.0
      %1892 = vmatpush1.msra.mxu0 0.0
      %1893 = vmatprep.subr.mxu0 0.0
      %1894 = vmatpush1.msra.mxu0 0.0
      %1895 = vmatprep.subr.mxu0 0.0
      %1896 = vmatpush1.msra.mxu0 0.0
      %1897 = vmatprep.subr.mxu0 0.0
      %1898 = vmatpush1.msra.mxu0 0.0
      %1899 = vmatprep.subr.mxu0 0.0
      %1900 = vmatpush1.msra.mxu0 0.0
      %1901 = vmatprep.subr.mxu0 0.0
      %1902 = vmatpush1.msra.mxu0 0.0
      %1903 = vmatprep.subr.mxu0 0.0
      %1904 = vmatpush1.msra.mxu0 0.0
      %1905 = vmatprep.subr.mxu0 0.0
      %1906 = vmatpush1.msra.mxu0 0.0
      %1907 = vmatprep.subr.mxu0 0.0
      %1908 = vmatpush1.msra.mxu0 0.0
      %1909 = vmatprep.subr.mxu0 0.0
      %1910 = vmatpush1.msra.mxu0 0.0
      %1911 = vmatprep.mubr.f32.mxu0 0.0
      %1912 = vmatmul.mubr.f32.gmra.mrb[0].mxu0 %v1809
      %v1913 = vpop.f32.mrb[0].mxu0
      %v1914 = vadd.f32 0.0, %v1913
      %v1915 = vpop.f32.mrb[0].mxu0
      %1916 = vmatprep.mubr.f32.mxu0 0.0
      %1917 = vmatmul.mubr.f32.gmra.mrb[0].mxu0 %v1812
      %v1918 = vpop.f32.mrb[0].mxu0
      %v1919 = vadd.f32 0.0, %v1918
      %v1920 = vpop.f32.mrb[0].mxu0
      %1921 = vmatprep.mubr.f32.mxu0 0.0
      %1922 = vmatmul.mubr.f32.gmra.mrb[0].mxu0 %v1815
      %v1923 = vpop.f32.mrb[0].mxu0
      %v1924 = vadd.f32 0.0, %v1923
      %v1925 = vpop.f32.mrb[0].mxu0
      %1926 = vmatprep.mubr.f32.mxu0 0.0
      %1927 = vmatmul.mubr.f32.gmra.mrb[0].mxu0 %v1818
      %v1928 = vpop.f32.mrb[0].mxu0
      %v1929 = vadd.f32 0.0, %v1928
      %v1930 = vpop.f32.mrb[0].mxu0
      %1931 = vmatprep.mubr.f32.mxu0 0.0
      %1932 = vmatmul.mubr.f32.gmra.mrb[0].mxu0 %v1821
      %v1933 = vpop.f32.mrb[0].mxu0
      %v1934 = vadd.f32 0.0, %v1933
      %v1935 = vpop.f32.mrb[0].mxu0
      %1936 = vmatprep.mubr.f32.mxu0 0.0
      %1937 = vmatmul.mubr.f32.gmra.mrb[0].mxu0 %v1824
      %v1938 = vpop.f32.mrb[0].mxu0
      %v1939 = vadd.f32 0.0, %v1938
      %v1940 = vpop.f32.mrb[0].mxu0
      %1941 = vmatprep.mubr.f32.mxu0 0.0
      %1942 = vmatmul.mubr.f32.gmra.mrb[0].mxu0 %v1827
      %v1943 = vpop.f32.mrb[0].mxu0
      %v1944 = vadd.f32 0.0, %v1943
      %v1945 = vpop.f32.mrb[0].mxu0
      %1946 = vmatprep.mubr.f32.mxu0 0.0
      %1947 = vmatmul.mubr.f32.gmra.mrb[0].mxu0 %v1830
      %v1948 = vpop.f32.mrb[0].mxu0
      %v1949 = vadd.f32 0.0, %v1948
      %v1950 = vpop.f32.mrb[0].mxu0
      %1951 = vmatprep.mubr.f32.mxu0 0.0
      %1952 = vmatmul.mubr.f32.gmra.mrb[0].mxu0 %v1833
      %v1953 = vpop.f32.mrb[0].mxu0
      %v1954 = vadd.f32 0.0, %v1953
      %v1955 = vpop.f32.mrb[0].mxu0
      %1956 = vmatprep.mubr.f32.mxu0 0.0
      %1957 = vmatmul.mubr.f32.gmra.mrb[0].mxu0 %v1836
      %v1958 = vpop.f32.mrb[0].mxu0
      %v1959 = vadd.f32 0.0, %v1958
      %v1960 = vpop.f32.mrb[0].mxu0
      %1961 = vmatprep.mubr.f32.mxu0 0.0
      %1962 = vmatmul.mubr.f32.gmra.mrb[0].mxu0 %v1839
      %v1963 = vpop.f32.mrb[0].mxu0
      %v1964 = vadd.f32 0.0, %v1963
      %v1965 = vpop.f32.mrb[0].mxu0
      %1966 = vmatprep.mubr.f32.mxu0 0.0
      %1967 = vmatmul.mubr.f32.gmra.mrb[0].mxu0 %v1842
      %v1968 = vpop.f32.mrb[0].mxu0
      %v1969 = vadd.f32 0.0, %v1968
      %v1970 = vpop.f32.mrb[0].mxu0
      %1971 = vmatprep.mubr.f32.mxu0 0.0
      %1972 = vmatmul.mubr.f32.gmra.mrb[0].mxu0 %v1845
      %v1973 = vpop.f32.mrb[0].mxu0
      %v1974 = vadd.f32 0.0, %v1973
      %v1975 = vpop.f32.mrb[0].mxu0
      %1976 = vdwg.mxu0
      %v1977 = vadd.f32 %v1779, %v1914
      %v1978 = vadd.f32 %v1780, %v1919
      %v1979 = vadd.f32 %v1781, %v1924
      %v1980 = vadd.f32 %v1782, %v1929
      %v1981 = vadd.f32 %v1783, %v1934
      %v1982 = vadd.f32 %v1784, %v1939
      %v1983 = vadd.f32 %v1785, %v1944
      %v1984 = vadd.f32 %v1786, %v1949
      %v1985 = vadd.f32 %v1787, %v1954
      %v1986 = vadd.f32 %v1788, %v1959
      %v1987 = vadd.f32 %v1789, %v1964
      %v1988 = vadd.f32 %v1790, %v1969
      %v1989 = vadd.f32 %v1791, %v1974
      %v1990 = vld [vmem:[#allocation2 + $0xc] sm:$0xff]
      %v1991 = vld [vmem:[#allocation2 + $0x14] sm:$0xff]
      %v1992 = vld [vmem:[#allocation2 + $0x1c] sm:$0xff]
      %v1993 = vld [vmem:[#allocation2 + $0x24] sm:$0xff]
      %v1994 = vld [vmem:[#allocation2 + $0x2c] sm:$0xff]
      %v1995 = vld [vmem:[#allocation2 + $0x34] sm:$0xff]
      %v1996 = vld [vmem:[#allocation2 + $0x3c] sm:$0xff]
      %v1997 = vld [vmem:[#allocation2 + $0x44] sm:$0xff]
      %v1998 = vld [vmem:[#allocation2 + $0x4c] sm:$0xff]
      %v1999 = vld [vmem:[#allocation2 + $0x54] sm:$0xff]
      %v2000 = vld [vmem:[#allocation2 + $0x5c] sm:$0xff]
      %v2001 = vld [vmem:[#allocation2 + $0x64] sm:$0xff]
      %v2002 = vld [vmem:[#allocation2 + $0x6c] sm:$0xff]
      %s2003 = scalar_lea.vmem %s5, 80
      %v2004 = vld [vmem:[%s2003] sm:$0xff]
      %v2005 = vld [vmem:[%s2003 + $0x8] sm:$0xff]
      %v2007 = vsel %vm1010, %v1990, 0
      %v2010 = vsel %vm1010, %v1991, 0
      %v2013 = vsel %vm1010, %v1992, 0
      %v2016 = vsel %vm1010, %v1993, 0
      %v2019 = vsel %vm1010, %v1994, 0
      %v2022 = vsel %vm1010, %v1995, 0
      %v2025 = vsel %vm1010, %v1996, 0
      %v2028 = vsel %vm1010, %v1997, 0
      %v2031 = vsel %vm1010, %v1998, 0
      %v2034 = vsel %vm1010, %v1999, 0
      %v2037 = vsel %vm1010, %v2000, 0
      %v2040 = vsel %vm1010, %v2001, 0
      %v2043 = vsel %vm1010, %v2002, 0
      %2045 = vmatprep.subr.mxu0 0.0
      %2046 = vmatpush1.msra.mxu0 %v2004
      %2047 = vmatprep.subr.mxu0 0.0
      %2048 = vmatpush1.msra.mxu0 %v2005
      %2049 = vmatprep.subr.mxu0 0.0
      %2050 = vmatpush1.msra.mxu0 0.0
      %2051 = vmatprep.subr.mxu0 0.0
      %2052 = vmatpush1.msra.mxu0 0.0
      %2053 = vmatprep.subr.mxu0 0.0
      %2054 = vmatpush1.msra.mxu0 0.0
      %2055 = vmatprep.subr.mxu0 0.0
      %2056 = vmatpush1.msra.mxu0 0.0
      %2057 = vmatprep.subr.mxu0 0.0
      %2058 = vmatpush1.msra.mxu0 0.0
      %2059 = vmatprep.subr.mxu0 0.0
      %2060 = vmatpush1.msra.mxu0 0.0
      %2061 = vmatprep.subr.mxu0 0.0
      %2062 = vmatpush1.msra.mxu0 0.0
      %2063 = vmatprep.subr.mxu0 0.0
      %2064 = vmatpush1.msra.mxu0 0.0
      %2065 = vmatprep.subr.mxu0 0.0
      %2066 = vmatpush1.msra.mxu0 0.0
      %2067 = vmatprep.subr.mxu0 0.0
      %2068 = vmatpush1.msra.mxu0 0.0
      %2069 = vmatprep.subr.mxu0 0.0
      %2070 = vmatpush1.msra.mxu0 0.0
      %2071 = vmatprep.subr.mxu0 0.0
      %2072 = vmatpush1.msra.mxu0 0.0
      %2073 = vmatprep.subr.mxu0 0.0
      %2074 = vmatpush1.msra.mxu0 0.0
      %2075 = vmatprep.subr.mxu0 0.0
      %2076 = vmatpush1.msra.mxu0 0.0
      %2077 = vmatprep.subr.mxu0 0.0
      %2078 = vmatpush1.msra.mxu0 0.0
      %2079 = vmatprep.subr.mxu0 0.0
      %2080 = vmatpush1.msra.mxu0 0.0
      %2081 = vmatprep.subr.mxu0 0.0
      %2082 = vmatpush1.msra.mxu0 0.0
      %2083 = vmatprep.subr.mxu0 0.0
      %2084 = vmatpush1.msra.mxu0 0.0
      %2085 = vmatprep.subr.mxu0 0.0
      %2086 = vmatpush1.msra.mxu0 0.0
      %2087 = vmatprep.subr.mxu0 0.0
      %2088 = vmatpush1.msra.mxu0 0.0
      %2089 = vmatprep.subr.mxu0 0.0
      %2090 = vmatpush1.msra.mxu0 0.0
      %2091 = vmatprep.subr.mxu0 0.0
      %2092 = vmatpush1.msra.mxu0 0.0
      %2093 = vmatprep.subr.mxu0 0.0
      %2094 = vmatpush1.msra.mxu0 0.0
      %2095 = vmatprep.subr.mxu0 0.0
      %2096 = vmatpush1.msra.mxu0 0.0
      %2097 = vmatprep.subr.mxu0 0.0
      %2098 = vmatpush1.msra.mxu0 0.0
      %2099 = vmatprep.subr.mxu0 0.0
      %2100 = vmatpush1.msra.mxu0 0.0
      %2101 = vmatprep.subr.mxu0 0.0
      %2102 = vmatpush1.msra.mxu0 0.0
      %2103 = vmatprep.subr.mxu0 0.0
      %2104 = vmatpush1.msra.mxu0 0.0
      %2105 = vmatprep.subr.mxu0 0.0
      %2106 = vmatpush1.msra.mxu0 0.0
      %2107 = vmatprep.subr.mxu0 0.0
      %2108 = vmatpush1.msra.mxu0 0.0
      %2109 = vmatprep.mubr.f32.mxu0 0.0
      %2110 = vmatmul.mubr.f32.gmra.mrb[0].mxu0 %v2007
      %v2111 = vpop.f32.mrb[0].mxu0
      %v2112 = vadd.f32 0.0, %v2111
      %v2113 = vpop.f32.mrb[0].mxu0
      %2114 = vmatprep.mubr.f32.mxu0 0.0
      %2115 = vmatmul.mubr.f32.gmra.mrb[0].mxu0 %v2010
      %v2116 = vpop.f32.mrb[0].mxu0
      %v2117 = vadd.f32 0.0, %v2116
      %v2118 = vpop.f32.mrb[0].mxu0
      %2119 = vmatprep.mubr.f32.mxu0 0.0
      %2120 = vmatmul.mubr.f32.gmra.mrb[0].mxu0 %v2013
      %v2121 = vpop.f32.mrb[0].mxu0
      %v2122 = vadd.f32 0.0, %v2121
      %v2123 = vpop.f32.mrb[0].mxu0
      %2124 = vmatprep.mubr.f32.mxu0 0.0
      %2125 = vmatmul.mubr.f32.gmra.mrb[0].mxu0 %v2016
      %v2126 = vpop.f32.mrb[0].mxu0
      %v2127 = vadd.f32 0.0, %v2126
      %v2128 = vpop.f32.mrb[0].mxu0
      %2129 = vmatprep.mubr.f32.mxu0 0.0
      %2130 = vmatmul.mubr.f32.gmra.mrb[0].mxu0 %v2019
      %v2131 = vpop.f32.mrb[0].mxu0
      %v2132 = vadd.f32 0.0, %v2131
      %v2133 = vpop.f32.mrb[0].mxu0
      %2134 = vmatprep.mubr.f32.mxu0 0.0
      %2135 = vmatmul.mubr.f32.gmra.mrb[0].mxu0 %v2022
      %v2136 = vpop.f32.mrb[0].mxu0
      %v2137 = vadd.f32 0.0, %v2136
      %v2138 = vpop.f32.mrb[0].mxu0
      %2139 = vmatprep.mubr.f32.mxu0 0.0
      %2140 = vmatmul.mubr.f32.gmra.mrb[0].mxu0 %v2025
      %v2141 = vpop.f32.mrb[0].mxu0
      %v2142 = vadd.f32 0.0, %v2141
      %v2143 = vpop.f32.mrb[0].mxu0
      %2144 = vmatprep.mubr.f32.mxu0 0.0
      %2145 = vmatmul.mubr.f32.gmra.mrb[0].mxu0 %v2028
      %v2146 = vpop.f32.mrb[0].mxu0
      %v2147 = vadd.f32 0.0, %v2146
      %v2148 = vpop.f32.mrb[0].mxu0
      %2149 = vmatprep.mubr.f32.mxu0 0.0
      %2150 = vmatmul.mubr.f32.gmra.mrb[0].mxu0 %v2031
      %v2151 = vpop.f32.mrb[0].mxu0
      %v2152 = vadd.f32 0.0, %v2151
      %v2153 = vpop.f32.mrb[0].mxu0
      %2154 = vmatprep.mubr.f32.mxu0 0.0
      %2155 = vmatmul.mubr.f32.gmra.mrb[0].mxu0 %v2034
      %v2156 = vpop.f32.mrb[0].mxu0
      %v2157 = vadd.f32 0.0, %v2156
      %v2158 = vpop.f32.mrb[0].mxu0
      %2159 = vmatprep.mubr.f32.mxu0 0.0
      %2160 = vmatmul.mubr.f32.gmra.mrb[0].mxu0 %v2037
      %v2161 = vpop.f32.mrb[0].mxu0
      %v2162 = vadd.f32 0.0, %v2161
      %v2163 = vpop.f32.mrb[0].mxu0
      %2164 = vmatprep.mubr.f32.mxu0 0.0
      %2165 = vmatmul.mubr.f32.gmra.mrb[0].mxu0 %v2040
      %v2166 = vpop.f32.mrb[0].mxu0
      %v2167 = vadd.f32 0.0, %v2166
      %v2168 = vpop.f32.mrb[0].mxu0
      %2169 = vmatprep.mubr.f32.mxu0 0.0
      %2170 = vmatmul.mubr.f32.gmra.mrb[0].mxu0 %v2043
      %v2171 = vpop.f32.mrb[0].mxu0
      %v2172 = vadd.f32 0.0, %v2171
      %v2173 = vpop.f32.mrb[0].mxu0
      %2174 = vdwg.mxu0
      %v2175 = vadd.f32 %v1977, %v2112
      %v2176 = vadd.f32 %v1978, %v2117
      %v2177 = vadd.f32 %v1979, %v2122
      %v2178 = vadd.f32 %v1980, %v2127
      %v2179 = vadd.f32 %v1981, %v2132
      %v2180 = vadd.f32 %v1982, %v2137
      %v2181 = vadd.f32 %v1983, %v2142
      %v2182 = vadd.f32 %v1984, %v2147
      %v2183 = vadd.f32 %v1985, %v2152
      %v2184 = vadd.f32 %v1986, %v2157
      %v2185 = vadd.f32 %v1987, %v2162
      %v2186 = vadd.f32 %v1988, %v2167
      %v2187 = vadd.f32 %v1989, %v2172
      %v2188 = vld [vmem:[#allocation2 + $0x14] sm:$0xff]
      %v2189 = vld [vmem:[#allocation2 + $0x1c] sm:$0xff]
      %v2190 = vld [vmem:[#allocation2 + $0x24] sm:$0xff]
      %v2191 = vld [vmem:[#allocation2 + $0x2c] sm:$0xff]
      %v2192 = vld [vmem:[#allocation2 + $0x34] sm:$0xff]
      %v2193 = vld [vmem:[#allocation2 + $0x3c] sm:$0xff]
      %v2194 = vld [vmem:[#allocation2 + $0x44] sm:$0xff]
      %v2195 = vld [vmem:[#allocation2 + $0x4c] sm:$0xff]
      %v2196 = vld [vmem:[#allocation2 + $0x54] sm:$0xff]
      %v2197 = vld [vmem:[#allocation2 + $0x5c] sm:$0xff]
      %v2198 = vld [vmem:[#allocation2 + $0x64] sm:$0xff]
      %v2199 = vld [vmem:[#allocation2 + $0x6c] sm:$0xff]
      %v2200 = vld [vmem:[#allocation2 + $0x74] sm:$0xff]
      %s2201 = scalar_lea.vmem %s5, 96
      %v2202 = vld [vmem:[%s2201] sm:$0xff]
      %v2203 = vld [vmem:[%s2201 + $0x8] sm:$0xff]
      %v2205 = vsel %vm1010, %v2188, 0
      %v2208 = vsel %vm1010, %v2189, 0
      %v2211 = vsel %vm1010, %v2190, 0
      %v2214 = vsel %vm1010, %v2191, 0
      %v2217 = vsel %vm1010, %v2192, 0
      %v2220 = vsel %vm1010, %v2193, 0
      %v2223 = vsel %vm1010, %v2194, 0
      %v2226 = vsel %vm1010, %v2195, 0
      %v2229 = vsel %vm1010, %v2196, 0
      %v2232 = vsel %vm1010, %v2197, 0
      %v2235 = vsel %vm1010, %v2198, 0
      %v2238 = vsel %vm1010, %v2199, 0
      %v2241 = vsel %vm1010, %v2200, 0
      %2243 = vmatprep.subr.mxu0 0.0
      %2244 = vmatpush1.msra.mxu0 %v2202
      %2245 = vmatprep.subr.mxu0 0.0
      %2246 = vmatpush1.msra.mxu0 %v2203
      %2247 = vmatprep.subr.mxu0 0.0
      %2248 = vmatpush1.msra.mxu0 0.0
      %2249 = vmatprep.subr.mxu0 0.0
      %2250 = vmatpush1.msra.mxu0 0.0
      %2251 = vmatprep.subr.mxu0 0.0
      %2252 = vmatpush1.msra.mxu0 0.0
      %2253 = vmatprep.subr.mxu0 0.0
      %2254 = vmatpush1.msra.mxu0 0.0
      %2255 = vmatprep.subr.mxu0 0.0
      %2256 = vmatpush1.msra.mxu0 0.0
      %2257 = vmatprep.subr.mxu0 0.0
      %2258 = vmatpush1.msra.mxu0 0.0
      %2259 = vmatprep.subr.mxu0 0.0
      %2260 = vmatpush1.msra.mxu0 0.0
      %2261 = vmatprep.subr.mxu0 0.0
      %2262 = vmatpush1.msra.mxu0 0.0
      %2263 = vmatprep.subr.mxu0 0.0
      %2264 = vmatpush1.msra.mxu0 0.0
      %2265 = vmatprep.subr.mxu0 0.0
      %2266 = vmatpush1.msra.mxu0 0.0
      %2267 = vmatprep.subr.mxu0 0.0
      %2268 = vmatpush1.msra.mxu0 0.0
      %2269 = vmatprep.subr.mxu0 0.0
      %2270 = vmatpush1.msra.mxu0 0.0
      %2271 = vmatprep.subr.mxu0 0.0
      %2272 = vmatpush1.msra.mxu0 0.0
      %2273 = vmatprep.subr.mxu0 0.0
      %2274 = vmatpush1.msra.mxu0 0.0
      %2275 = vmatprep.subr.mxu0 0.0
      %2276 = vmatpush1.msra.mxu0 0.0
      %2277 = vmatprep.subr.mxu0 0.0
      %2278 = vmatpush1.msra.mxu0 0.0
      %2279 = vmatprep.subr.mxu0 0.0
      %2280 = vmatpush1.msra.mxu0 0.0
      %2281 = vmatprep.subr.mxu0 0.0
      %2282 = vmatpush1.msra.mxu0 0.0
      %2283 = vmatprep.subr.mxu0 0.0
      %2284 = vmatpush1.msra.mxu0 0.0
      %2285 = vmatprep.subr.mxu0 0.0
      %2286 = vmatpush1.msra.mxu0 0.0
      %2287 = vmatprep.subr.mxu0 0.0
      %2288 = vmatpush1.msra.mxu0 0.0
      %2289 = vmatprep.subr.mxu0 0.0
      %2290 = vmatpush1.msra.mxu0 0.0
      %2291 = vmatprep.subr.mxu0 0.0
      %2292 = vmatpush1.msra.mxu0 0.0
      %2293 = vmatprep.subr.mxu0 0.0
      %2294 = vmatpush1.msra.mxu0 0.0
      %2295 = vmatprep.subr.mxu0 0.0
      %2296 = vmatpush1.msra.mxu0 0.0
      %2297 = vmatprep.subr.mxu0 0.0
      %2298 = vmatpush1.msra.mxu0 0.0
      %2299 = vmatprep.subr.mxu0 0.0
      %2300 = vmatpush1.msra.mxu0 0.0
      %2301 = vmatprep.subr.mxu0 0.0
      %2302 = vmatpush1.msra.mxu0 0.0
      %2303 = vmatprep.subr.mxu0 0.0
      %2304 = vmatpush1.msra.mxu0 0.0
      %2305 = vmatprep.subr.mxu0 0.0
      %2306 = vmatpush1.msra.mxu0 0.0
      %2307 = vmatprep.mubr.f32.mxu0 0.0
      %2308 = vmatmul.mubr.f32.gmra.mrb[0].mxu0 %v2205
      %v2309 = vpop.f32.mrb[0].mxu0
      %v2310 = vadd.f32 0.0, %v2309
      %v2311 = vpop.f32.mrb[0].mxu0
      %2312 = vmatprep.mubr.f32.mxu0 0.0
      %2313 = vmatmul.mubr.f32.gmra.mrb[0].mxu0 %v2208
      %v2314 = vpop.f32.mrb[0].mxu0
      %v2315 = vadd.f32 0.0, %v2314
      %v2316 = vpop.f32.mrb[0].mxu0
      %2317 = vmatprep.mubr.f32.mxu0 0.0
      %2318 = vmatmul.mubr.f32.gmra.mrb[0].mxu0 %v2211
      %v2319 = vpop.f32.mrb[0].mxu0
      %v2320 = vadd.f32 0.0, %v2319
      %v2321 = vpop.f32.mrb[0].mxu0
      %2322 = vmatprep.mubr.f32.mxu0 0.0
      %2323 = vmatmul.mubr.f32.gmra.mrb[0].mxu0 %v2214
      %v2324 = vpop.f32.mrb[0].mxu0
      %v2325 = vadd.f32 0.0, %v2324
      %v2326 = vpop.f32.mrb[0].mxu0
      %2327 = vmatprep.mubr.f32.mxu0 0.0
      %2328 = vmatmul.mubr.f32.gmra.mrb[0].mxu0 %v2217
      %v2329 = vpop.f32.mrb[0].mxu0
      %v2330 = vadd.f32 0.0, %v2329
      %v2331 = vpop.f32.mrb[0].mxu0
      %2332 = vmatprep.mubr.f32.mxu0 0.0
      %2333 = vmatmul.mubr.f32.gmra.mrb[0].mxu0 %v2220
      %v2334 = vpop.f32.mrb[0].mxu0
      %v2335 = vadd.f32 0.0, %v2334
      %v2336 = vpop.f32.mrb[0].mxu0
      %2337 = vmatprep.mubr.f32.mxu0 0.0
      %2338 = vmatmul.mubr.f32.gmra.mrb[0].mxu0 %v2223
      %v2339 = vpop.f32.mrb[0].mxu0
      %v2340 = vadd.f32 0.0, %v2339
      %v2341 = vpop.f32.mrb[0].mxu0
      %2342 = vmatprep.mubr.f32.mxu0 0.0
      %2343 = vmatmul.mubr.f32.gmra.mrb[0].mxu0 %v2226
      %v2344 = vpop.f32.mrb[0].mxu0
      %v2345 = vadd.f32 0.0, %v2344
      %v2346 = vpop.f32.mrb[0].mxu0
      %2347 = vmatprep.mubr.f32.mxu0 0.0
      %2348 = vmatmul.mubr.f32.gmra.mrb[0].mxu0 %v2229
      %v2349 = vpop.f32.mrb[0].mxu0
      %v2350 = vadd.f32 0.0, %v2349
      %v2351 = vpop.f32.mrb[0].mxu0
      %2352 = vmatprep.mubr.f32.mxu0 0.0
      %2353 = vmatmul.mubr.f32.gmra.mrb[0].mxu0 %v2232
      %v2354 = vpop.f32.mrb[0].mxu0
      %v2355 = vadd.f32 0.0, %v2354
      %v2356 = vpop.f32.mrb[0].mxu0
      %2357 = vmatprep.mubr.f32.mxu0 0.0
      %2358 = vmatmul.mubr.f32.gmra.mrb[0].mxu0 %v2235
      %v2359 = vpop.f32.mrb[0].mxu0
      %v2360 = vadd.f32 0.0, %v2359
      %v2361 = vpop.f32.mrb[0].mxu0
      %2362 = vmatprep.mubr.f32.mxu0 0.0
      %2363 = vmatmul.mubr.f32.gmra.mrb[0].mxu0 %v2238
      %v2364 = vpop.f32.mrb[0].mxu0
      %v2365 = vadd.f32 0.0, %v2364
      %v2366 = vpop.f32.mrb[0].mxu0
      %2367 = vmatprep.mubr.f32.mxu0 0.0
      %2368 = vmatmul.mubr.f32.gmra.mrb[0].mxu0 %v2241
      %v2369 = vpop.f32.mrb[0].mxu0
      %v2370 = vadd.f32 0.0, %v2369
      %v2371 = vpop.f32.mrb[0].mxu0
      %2372 = vdwg.mxu0
      %v2373 = vadd.f32 %v2175, %v2310
      %v2374 = vadd.f32 %v2176, %v2315
      %v2375 = vadd.f32 %v2177, %v2320
      %v2376 = vadd.f32 %v2178, %v2325
      %v2377 = vadd.f32 %v2179, %v2330
      %v2378 = vadd.f32 %v2180, %v2335
      %v2379 = vadd.f32 %v2181, %v2340
      %v2380 = vadd.f32 %v2182, %v2345
      %v2381 = vadd.f32 %v2183, %v2350
      %v2382 = vadd.f32 %v2184, %v2355
      %v2383 = vadd.f32 %v2185, %v2360
      %v2384 = vadd.f32 %v2186, %v2365
      %v2385 = vadd.f32 %v2187, %v2370
      %v2386 = vld [vmem:[#allocation2 + $0x15] sm:$0xff]
      %v2387 = vld [vmem:[#allocation2 + $0x1d] sm:$0xff]
      %v2388 = vld [vmem:[#allocation2 + $0x25] sm:$0xff]
      %v2389 = vld [vmem:[#allocation2 + $0x2d] sm:$0xff]
      %v2390 = vld [vmem:[#allocation2 + $0x35] sm:$0xff]
      %v2391 = vld [vmem:[#allocation2 + $0x3d] sm:$0xff]
      %v2392 = vld [vmem:[#allocation2 + $0x45] sm:$0xff]
      %v2393 = vld [vmem:[#allocation2 + $0x4d] sm:$0xff]
      %v2394 = vld [vmem:[#allocation2 + $0x55] sm:$0xff]
      %v2395 = vld [vmem:[#allocation2 + $0x5d] sm:$0xff]
      %v2396 = vld [vmem:[#allocation2 + $0x65] sm:$0xff]
      %v2397 = vld [vmem:[#allocation2 + $0x6d] sm:$0xff]
      %v2398 = vld [vmem:[#allocation2 + $0x75] sm:$0xff]
      %s2399 = scalar_lea.vmem %s5, 112
      %v2400 = vld [vmem:[%s2399] sm:$0xff]
      %v2401 = vld [vmem:[%s2399 + $0x8] sm:$0xff]
      %v2403 = vsel %vm1010, %v2386, 0
      %v2406 = vsel %vm1010, %v2387, 0
      %v2409 = vsel %vm1010, %v2388, 0
      %v2412 = vsel %vm1010, %v2389, 0
      %v2415 = vsel %vm1010, %v2390, 0
      %v2418 = vsel %vm1010, %v2391, 0
      %v2421 = vsel %vm1010, %v2392, 0
      %v2424 = vsel %vm1010, %v2393, 0
      %v2427 = vsel %vm1010, %v2394, 0
      %v2430 = vsel %vm1010, %v2395, 0
      %v2433 = vsel %vm1010, %v2396, 0
      %v2436 = vsel %vm1010, %v2397, 0
      %v2439 = vsel %vm1010, %v2398, 0
      %2441 = vmatprep.subr.mxu0 0.0
      %2442 = vmatpush1.msra.mxu0 %v2400
      %2443 = vmatprep.subr.mxu0 0.0
      %2444 = vmatpush1.msra.mxu0 %v2401
      %2445 = vmatprep.subr.mxu0 0.0
      %2446 = vmatpush1.msra.mxu0 0.0
      %2447 = vmatprep.subr.mxu0 0.0
      %2448 = vmatpush1.msra.mxu0 0.0
      %2449 = vmatprep.subr.mxu0 0.0
      %2450 = vmatpush1.msra.mxu0 0.0
      %2451 = vmatprep.subr.mxu0 0.0
      %2452 = vmatpush1.msra.mxu0 0.0
      %2453 = vmatprep.subr.mxu0 0.0
      %2454 = vmatpush1.msra.mxu0 0.0
      %2455 = vmatprep.subr.mxu0 0.0
      %2456 = vmatpush1.msra.mxu0 0.0
      %2457 = vmatprep.subr.mxu0 0.0
      %2458 = vmatpush1.msra.mxu0 0.0
      %2459 = vmatprep.subr.mxu0 0.0
      %2460 = vmatpush1.msra.mxu0 0.0
      %2461 = vmatprep.subr.mxu0 0.0
      %2462 = vmatpush1.msra.mxu0 0.0
      %2463 = vmatprep.subr.mxu0 0.0
      %2464 = vmatpush1.msra.mxu0 0.0
      %2465 = vmatprep.subr.mxu0 0.0
      %2466 = vmatpush1.msra.mxu0 0.0
      %2467 = vmatprep.subr.mxu0 0.0
      %2468 = vmatpush1.msra.mxu0 0.0
      %2469 = vmatprep.subr.mxu0 0.0
      %2470 = vmatpush1.msra.mxu0 0.0
      %2471 = vmatprep.subr.mxu0 0.0
      %2472 = vmatpush1.msra.mxu0 0.0
      %2473 = vmatprep.subr.mxu0 0.0
      %2474 = vmatpush1.msra.mxu0 0.0
      %2475 = vmatprep.subr.mxu0 0.0
      %2476 = vmatpush1.msra.mxu0 0.0
      %2477 = vmatprep.subr.mxu0 0.0
      %2478 = vmatpush1.msra.mxu0 0.0
      %2479 = vmatprep.subr.mxu0 0.0
      %2480 = vmatpush1.msra.mxu0 0.0
      %2481 = vmatprep.subr.mxu0 0.0
      %2482 = vmatpush1.msra.mxu0 0.0
      %2483 = vmatprep.subr.mxu0 0.0
      %2484 = vmatpush1.msra.mxu0 0.0
      %2485 = vmatprep.subr.mxu0 0.0
      %2486 = vmatpush1.msra.mxu0 0.0
      %2487 = vmatprep.subr.mxu0 0.0
      %2488 = vmatpush1.msra.mxu0 0.0
      %2489 = vmatprep.subr.mxu0 0.0
      %2490 = vmatpush1.msra.mxu0 0.0
      %2491 = vmatprep.subr.mxu0 0.0
      %2492 = vmatpush1.msra.mxu0 0.0
      %2493 = vmatprep.subr.mxu0 0.0
      %2494 = vmatpush1.msra.mxu0 0.0
      %2495 = vmatprep.subr.mxu0 0.0
      %2496 = vmatpush1.msra.mxu0 0.0
      %2497 = vmatprep.subr.mxu0 0.0
      %2498 = vmatpush1.msra.mxu0 0.0
      %2499 = vmatprep.subr.mxu0 0.0
      %2500 = vmatpush1.msra.mxu0 0.0
      %2501 = vmatprep.subr.mxu0 0.0
      %2502 = vmatpush1.msra.mxu0 0.0
      %2503 = vmatprep.subr.mxu0 0.0
      %2504 = vmatpush1.msra.mxu0 0.0
      %2505 = vmatprep.mubr.f32.mxu0 0.0
      %2506 = vmatmul.mubr.f32.gmra.mrb[0].mxu0 %v2403
      %v2507 = vpop.f32.mrb[0].mxu0
      %v2508 = vadd.f32 0.0, %v2507
      %v2509 = vpop.f32.mrb[0].mxu0
      %2510 = vmatprep.mubr.f32.mxu0 0.0
      %2511 = vmatmul.mubr.f32.gmra.mrb[0].mxu0 %v2406
      %v2512 = vpop.f32.mrb[0].mxu0
      %v2513 = vadd.f32 0.0, %v2512
      %v2514 = vpop.f32.mrb[0].mxu0
      %2515 = vmatprep.mubr.f32.mxu0 0.0
      %2516 = vmatmul.mubr.f32.gmra.mrb[0].mxu0 %v2409
      %v2517 = vpop.f32.mrb[0].mxu0
      %v2518 = vadd.f32 0.0, %v2517
      %v2519 = vpop.f32.mrb[0].mxu0
      %2520 = vmatprep.mubr.f32.mxu0 0.0
      %2521 = vmatmul.mubr.f32.gmra.mrb[0].mxu0 %v2412
      %v2522 = vpop.f32.mrb[0].mxu0
      %v2523 = vadd.f32 0.0, %v2522
      %v2524 = vpop.f32.mrb[0].mxu0
      %2525 = vmatprep.mubr.f32.mxu0 0.0
      %2526 = vmatmul.mubr.f32.gmra.mrb[0].mxu0 %v2415
      %v2527 = vpop.f32.mrb[0].mxu0
      %v2528 = vadd.f32 0.0, %v2527
      %v2529 = vpop.f32.mrb[0].mxu0
      %2530 = vmatprep.mubr.f32.mxu0 0.0
      %2531 = vmatmul.mubr.f32.gmra.mrb[0].mxu0 %v2418
      %v2532 = vpop.f32.mrb[0].mxu0
      %v2533 = vadd.f32 0.0, %v2532
      %v2534 = vpop.f32.mrb[0].mxu0
      %2535 = vmatprep.mubr.f32.mxu0 0.0
      %2536 = vmatmul.mubr.f32.gmra.mrb[0].mxu0 %v2421
      %v2537 = vpop.f32.mrb[0].mxu0
      %v2538 = vadd.f32 0.0, %v2537
      %v2539 = vpop.f32.mrb[0].mxu0
      %2540 = vmatprep.mubr.f32.mxu0 0.0
      %2541 = vmatmul.mubr.f32.gmra.mrb[0].mxu0 %v2424
      %v2542 = vpop.f32.mrb[0].mxu0
      %v2543 = vadd.f32 0.0, %v2542
      %v2544 = vpop.f32.mrb[0].mxu0
      %2545 = vmatprep.mubr.f32.mxu0 0.0
      %2546 = vmatmul.mubr.f32.gmra.mrb[0].mxu0 %v2427
      %v2547 = vpop.f32.mrb[0].mxu0
      %v2548 = vadd.f32 0.0, %v2547
      %v2549 = vpop.f32.mrb[0].mxu0
      %2550 = vmatprep.mubr.f32.mxu0 0.0
      %2551 = vmatmul.mubr.f32.gmra.mrb[0].mxu0 %v2430
      %v2552 = vpop.f32.mrb[0].mxu0
      %v2553 = vadd.f32 0.0, %v2552
      %v2554 = vpop.f32.mrb[0].mxu0
      %2555 = vmatprep.mubr.f32.mxu0 0.0
      %2556 = vmatmul.mubr.f32.gmra.mrb[0].mxu0 %v2433
      %v2557 = vpop.f32.mrb[0].mxu0
      %v2558 = vadd.f32 0.0, %v2557
      %v2559 = vpop.f32.mrb[0].mxu0
      %2560 = vmatprep.mubr.f32.mxu0 0.0
      %2561 = vmatmul.mubr.f32.gmra.mrb[0].mxu0 %v2436
      %v2562 = vpop.f32.mrb[0].mxu0
      %v2563 = vadd.f32 0.0, %v2562
      %v2564 = vpop.f32.mrb[0].mxu0
      %2565 = vmatprep.mubr.f32.mxu0 0.0
      %2566 = vmatmul.mubr.f32.gmra.mrb[0].mxu0 %v2439
      %v2567 = vpop.f32.mrb[0].mxu0
      %v2568 = vadd.f32 0.0, %v2567
      %v2569 = vpop.f32.mrb[0].mxu0
      %2570 = vdwg.mxu0
      %v2571 = vadd.f32 %v2373, %v2508
      %v2572 = vadd.f32 %v2374, %v2513
      %v2573 = vadd.f32 %v2375, %v2518
      %v2574 = vadd.f32 %v2376, %v2523
      %v2575 = vadd.f32 %v2377, %v2528
      %v2576 = vadd.f32 %v2378, %v2533
      %v2577 = vadd.f32 %v2379, %v2538
      %v2578 = vadd.f32 %v2380, %v2543
      %v2579 = vadd.f32 %v2381, %v2548
      %v2580 = vadd.f32 %v2382, %v2553
      %v2581 = vadd.f32 %v2383, %v2558
      %v2582 = vadd.f32 %v2384, %v2563
      %v2583 = vadd.f32 %v2385, %v2568
      %v2584 = vld [vmem:[#allocation2 + $0x16] sm:$0xff]
      %v2585 = vld [vmem:[#allocation2 + $0x1e] sm:$0xff]
      %v2586 = vld [vmem:[#allocation2 + $0x26] sm:$0xff]
      %v2587 = vld [vmem:[#allocation2 + $0x2e] sm:$0xff]
      %v2588 = vld [vmem:[#allocation2 + $0x36] sm:$0xff]
      %v2589 = vld [vmem:[#allocation2 + $0x3e] sm:$0xff]
      %v2590 = vld [vmem:[#allocation2 + $0x46] sm:$0xff]
      %v2591 = vld [vmem:[#allocation2 + $0x4e] sm:$0xff]
      %v2592 = vld [vmem:[#allocation2 + $0x56] sm:$0xff]
      %v2593 = vld [vmem:[#allocation2 + $0x5e] sm:$0xff]
      %v2594 = vld [vmem:[#allocation2 + $0x66] sm:$0xff]
      %v2595 = vld [vmem:[#allocation2 + $0x6e] sm:$0xff]
      %v2596 = vld [vmem:[#allocation2 + $0x76] sm:$0xff]
      %s2597 = scalar_lea.vmem %s5, 128
      %v2598 = vld [vmem:[%s2597] sm:$0xff]
      %v2599 = vld [vmem:[%s2597 + $0x8] sm:$0xff]
      %v2601 = vsel %vm1010, %v2584, 0
      %v2604 = vsel %vm1010, %v2585, 0
      %v2607 = vsel %vm1010, %v2586, 0
      %v2610 = vsel %vm1010, %v2587, 0
      %v2613 = vsel %vm1010, %v2588, 0
      %v2616 = vsel %vm1010, %v2589, 0
      %v2619 = vsel %vm1010, %v2590, 0
      %v2622 = vsel %vm1010, %v2591, 0
      %v2625 = vsel %vm1010, %v2592, 0
      %v2628 = vsel %vm1010, %v2593, 0
      %v2631 = vsel %vm1010, %v2594, 0
      %v2634 = vsel %vm1010, %v2595, 0
      %v2637 = vsel %vm1010, %v2596, 0
      %2639 = vmatprep.subr.mxu0 0.0
      %2640 = vmatpush1.msra.mxu0 %v2598
      %2641 = vmatprep.subr.mxu0 0.0
      %2642 = vmatpush1.msra.mxu0 %v2599
      %2643 = vmatprep.subr.mxu0 0.0
      %2644 = vmatpush1.msra.mxu0 0.0
      %2645 = vmatprep.subr.mxu0 0.0
      %2646 = vmatpush1.msra.mxu0 0.0
      %2647 = vmatprep.subr.mxu0 0.0
      %2648 = vmatpush1.msra.mxu0 0.0
      %2649 = vmatprep.subr.mxu0 0.0
      %2650 = vmatpush1.msra.mxu0 0.0
      %2651 = vmatprep.subr.mxu0 0.0
      %2652 = vmatpush1.msra.mxu0 0.0
      %2653 = vmatprep.subr.mxu0 0.0
      %2654 = vmatpush1.msra.mxu0 0.0
      %2655 = vmatprep.subr.mxu0 0.0
      %2656 = vmatpush1.msra.mxu0 0.0
      %2657 = vmatprep.subr.mxu0 0.0
      %2658 = vmatpush1.msra.mxu0 0.0
      %2659 = vmatprep.subr.mxu0 0.0
      %2660 = vmatpush1.msra.mxu0 0.0
      %2661 = vmatprep.subr.mxu0 0.0
      %2662 = vmatpush1.msra.mxu0 0.0
      %2663 = vmatprep.subr.mxu0 0.0
      %2664 = vmatpush1.msra.mxu0 0.0
      %2665 = vmatprep.subr.mxu0 0.0
      %2666 = vmatpush1.msra.mxu0 0.0
      %2667 = vmatprep.subr.mxu0 0.0
      %2668 = vmatpush1.msra.mxu0 0.0
      %2669 = vmatprep.subr.mxu0 0.0
      %2670 = vmatpush1.msra.mxu0 0.0
      %2671 = vmatprep.subr.mxu0 0.0
      %2672 = vmatpush1.msra.mxu0 0.0
      %2673 = vmatprep.subr.mxu0 0.0
      %2674 = vmatpush1.msra.mxu0 0.0
      %2675 = vmatprep.subr.mxu0 0.0
      %2676 = vmatpush1.msra.mxu0 0.0
      %2677 = vmatprep.subr.mxu0 0.0
      %2678 = vmatpush1.msra.mxu0 0.0
      %2679 = vmatprep.subr.mxu0 0.0
      %2680 = vmatpush1.msra.mxu0 0.0
      %2681 = vmatprep.subr.mxu0 0.0
      %2682 = vmatpush1.msra.mxu0 0.0
      %2683 = vmatprep.subr.mxu0 0.0
      %2684 = vmatpush1.msra.mxu0 0.0
      %2685 = vmatprep.subr.mxu0 0.0
      %2686 = vmatpush1.msra.mxu0 0.0
      %2687 = vmatprep.subr.mxu0 0.0
      %2688 = vmatpush1.msra.mxu0 0.0
      %2689 = vmatprep.subr.mxu0 0.0
      %2690 = vmatpush1.msra.mxu0 0.0
      %2691 = vmatprep.subr.mxu0 0.0
      %2692 = vmatpush1.msra.mxu0 0.0
      %2693 = vmatprep.subr.mxu0 0.0
      %2694 = vmatpush1.msra.mxu0 0.0
      %2695 = vmatprep.subr.mxu0 0.0
      %2696 = vmatpush1.msra.mxu0 0.0
      %2697 = vmatprep.subr.mxu0 0.0
      %2698 = vmatpush1.msra.mxu0 0.0
      %2699 = vmatprep.subr.mxu0 0.0
      %2700 = vmatpush1.msra.mxu0 0.0
      %2701 = vmatprep.subr.mxu0 0.0
      %2702 = vmatpush1.msra.mxu0 0.0
      %2703 = vmatprep.mubr.f32.mxu0 0.0
      %2704 = vmatmul.mubr.f32.gmra.mrb[0].mxu0 %v2601
      %v2705 = vpop.f32.mrb[0].mxu0
      %v2706 = vadd.f32 0.0, %v2705
      %v2707 = vpop.f32.mrb[0].mxu0
      %2708 = vmatprep.mubr.f32.mxu0 0.0
      %2709 = vmatmul.mubr.f32.gmra.mrb[0].mxu0 %v2604
      %v2710 = vpop.f32.mrb[0].mxu0
      %v2711 = vadd.f32 0.0, %v2710
      %v2712 = vpop.f32.mrb[0].mxu0
      %2713 = vmatprep.mubr.f32.mxu0 0.0
      %2714 = vmatmul.mubr.f32.gmra.mrb[0].mxu0 %v2607
      %v2715 = vpop.f32.mrb[0].mxu0
      %v2716 = vadd.f32 0.0, %v2715
      %v2717 = vpop.f32.mrb[0].mxu0
      %2718 = vmatprep.mubr.f32.mxu0 0.0
      %2719 = vmatmul.mubr.f32.gmra.mrb[0].mxu0 %v2610
      %v2720 = vpop.f32.mrb[0].mxu0
      %v2721 = vadd.f32 0.0, %v2720
      %v2722 = vpop.f32.mrb[0].mxu0
      %2723 = vmatprep.mubr.f32.mxu0 0.0
      %2724 = vmatmul.mubr.f32.gmra.mrb[0].mxu0 %v2613
      %v2725 = vpop.f32.mrb[0].mxu0
      %v2726 = vadd.f32 0.0, %v2725
      %v2727 = vpop.f32.mrb[0].mxu0
      %2728 = vmatprep.mubr.f32.mxu0 0.0
      %2729 = vmatmul.mubr.f32.gmra.mrb[0].mxu0 %v2616
      %v2730 = vpop.f32.mrb[0].mxu0
      %v2731 = vadd.f32 0.0, %v2730
      %v2732 = vpop.f32.mrb[0].mxu0
      %2733 = vmatprep.mubr.f32.mxu0 0.0
      %2734 = vmatmul.mubr.f32.gmra.mrb[0].mxu0 %v2619
      %v2735 = vpop.f32.mrb[0].mxu0
      %v2736 = vadd.f32 0.0, %v2735
      %v2737 = vpop.f32.mrb[0].mxu0
      %2738 = vmatprep.mubr.f32.mxu0 0.0
      %2739 = vmatmul.mubr.f32.gmra.mrb[0].mxu0 %v2622
      %v2740 = vpop.f32.mrb[0].mxu0
      %v2741 = vadd.f32 0.0, %v2740
      %v2742 = vpop.f32.mrb[0].mxu0
      %2743 = vmatprep.mubr.f32.mxu0 0.0
      %2744 = vmatmul.mubr.f32.gmra.mrb[0].mxu0 %v2625
      %v2745 = vpop.f32.mrb[0].mxu0
      %v2746 = vadd.f32 0.0, %v2745
      %v2747 = vpop.f32.mrb[0].mxu0
      %2748 = vmatprep.mubr.f32.mxu0 0.0
      %2749 = vmatmul.mubr.f32.gmra.mrb[0].mxu0 %v2628
      %v2750 = vpop.f32.mrb[0].mxu0
      %v2751 = vadd.f32 0.0, %v2750
      %v2752 = vpop.f32.mrb[0].mxu0
      %2753 = vmatprep.mubr.f32.mxu0 0.0
      %2754 = vmatmul.mubr.f32.gmra.mrb[0].mxu0 %v2631
      %v2755 = vpop.f32.mrb[0].mxu0
      %v2756 = vadd.f32 0.0, %v2755
      %v2757 = vpop.f32.mrb[0].mxu0
      %2758 = vmatprep.mubr.f32.mxu0 0.0
      %2759 = vmatmul.mubr.f32.gmra.mrb[0].mxu0 %v2634
      %v2760 = vpop.f32.mrb[0].mxu0
      %v2761 = vadd.f32 0.0, %v2760
      %v2762 = vpop.f32.mrb[0].mxu0
      %2763 = vmatprep.mubr.f32.mxu0 0.0
      %2764 = vmatmul.mubr.f32.gmra.mrb[0].mxu0 %v2637
      %v2765 = vpop.f32.mrb[0].mxu0
      %v2766 = vadd.f32 0.0, %v2765
      %v2767 = vpop.f32.mrb[0].mxu0
      %2768 = vdwg.mxu0
      %v2769 = vadd.f32 %v2571, %v2706
      %v2770 = vadd.f32 %v2572, %v2711
      %v2771 = vadd.f32 %v2573, %v2716
      %v2772 = vadd.f32 %v2574, %v2721
      %v2773 = vadd.f32 %v2575, %v2726
      %v2774 = vadd.f32 %v2576, %v2731
      %v2775 = vadd.f32 %v2577, %v2736
      %v2776 = vadd.f32 %v2578, %v2741
      %v2777 = vadd.f32 %v2579, %v2746
      %v2778 = vadd.f32 %v2580, %v2751
      %v2779 = vadd.f32 %v2581, %v2756
      %v2780 = vadd.f32 %v2582, %v2761
      %v2781 = vadd.f32 %v2583, %v2766
      %v2782 = vld [vmem:[%s6] sm:$0x1]
      %v2784 = vlaneseq
      %v2785 = vshrl.u32 %v2784, 7
      %v2786 = vsub.s32 0, %v2785
      %v2787 = vrot.slane %v2782, %v2786
      %v2789 = vadd.f32 %v2769, %v2787
      %v2790 = vadd.f32 %v2770, %v2787
      %v2791 = vadd.f32 %v2771, %v2787
      %v2792 = vadd.f32 %v2772, %v2787
      %v2793 = vadd.f32 %v2773, %v2787
      %v2794 = vadd.f32 %v2774, %v2787
      %v2795 = vadd.f32 %v2775, %v2787
      %v2796 = vadd.f32 %v2776, %v2787
      %v2797 = vadd.f32 %v2777, %v2787
      %v2798 = vadd.f32 %v2778, %v2787
      %v2799 = vadd.f32 %v2779, %v2787
      %v2800 = vadd.f32 %v2780, %v2787
      %v2801 = vadd.f32 %v2781, %v2787
      %v2802 = vmax.f32 %v2789, 0.0
      %v2803 = vmax.f32 %v2790, 0.0
      %v2804 = vmax.f32 %v2791, 0.0
      %v2805 = vmax.f32 %v2792, 0.0
      %v2806 = vmax.f32 %v2793, 0.0
      %v2807 = vmax.f32 %v2794, 0.0
      %v2808 = vmax.f32 %v2795, 0.0
      %v2809 = vmax.f32 %v2796, 0.0
      %v2810 = vmax.f32 %v2797, 0.0
      %v2811 = vmax.f32 %v2798, 0.0
      %v2812 = vmax.f32 %v2799, 0.0
      %v2813 = vmax.f32 %v2800, 0.0
      %v2814 = vmax.f32 %v2801, 0.0
      %vm2815 = vcmask 261120
      %2816 = vst.msk [vmem:[#allocation3] sm:$0xff] %vm2815, %v2802
      %2817 = vst.msk [vmem:[#allocation3 + $0x8] sm:$0xff] %vm2815, %v2803
      %2818 = vst.msk [vmem:[#allocation3 + $0x10] sm:$0xff] %vm2815, %v2804
      %2819 = vst.msk [vmem:[#allocation3 + $0x18] sm:$0xff] %vm2815, %v2805
      %2820 = vst.msk [vmem:[#allocation3 + $0x20] sm:$0xff] %vm2815, %v2806
      %2821 = vst.msk [vmem:[#allocation3 + $0x28] sm:$0xff] %vm2815, %v2807
      %2822 = vst.msk [vmem:[#allocation3 + $0x30] sm:$0xff] %vm2815, %v2808
      %2823 = vst.msk [vmem:[#allocation3 + $0x38] sm:$0xff] %vm2815, %v2809
      %2824 = vst.msk [vmem:[#allocation3 + $0x40] sm:$0xff] %vm2815, %v2810
      %2825 = vst.msk [vmem:[#allocation3 + $0x48] sm:$0xff] %vm2815, %v2811
      %2826 = vst.msk [vmem:[#allocation3 + $0x50] sm:$0xff] %vm2815, %v2812
      %2827 = vst.msk [vmem:[#allocation3 + $0x58] sm:$0xff] %vm2815, %v2813
      %2828 = vst.msk [vmem:[#allocation3 + $0x60] sm:$0xff] %vm2815, %v2814
      %2829 = vst.msk [vmem:[#allocation3 + $0x68] sm:$0xff] %vm2815, 0.0
      %2830 = vst.msk [vmem:[#allocation3 + $0x70] sm:$0xff] %vm2815, 0.0
      %v2831 = vld [vmem:[#allocation3] sm:$0xff]
      %v2832 = vld [vmem:[#allocation3 + $0x8] sm:$0xff]
      %v2833 = vld [vmem:[#allocation3 + $0x10] sm:$0xff]
      %v2834 = vld [vmem:[#allocation3 + $0x18] sm:$0xff]
      %v2835 = vld [vmem:[#allocation3 + $0x20] sm:$0xff]
      %v2836 = vld [vmem:[#allocation3 + $0x28] sm:$0xff]
      %v2837 = vld [vmem:[#allocation3 + $0x30] sm:$0xff]
      %v2838 = vld [vmem:[#allocation3 + $0x38] sm:$0xff]
      %v2839 = vld [vmem:[#allocation3 + $0x40] sm:$0xff]
      %v2840 = vld [vmem:[#allocation3 + $0x48] sm:$0xff]
      %v2841 = vld [vmem:[#allocation3 + $0x50] sm:$0xff]
      %v2842 = vld [vmem:[#allocation3 + $0x58] sm:$0xff]
      %v2843 = vld [vmem:[#allocation3 + $0x60] sm:$0xff]
      %v2844 = vld [vmem:[#allocation3 + $0x1] sm:$0xff]
      %v2845 = vld [vmem:[#allocation3 + $0x9] sm:$0xff]
      %v2846 = vld [vmem:[#allocation3 + $0x11] sm:$0xff]
      %v2847 = vld [vmem:[#allocation3 + $0x19] sm:$0xff]
      %v2848 = vld [vmem:[#allocation3 + $0x21] sm:$0xff]
      %v2849 = vld [vmem:[#allocation3 + $0x29] sm:$0xff]
      %v2850 = vld [vmem:[#allocation3 + $0x31] sm:$0xff]
      %v2851 = vld [vmem:[#allocation3 + $0x39] sm:$0xff]
      %v2852 = vld [vmem:[#allocation3 + $0x41] sm:$0xff]
      %v2853 = vld [vmem:[#allocation3 + $0x49] sm:$0xff]
      %v2854 = vld [vmem:[#allocation3 + $0x51] sm:$0xff]
      %v2855 = vld [vmem:[#allocation3 + $0x59] sm:$0xff]
      %v2856 = vld [vmem:[#allocation3 + $0x61] sm:$0xff]
      %v2857 = vmax.f32 %v2831, %v2844
      %v2858 = vmax.f32 %v2832, %v2845
      %v2859 = vmax.f32 %v2833, %v2846
      %v2860 = vmax.f32 %v2834, %v2847
      %v2861 = vmax.f32 %v2835, %v2848
      %v2862 = vmax.f32 %v2836, %v2849
      %v2863 = vmax.f32 %v2837, %v2850
      %v2864 = vmax.f32 %v2838, %v2851
      %v2865 = vmax.f32 %v2839, %v2852
      %v2866 = vmax.f32 %v2840, %v2853
      %v2867 = vmax.f32 %v2841, %v2854
      %v2868 = vmax.f32 %v2842, %v2855
      %v2869 = vmax.f32 %v2843, %v2856
      %v2870 = vld [vmem:[#allocation3 + $0xa] sm:$0xff]
      %v2871 = vld [vmem:[#allocation3 + $0x12] sm:$0xff]
      %v2872 = vld [vmem:[#allocation3 + $0x1a] sm:$0xff]
      %v2873 = vld [vmem:[#allocation3 + $0x22] sm:$0xff]
      %v2874 = vld [vmem:[#allocation3 + $0x2a] sm:$0xff]
      %v2875 = vld [vmem:[#allocation3 + $0x32] sm:$0xff]
      %v2876 = vld [vmem:[#allocation3 + $0x3a] sm:$0xff]
      %v2877 = vld [vmem:[#allocation3 + $0x42] sm:$0xff]
      %v2878 = vld [vmem:[#allocation3 + $0x4a] sm:$0xff]
      %v2879 = vld [vmem:[#allocation3 + $0x52] sm:$0xff]
      %v2880 = vld [vmem:[#allocation3 + $0x5a] sm:$0xff]
      %v2881 = vld [vmem:[#allocation3 + $0x62] sm:$0xff]
      %v2882 = vld [vmem:[#allocation3 + $0x6a] sm:$0xff]
      %v2883 = vld [vmem:[#allocation3 + $0xb] sm:$0xff]
      %v2884 = vld [vmem:[#allocation3 + $0x13] sm:$0xff]
      %v2885 = vld [vmem:[#allocation3 + $0x1b] sm:$0xff]
      %v2886 = vld [vmem:[#allocation3 + $0x23] sm:$0xff]
      %v2887 = vld [vmem:[#allocation3 + $0x2b] sm:$0xff]
      %v2888 = vld [vmem:[#allocation3 + $0x33] sm:$0xff]
      %v2889 = vld [vmem:[#allocation3 + $0x3b] sm:$0xff]
      %v2890 = vld [vmem:[#allocation3 + $0x43] sm:$0xff]
      %v2891 = vld [vmem:[#allocation3 + $0x4b] sm:$0xff]
      %v2892 = vld [vmem:[#allocation3 + $0x53] sm:$0xff]
      %v2893 = vld [vmem:[#allocation3 + $0x5b] sm:$0xff]
      %v2894 = vld [vmem:[#allocation3 + $0x63] sm:$0xff]
      %v2895 = vld [vmem:[#allocation3 + $0x6b] sm:$0xff]
      %v2896 = vmax.f32 %v2870, %v2883
      %v2897 = vmax.f32 %v2871, %v2884
      %v2898 = vmax.f32 %v2872, %v2885
      %v2899 = vmax.f32 %v2873, %v2886
      %v2900 = vmax.f32 %v2874, %v2887
      %v2901 = vmax.f32 %v2875, %v2888
      %v2902 = vmax.f32 %v2876, %v2889
      %v2903 = vmax.f32 %v2877, %v2890
      %v2904 = vmax.f32 %v2878, %v2891
      %v2905 = vmax.f32 %v2879, %v2892
      %v2906 = vmax.f32 %v2880, %v2893
      %v2907 = vmax.f32 %v2881, %v2894
      %v2908 = vmax.f32 %v2882, %v2895
      %v2909 = vmax.f32 %v2857, %v2896
      %v2910 = vmax.f32 %v2858, %v2897
      %v2911 = vmax.f32 %v2859, %v2898
      %v2912 = vmax.f32 %v2860, %v2899
      %v2913 = vmax.f32 %v2861, %v2900
      %v2914 = vmax.f32 %v2862, %v2901
      %v2915 = vmax.f32 %v2863, %v2902
      %v2916 = vmax.f32 %v2864, %v2903
      %v2917 = vmax.f32 %v2865, %v2904
      %v2918 = vmax.f32 %v2866, %v2905
      %v2919 = vmax.f32 %v2867, %v2906
      %v2920 = vmax.f32 %v2868, %v2907
      %v2921 = vmax.f32 %v2869, %v2908
      %v2922 = vld [vmem:[%s2] sm:$0xff]
      %v2923 = vld [vmem:[%s2 + $0x8] sm:$0xff]
      %vm2924 = vcmask 850944
      %v2926 = vsel %vm2924, %v2922, 0
      %v2929 = vsel %vm2924, %v2923, 0
      %2931 = vmatprep.subr.mxu0 0.0
      %2932 = vmatpush1.msra.mxu0 %v2909
      %2933 = vmatprep.subr.mxu0 0.0
      %2934 = vmatpush1.msra.mxu0 %v2910
      %2935 = vmatprep.subr.mxu0 0.0
      %2936 = vmatpush1.msra.mxu0 %v2911
      %2937 = vmatprep.subr.mxu0 0.0
      %2938 = vmatpush1.msra.mxu0 %v2912
      %2939 = vmatprep.subr.mxu0 0.0
      %2940 = vmatpush1.msra.mxu0 %v2913
      %2941 = vmatprep.subr.mxu0 0.0
      %2942 = vmatpush1.msra.mxu0 %v2914
      %2943 = vmatprep.subr.mxu0 0.0
      %2944 = vmatpush1.msra.mxu0 %v2915
      %2945 = vmatprep.subr.mxu0 0.0
      %2946 = vmatpush1.msra.mxu0 %v2916
      %2947 = vmatprep.subr.mxu0 0.0
      %2948 = vmatpush1.msra.mxu0 %v2917
      %2949 = vmatprep.subr.mxu0 0.0
      %2950 = vmatpush1.msra.mxu0 %v2918
      %2951 = vmatprep.subr.mxu0 0.0
      %2952 = vmatpush1.msra.mxu0 %v2919
      %2953 = vmatprep.subr.mxu0 0.0
      %2954 = vmatpush1.msra.mxu0 %v2920
      %2955 = vmatprep.subr.mxu0 0.0
      %2956 = vmatpush1.msra.mxu0 %v2921
      %2957 = vmatprep.subr.mxu0 0.0
      %2958 = vmatpush1.msra.mxu0 0.0
      %2959 = vmatprep.subr.mxu0 0.0
      %2960 = vmatpush1.msra.mxu0 0.0
      %2961 = vmatprep.subr.mxu0 0.0
      %2962 = vmatpush1.msra.mxu0 0.0
      %2963 = vmatprep.subr.mxu0 0.0
      %2964 = vmatpush1.msra.mxu0 0.0
      %2965 = vmatprep.subr.mxu0 0.0
      %2966 = vmatpush1.msra.mxu0 0.0
      %2967 = vmatprep.subr.mxu0 0.0
      %2968 = vmatpush1.msra.mxu0 0.0
      %2969 = vmatprep.subr.mxu0 0.0
      %2970 = vmatpush1.msra.mxu0 0.0
      %2971 = vmatprep.subr.mxu0 0.0
      %2972 = vmatpush1.msra.mxu0 0.0
      %2973 = vmatprep.subr.mxu0 0.0
      %2974 = vmatpush1.msra.mxu0 0.0
      %2975 = vmatprep.subr.mxu0 0.0
      %2976 = vmatpush1.msra.mxu0 0.0
      %2977 = vmatprep.subr.mxu0 0.0
      %2978 = vmatpush1.msra.mxu0 0.0
      %2979 = vmatprep.subr.mxu0 0.0
      %2980 = vmatpush1.msra.mxu0 0.0
      %2981 = vmatprep.subr.mxu0 0.0
      %2982 = vmatpush1.msra.mxu0 0.0
      %2983 = vmatprep.subr.mxu0 0.0
      %2984 = vmatpush1.msra.mxu0 0.0
      %2985 = vmatprep.subr.mxu0 0.0
      %2986 = vmatpush1.msra.mxu0 0.0
      %2987 = vmatprep.subr.mxu0 0.0
      %2988 = vmatpush1.msra.mxu0 0.0
      %2989 = vmatprep.subr.mxu0 0.0
      %2990 = vmatpush1.msra.mxu0 0.0
      %2991 = vmatprep.subr.mxu0 0.0
      %2992 = vmatpush1.msra.mxu0 0.0
      %2993 = vmatprep.subr.mxu0 0.0
      %2994 = vmatpush1.msra.mxu0 0.0
      %2995 = vmatprep.mubr.f32.mxu0 0.0
      %2996 = vmatmul.mubr.f32.gmra.mrb[0].mxu0 %v2926
      %v2997 = vpop.f32.mrb[0].mxu0
      %v2998 = vadd.f32 0.0, %v2997
      %v2999 = vpop.f32.mrb[0].mxu0
      %3000 = vmatprep.mubr.f32.mxu0 0.0
      %3001 = vmatmul.mubr.f32.gmra.mrb[0].mxu0 %v2929
      %v3002 = vpop.f32.mrb[0].mxu0
      %v3003 = vadd.f32 0.0, %v3002
      %v3004 = vpop.f32.mrb[0].mxu0
      %3005 = vdwg.mxu0
      %3006 = vxpose.xlu0.b32.start [1/16] %v2998, 128
      %3007 = vxpose.xlu0.b32.cont [2/16] %v3003, 128
      %3008 = vxpose.xlu0.b32.cont [3/16] 0.0, 128
      %3009 = vxpose.xlu0.b32.cont [4/16] 0.0, 128
      %3010 = vxpose.xlu0.b32.cont [5/16] 0.0, 128
      %3011 = vxpose.xlu0.b32.cont [6/16] 0.0, 128
      %3012 = vxpose.xlu0.b32.cont [7/16] 0.0, 128
      %3013 = vxpose.xlu0.b32.cont [8/16] 0.0, 128
      %3014 = vxpose.xlu0.b32.cont [9/16] 0.0, 128
      %3015 = vxpose.xlu0.b32.cont [10/16] 0.0, 128
      %3016 = vxpose.xlu0.b32.cont [11/16] 0.0, 128
      %3017 = vxpose.xlu0.b32.cont [12/16] 0.0, 128
      %3018 = vxpose.xlu0.b32.cont [13/16] 0.0, 128
      %3019 = vxpose.xlu0.b32.cont [14/16] 0.0, 128
      %3020 = vxpose.xlu0.b32.cont [15/16] 0.0, 128
      %3021 = vxpose.xlu0.b32.end [16/16] 0.0, 128
      %v3022 = vpop.trf.xlu0
      %v3023 = vpop.trf.xlu0
      %v3024 = vpop.trf.xlu0
      %v3025 = vpop.trf.xlu0
      %v3026 = vpop.trf.xlu0
      %v3027 = vpop.trf.xlu0
      %v3028 = vpop.trf.xlu0
      %v3029 = vpop.trf.xlu0
      %v3030 = vpop.trf.xlu0
      %v3031 = vpop.trf.xlu0
      %v3032 = vpop.trf.xlu0
      %v3033 = vpop.trf.xlu0
      %v3034 = vpop.trf.xlu0
      %v3035 = vpop.trf.xlu0
      %v3036 = vpop.trf.xlu0
      %v3037 = vpop.trf.xlu0
      %3038 = vst.msk [vmem:[%s280] sm:$0xff] %vm1010, %v3022
      %3039 = vst.msk [vmem:[%s280 + $0x8] sm:$0xff] %vm1010, %v3023
      %3040 = vst.msk [vmem:[%s280 + $0x10] sm:$0xff] %vm1010, %v3024
      %3041 = vst.msk [vmem:[%s280 + $0x18] sm:$0xff] %vm1010, %v3025
      %p3042 = scmp.lt.s32.totalorder %s18, 1
      %s3043 = scalar_select %p3042, %s18, 1
      %s3044 = smul.addr %s3043, 4
      %s3045 = smul.addr %s3044, 8
      %s3046 = scalar_lea.vmem %s7, %s3045
      // Predicated region
      $region49: #{mnist_cnn_forward.1} parent=47 // pred_check
        %p3047 = pneg %p188
      $region50: #{mnist_cnn_forward.1} parent=47 // pred_check_branch
        %3049 = sbr.rel (%p3047) target = $region52
      $region51: #{mnist_cnn_forward.1} parent=47 // pred_region
        _
      $region52: #{mnist_cnn_forward.1} parent=47 // pred_fallthru
        _
    $region48: #{mnist_cnn_forward.1} parent=5 // pred_fallthru
      _
    %p3050 = scmp.le.s32.totalorder 2, %s13
    // Predicated region
    $region53: #{mnist_cnn_forward.1} parent=5 // pred_check
      %p3051 = pneg %p3050
    $region54: #{mnist_cnn_forward.1} parent=5 // pred_check_branch
      %3053 = sbr.rel (%p3051) target = $region56
    $region55: #{mnist_cnn_forward.1} parent=5 // pred_region
      %s3054 = ssub.s32 %s13, 2
      // Predicated region
      $region57: #{mnist_cnn_forward.1} parent=55 // pred_check
        %p3055 = pneg %p194
      $region58: #{mnist_cnn_forward.1} parent=55 // pred_check_branch
        %3057 = sbr.rel (%p3055) target = $region60
      $region59: #{mnist_cnn_forward.1} parent=55 // pred_region
        %p3058 = scmp.lt.s32.totalorder %s19, 1
        %s3059 = scalar_select %p3058, %s19, 1
        %s3060 = smul.addr %s3059, 4
        %s3061 = smul.addr %s3060, 8
        %s3062 = scalar_lea.vmem %s7, %s3061
      $region60: #{mnist_cnn_forward.1} parent=55 // pred_fallthru
        _
    $region56: #{mnist_cnn_forward.1} parent=5 // pred_fallthru
      _
  $region6: #{mnist_cnn_forward.1} parent=0 // loop_footer
    %s17 = sadd.s32 1, %s13
  $region7: #{mnist_cnn_forward.1} parent=0 // loop_footer_branch
    %12 = sbr.rel target = $region3
  $region8: #{mnist_cnn_forward.1} parent=0 // loop_exit
    _

</llo_original>
